<compile_context>
chip_gen: v7x
topology: tpu7x:2x2x1
jax: 0.10.0
libtpu: 0.0.40
codegen_flags: <defaults>
</compile_context>

<pallas_src>
import functools

import jax
import jax.numpy as jnp
from jax.experimental import pallas as pl
from jax.experimental.pallas import tpu as pltpu


# ----------------------------- Pallas kernel -----------------------------

def _self_attention_kernel(x_ref, wqkv_ref, bqkv_ref, wp_ref, bp_ref, o_ref,
                           *, heads):
    """One batch element: fused QKV projection + softmax attention + out proj.

    x_ref    : (1, C, S)   input, NCHW channel order (lane axis = S)
    wqkv_ref : (3C, C)     stacked block-diagonal Q/K/V weights (scale folded
                           into the Q rows)
    bqkv_ref : (3C, 1)     stacked Q/K/V biases (scale folded into Q part)
    wp_ref   : (C, C)      block-diagonal output-projection weight
    bp_ref   : (C, 1)      output-projection bias
    o_ref    : (1, C, S)   output in the same lane-dense layout
    """
    C = x_ref.shape[1]
    S = x_ref.shape[2]
    hd = C // heads

    x = x_ref[0]                                              # (C, S) f32

    # Fused QKV: a single (3C, C) @ (C, S) MXU matmul; bias add is tiny VPU work.
    qkv = jnp.dot(wqkv_ref[...], x, preferred_element_type=jnp.float32)
    qkv = qkv + bqkv_ref[...]                                 # (3C, S)

    # Static sublane slices (multiples of 8) + free reshapes to per-head form.
    q = qkv[0 * C:1 * C].reshape(heads, hd, S)                # scale pre-folded
    k = qkv[1 * C:2 * C].reshape(heads, hd, S)
    v = qkv[2 * C:3 * C].reshape(heads, hd, S)

    # scores[h, s, t] = sum_d q[h, d, s] * k[h, d, t]
    # Contraction K = hd = 8 -> MXU latency-bound; keep f32 operands (no cast).
    s = jnp.einsum("hds,hdt->hst", q, k,
                   preferred_element_type=jnp.float32)        # (heads, S, S)

    # Numerically-stable softmax numerator; normalization is deferred.
    m = jnp.max(s, axis=-1, keepdims=True)
    p = jnp.exp(s - m)                                        # (heads, S, S) f32
    l = jnp.sum(p, axis=-1)                                   # (heads, S)  f32

    # attn @ V with bf16 operands (K = S contraction), f32 MXU accumulation.
    out = jnp.einsum("hdt,hst->hds",
                     v.astype(jnp.bfloat16), p.astype(jnp.bfloat16),
                     preferred_element_type=jnp.float32)      # (heads, hd, S)

    # Deferred 1/l: EUP approx reciprocal, applied to the small hd x S result.
    out = out * pl.reciprocal(l, approx=True)[:, None, :]

    # Output projection as a dense block-diagonal (C, C) @ (C, S) matmul.
    y = jnp.dot(wp_ref[...], out.reshape(C, S),
                preferred_element_type=jnp.float32)
    y = y + bp_ref[...]
    o_ref[0] = y.astype(o_ref.dtype)


# ----------------------------- wrapper -----------------------------

def self_attention(x, params, heads):
    """PyTorch SelfAttention.forward: x (B, C, H, W) -> (B, C, H, W)."""
    B, C, H, W = x.shape
    hd = C // heads
    S = H * W
    scale = hd ** (-0.5)

    # Pure reshape (no data movement): NCHW -> (B, C, S), lane axis = S.
    xh = x.reshape(B, C, S)

    def block_diag(w):
        # nn.Conv2d(C, C, 1, groups=heads) weight (C, hd, 1, 1) -> dense (C, C)
        # block-diagonal matrix (trace-time only; free at runtime).
        wh = w.reshape(heads, hd, hd)                          # (h, out, in)
        eye = jnp.eye(heads, dtype=wh.dtype)
        return jnp.einsum("hoi,hg->hogi", wh, eye).reshape(C, C)

    # Fold the softmax scale into the Q weights/bias; stack Q/K/V.
    wqkv = jnp.concatenate([block_diag(params["wq"]) * scale,
                            block_diag(params["wk"]),
                            block_diag(params["wv"])], axis=0)          # (3C, C)
    bqkv = jnp.concatenate([params["bq"] * scale,
                            params["bk"],
                            params["bv"]], axis=0).reshape(3 * C, 1)    # (3C, 1)
    wp = block_diag(params["wp"])                                       # (C, C)
    bp = params["bp"].reshape(C, 1)                                     # (C, 1)

    xspec = pl.BlockSpec((1, C, S), lambda b: (b, 0, 0))

    out = pl.pallas_call(
        functools.partial(_self_attention_kernel, heads=heads),
        out_shape=jax.ShapeDtypeStruct((B, C, S), jnp.float32),
        grid=(B,),
        in_specs=[xspec,
                  pl.BlockSpec((3 * C, C), lambda b: (0, 0)),
                  pl.BlockSpec((3 * C, 1), lambda b: (0, 0)),
                  pl.BlockSpec((C, C), lambda b: (0, 0)),
                  pl.BlockSpec((C, 1), lambda b: (0, 0))],
        out_specs=xspec,
        compiler_params=pltpu.CompilerParams(
            dimension_semantics=("parallel",)),
    )(xh, wqkv, bqkv, wp, bp)

    return out.reshape(B, C, H, W)


# --------------- plain-JAX reference (PyTorch semantics) ---------------

def _reference(x, p, heads):
    B, C, H, W = x.shape
    hd = C // heads
    S = H * W

    def proj(inp, w, b):
        wh = w.reshape(heads, hd, hd)
        xh = inp.reshape(B, heads, hd, S)
        return jnp.einsum("hoi,bhis->bhos", wh, xh) + b.reshape(1, heads, hd, 1)

    q = proj(x, p["wq"], p["bq"])                  # (B, heads, hd, S)
    k = proj(x, p["wk"], p["bk"])
    v = proj(x, p["wv"], p["bv"])
    attn = jnp.einsum("bhds,bhdt->bhst", q, k) * (hd ** (-0.5))
    attn = jax.nn.softmax(attn, axis=-1)
    out = jnp.einsum("bhdt,bhst->bhds", v, attn)   # (B, heads, hd, S)
    y = jnp.einsum("hoi,bhis->bhos", p["wp"].reshape(heads, hd, hd), out)
    y = y + p["bp"].reshape(1, heads, hd, 1)
    return y.reshape(B, C, H, W)


# ----------------------------- main -----------------------------

if __name__ == "__main__":
    B, C, H, W, HEADS = 2, 32, 16, 16, 4          # hd = 8, S = 256 (lane-dense)
    hd = C // HEADS

    key = jax.random.PRNGKey(0)
    ks = jax.random.split(key, 9)
    x = jax.random.normal(ks[0], (B, C, H, W), jnp.float32)

    def conv_w(k):   # grouped 1x1 conv weight: (C, hd, 1, 1)
        return 0.1 * jax.random.normal(k, (C, hd, 1, 1), jnp.float32)

    def conv_b(k):   # bias: (C,)
        return 0.05 * jax.random.normal(k, (C,), jnp.float32)

    params = dict(
        wq=conv_w(ks[1]), bq=conv_b(ks[2]),
        wk=conv_w(ks[3]), bk=conv_b(ks[4]),
        wv=conv_w(ks[5]), bv=conv_b(ks[6]),
        wp=conv_w(ks[7]), bp=conv_b(ks[8]),
    )

    fn = jax.jit(functools.partial(self_attention, heads=HEADS))
    out = jax.block_until_ready(fn(x, params))

    ref = _reference(x, params, HEADS)

    assert out.shape == (B, C, H, W), out.shape
    assert bool(jnp.all(jnp.isfinite(out)))
    # bf16 attn@V operands + approx reciprocal -> loose-but-safe tolerance.
    max_err = float(jnp.max(jnp.abs(out - ref)))
    assert max_err < 2e-2, f"max abs err {max_err}"
    print("KERNEL_OK")
</pallas_src>

<mosaic_0001>
module attributes {stable_mosaic.version = 11 : i64} {
  func.func @_self_attention_kernel(%arg0: i32, %arg1: memref<1x32x256xf32, #tpu.memory_space<vmem>>, %arg2: memref<96x32xf32, #tpu.memory_space<vmem>>, %arg3: memref<96x1xf32, #tpu.memory_space<vmem>>, %arg4: memref<32x32xf32, #tpu.memory_space<vmem>>, %arg5: memref<32x1xf32, #tpu.memory_space<vmem>>, %arg6: memref<1x32x256xf32, #tpu.memory_space<vmem>>) attributes {dimension_semantics = [#tpu.dimension_semantics<parallel>], iteration_bounds = array<i64: 2>, scalar_prefetch = 0 : i64, scratch_operands = 0 : i64, tpu.core_type = #tpu.core_type<tc>, window_params = [{transform_indices = @transform_0, window_bounds = array<i64: 1, 32, 256>}, {pipeline_mode = #tpu.pipeline_mode<synchronous>, transform_indices = @transform_1, window_bounds = array<i64: 96, 32>}, {pipeline_mode = #tpu.pipeline_mode<synchronous>, transform_indices = @transform_2, window_bounds = array<i64: 96, 1>}, {pipeline_mode = #tpu.pipeline_mode<synchronous>, transform_indices = @transform_3, window_bounds = array<i64: 32, 32>}, {pipeline_mode = #tpu.pipeline_mode<synchronous>, transform_indices = @transform_4, window_bounds = array<i64: 32, 1>}, {transform_indices = @transform_5, window_bounds = array<i64: 1, 32, 256>}]} {
    %c0 = arith.constant 0 : index
    %c0_0 = arith.constant 0 : index
    %c0_1 = arith.constant 0 : index
    %0 = vector.load %arg1[%c0, %c0_0, %c0_1] : memref<1x32x256xf32, #tpu.memory_space<vmem>>, vector<1x32x256xf32>
    %1 = vector.shape_cast %0 : vector<1x32x256xf32> to vector<32x256xf32>
    %c0_2 = arith.constant 0 : index
    %c0_3 = arith.constant 0 : index
    %2 = vector.load %arg2[%c0_2, %c0_3] : memref<96x32xf32, #tpu.memory_space<vmem>>, vector<96x32xf32>
    %cst = arith.constant dense<0.000000e+00> : vector<96x256xf32>
    %3 = tpu.matmul %2, %1, %cst {dimension_numbers = #tpu.dot_dimension_numbers<[1], [0], [0], [1], [0, 0, 1, 1], [], []>} : vector<96x32xf32>, vector<32x256xf32>, vector<96x256xf32> -> vector<96x256xf32>
    %c0_4 = arith.constant 0 : index
    %c0_5 = arith.constant 0 : index
    %4 = vector.load %arg3[%c0_4, %c0_5] : memref<96x1xf32, #tpu.memory_space<vmem>>, vector<96x1xf32>
    %5 = vector.broadcast %4 : vector<96x1xf32> to vector<96x256xf32>
    %6 = arith.addf %3, %5 : vector<96x256xf32>
    %7 = vector.extract_strided_slice %6 {offsets = [0, 0], sizes = [32, 256], strides = [1, 1]} : vector<96x256xf32> to vector<32x256xf32>
    %8 = vector.shape_cast %7 : vector<32x256xf32> to vector<4x8x256xf32>
    %9 = vector.extract_strided_slice %6 {offsets = [32, 0], sizes = [32, 256], strides = [1, 1]} : vector<96x256xf32> to vector<32x256xf32>
    %10 = vector.shape_cast %9 : vector<32x256xf32> to vector<4x8x256xf32>
    %11 = vector.extract_strided_slice %6 {offsets = [64, 0], sizes = [32, 256], strides = [1, 1]} : vector<96x256xf32> to vector<32x256xf32>
    %12 = vector.shape_cast %11 : vector<32x256xf32> to vector<4x8x256xf32>
    "tpu.trace_start"() <{level = 10 : i32, message = "hds,hdt->hst"}> : () -> ()
    %cst_6 = arith.constant dense<0.000000e+00> : vector<4x256x256xf32>
    %13 = tpu.matmul %8, %10, %cst_6 {dimension_numbers = #tpu.dot_dimension_numbers<[1], [1], [2], [2], [0, 0, 0, 2, 1, 2], [0], [0]>} : vector<4x8x256xf32>, vector<4x8x256xf32>, vector<4x256x256xf32> -> vector<4x256x256xf32>
    "tpu.trace_stop"() : () -> ()
    %cst_7 = arith.constant dense<0xFF800000> : vector<4x256xf32>
    %14 = vector.multi_reduction <maximumf>, %13, %cst_7 [2] : vector<4x256x256xf32> to vector<4x256xf32>
    %15 = vector.shape_cast %14 : vector<4x256xf32> to vector<4x256x1xf32>
    %16 = vector.broadcast %15 : vector<4x256x1xf32> to vector<4x256x256xf32>
    %17 = arith.subf %13, %16 : vector<4x256x256xf32>
    %18 = math.exp %17 : vector<4x256x256xf32>
    %cst_8 = arith.constant dense<0.000000e+00> : vector<4x256xf32>
    %19 = vector.multi_reduction <add>, %18, %cst_8 [2] : vector<4x256x256xf32> to vector<4x256xf32>
    %20 = arith.truncf %12 : vector<4x8x256xf32> to vector<4x8x256xbf16>
    %21 = arith.truncf %18 : vector<4x256x256xf32> to vector<4x256x256xbf16>
    "tpu.trace_start"() <{level = 10 : i32, message = "hdt,hst->hds"}> : () -> ()
    %cst_9 = arith.constant dense<0.000000e+00> : vector<4x8x256xf32>
    %22 = tpu.matmul %20, %21, %cst_9 {dimension_numbers = #tpu.dot_dimension_numbers<[2], [2], [1], [1], [0, 0, 0, 1, 1, 1], [0], [0]>} : vector<4x8x256xbf16>, vector<4x256x256xbf16>, vector<4x8x256xf32> -> vector<4x8x256xf32>
    "tpu.trace_stop"() : () -> ()
    %23 = tpu.reciprocal %19 {approx = true} : vector<4x256xf32> -> vector<4x256xf32>
    %24 = vector.shape_cast %23 : vector<4x256xf32> to vector<4x1x256xf32>
    %25 = vector.broadcast %24 : vector<4x1x256xf32> to vector<4x8x256xf32>
    %26 = arith.mulf %22, %25 : vector<4x8x256xf32>
    %c0_10 = arith.constant 0 : index
    %c0_11 = arith.constant 0 : index
    %27 = vector.load %arg4[%c0_10, %c0_11] : memref<32x32xf32, #tpu.memory_space<vmem>>, vector<32x32xf32>
    %28 = vector.shape_cast %26 : vector<4x8x256xf32> to vector<32x256xf32>
    %cst_12 = arith.constant dense<0.000000e+00> : vector<32x256xf32>
    %29 = tpu.matmul %27, %28, %cst_12 {dimension_numbers = #tpu.dot_dimension_numbers<[1], [0], [0], [1], [0, 0, 1, 1], [], []>} : vector<32x32xf32>, vector<32x256xf32>, vector<32x256xf32> -> vector<32x256xf32>
    %c0_13 = arith.constant 0 : index
    %c0_14 = arith.constant 0 : index
    %30 = vector.load %arg5[%c0_13, %c0_14] : memref<32x1xf32, #tpu.memory_space<vmem>>, vector<32x1xf32>
    %31 = vector.broadcast %30 : vector<32x1xf32> to vector<32x256xf32>
    %32 = arith.addf %29, %31 : vector<32x256xf32>
    %c0_15 = arith.constant 0 : index
    %c0_16 = arith.constant 0 : index
    %c0_17 = arith.constant 0 : index
    %33 = vector.load %arg6[%c0_15, %c0_16, %c0_17] : memref<1x32x256xf32, #tpu.memory_space<vmem>>, vector<1x32x256xf32>
    %34 = vector.shape_cast %33 : vector<1x32x256xf32> to vector<32x256xf32>
    %35 = vector.shape_cast %32 : vector<32x256xf32> to vector<1x32x256xf32>
    tpu.vector_store %arg6[%c0_15, %c0_16, %c0_17], %35 {strides = array<i32>} : memref<1x32x256xf32, #tpu.memory_space<vmem>>, vector<1x32x256xf32>,
    return
  }
  func.func @transform_0(%arg0: i32) -> (i32, i32, i32) {
    %c0_i32 = arith.constant 0 : i32
    %c0_i32_0 = arith.constant 0 : i32
    %c0_i32_1 = arith.constant 0 : i32
    return %arg0, %c0_i32, %c0_i32_0 : i32, i32, i32
  }
  func.func @transform_1(%arg0: i32) -> (i32, i32) {
    %c0_i32 = arith.constant 0 : i32
    %c0_i32_0 = arith.constant 0 : i32
    %c0_i32_1 = arith.constant 0 : i32
    return %c0_i32, %c0_i32_0 : i32, i32
  }
  func.func @transform_2(%arg0: i32) -> (i32, i32) {
    %c0_i32 = arith.constant 0 : i32
    %c0_i32_0 = arith.constant 0 : i32
    %c0_i32_1 = arith.constant 0 : i32
    return %c0_i32, %c0_i32_0 : i32, i32
  }
  func.func @transform_3(%arg0: i32) -> (i32, i32) {
    %c0_i32 = arith.constant 0 : i32
    %c0_i32_0 = arith.constant 0 : i32
    %c0_i32_1 = arith.constant 0 : i32
    return %c0_i32, %c0_i32_0 : i32, i32
  }
  func.func @transform_4(%arg0: i32) -> (i32, i32) {
    %c0_i32 = arith.constant 0 : i32
    %c0_i32_0 = arith.constant 0 : i32
    %c0_i32_1 = arith.constant 0 : i32
    return %c0_i32, %c0_i32_0 : i32, i32
  }
  func.func @transform_5(%arg0: i32) -> (i32, i32, i32) {
    %c0_i32 = arith.constant 0 : i32
    %c0_i32_0 = arith.constant 0 : i32
    %c0_i32_1 = arith.constant 0 : i32
    return %arg0, %c0_i32, %c0_i32_0 : i32, i32, i32
  }
}

</mosaic_0001>

<llo_original>
// kernel: self_attention.1
$region0: #{self_attention.1}
  #allocation0 [shape = 'u32[]', space=smem, size = 0x4, offset = 0x4, fixed_abs, tag = 'smem constant byte address 0x4 - core index']
  #allocation1 [shape = 'u32[144,128]{1,0:T(1,128)}', space=vmem, size = 0x12000, scoped, tag = 'internal scratch']
  %s0 = inlined_call_operand.vmem [shape: f32[2,32,256], index: 0, kind: input, shape index: {}]
  %s1 = inlined_call_operand.vmem [shape: f32[96,32], index: 1, kind: input, shape index: {}]
  %s2 = inlined_call_operand.vmem [shape: f32[96,1], index: 2, kind: input, shape index: {}]
  %s3 = inlined_call_operand.vmem [shape: f32[32,32], index: 3, kind: input, shape index: {}]
  %s4 = inlined_call_operand.vmem [shape: f32[32,1], index: 4, kind: input, shape index: {}]
  %s5 = inlined_call_operand.vmem [shape: f32[2,32,256], index: 5, kind: output, shape index: {}]
  %s6 = sld [smem:[#allocation0]]
  $region53: #{self_attention.1} parent=0
    _
  %s8 = ssub.s32 1, %s6
  %s9 = scalar_select 0, %s8, %s6
  loop: start=0, step=1, limit=4
  $region2: #{self_attention.1} parent=0 // loop_pre_header
    _
  $region3: #{self_attention.1} parent=0 // loop_header
    %s11 = sphi 0, %s15
    %p12 = scmp.ge.s32.totalorder %s11, 4
    %s21 = sphi 0, %s23
    %s24 = sphi 0, %s21
    %s25 = sphi 0, %s24
    %s41 = sphi 0, %s25
    %s45 = sphi 0, %s45
    %s47 = sphi 0, %s45
    %s48 = sphi 0, %s47
    %s62 = sphi 0, %s48
    %s66 = sphi 0, %s66
    %s68 = sphi 0, %s66
    %s69 = sphi 0, %s68
    %s83 = sphi 0, %s69
    %s87 = sphi 0, %s87
    %s89 = sphi 0, %s87
    %s90 = sphi 0, %s89
    %s104 = sphi 0, %s90
    %s108 = sphi 0, %s108
    %s110 = sphi 0, %s108
    %s111 = sphi 0, %s110
    %s125 = sphi 0, %s111
    %s131 = sphi 0, %s133
    %s134 = sphi 0, %s131
    %s135 = sphi 0, %s134
    %s151 = sphi 0, %s135
  $region4: #{self_attention.1} parent=0 // loop_header_branch
    %14 = sbr.rel (%p12) target = $region8
  $region5: #{self_attention.1} parent=0 // loop_body
    %s16 = ssub.s32 %s11, 1
    %s17 = ssub.s32 %s11, 2
    %s18 = sadd.s32 %s11, 1
    %s19 = ssub.s32 %s11, %s18
    %p20 = scmp.eq.s32.totalorder %s19, 0
    %s22 = sadd.s32 %s21, 1
    %s23 = scalar_select %p20, %s21, %s22
    %p26 = pneg %p20
    %p27 = scmp.eq.s32.totalorder %s11, 1
    %p28 = por %p26, %p27
    %p29 = scmp.ne.s32.totalorder %s21, %s24
    %p30 = scmp.eq.s32.totalorder %s11, 0
    %p31 = por %p29, %p30
    %p32 = scmp.ne.s32.totalorder %s21, %s24
    %p33 = scmp.eq.s32.totalorder %s16, 1
    %p34 = por %p32, %p33
    %p35 = scmp.ne.s32.totalorder %s24, %s25
    %p36 = scmp.eq.s32.totalorder %s16, 0
    %p37 = por %p35, %p36
    %p38 = scmp.ne.s32.totalorder %s24, %s25
    %p39 = scmp.eq.s32.totalorder %s17, 1
    %p40 = por %p38, %p39
    %p42 = scmp.ne.s32.totalorder %s25, %s41
    %p43 = scmp.eq.s32.totalorder %s17, 0
    %p44 = por %p42, %p43
    %s46 = sadd.s32 %s45, 1
    %p49 = scmp.eq.s32.totalorder %s11, 1
    %p50 = scmp.ne.s32.totalorder %s45, %s47
    %p51 = scmp.eq.s32.totalorder %s11, 0
    %p52 = por %p50, %p51
    %p53 = scmp.ne.s32.totalorder %s45, %s47
    %p54 = scmp.eq.s32.totalorder %s16, 1
    %p55 = por %p53, %p54
    %p56 = scmp.ne.s32.totalorder %s47, %s48
    %p57 = scmp.eq.s32.totalorder %s16, 0
    %p58 = por %p56, %p57
    %p59 = scmp.ne.s32.totalorder %s47, %s48
    %p60 = scmp.eq.s32.totalorder %s17, 1
    %p61 = por %p59, %p60
    %p63 = scmp.ne.s32.totalorder %s48, %s62
    %p64 = scmp.eq.s32.totalorder %s17, 0
    %p65 = por %p63, %p64
    %s67 = sadd.s32 %s66, 1
    %p70 = scmp.eq.s32.totalorder %s11, 1
    %p71 = scmp.ne.s32.totalorder %s66, %s68
    %p72 = scmp.eq.s32.totalorder %s11, 0
    %p73 = por %p71, %p72
    %p74 = scmp.ne.s32.totalorder %s66, %s68
    %p75 = scmp.eq.s32.totalorder %s16, 1
    %p76 = por %p74, %p75
    %p77 = scmp.ne.s32.totalorder %s68, %s69
    %p78 = scmp.eq.s32.totalorder %s16, 0
    %p79 = por %p77, %p78
    %p80 = scmp.ne.s32.totalorder %s68, %s69
    %p81 = scmp.eq.s32.totalorder %s17, 1
    %p82 = por %p80, %p81
    %p84 = scmp.ne.s32.totalorder %s69, %s83
    %p85 = scmp.eq.s32.totalorder %s17, 0
    %p86 = por %p84, %p85
    %s88 = sadd.s32 %s87, 1
    %p91 = scmp.eq.s32.totalorder %s11, 1
    %p92 = scmp.ne.s32.totalorder %s87, %s89
    %p93 = scmp.eq.s32.totalorder %s11, 0
    %p94 = por %p92, %p93
    %p95 = scmp.ne.s32.totalorder %s87, %s89
    %p96 = scmp.eq.s32.totalorder %s16, 1
    %p97 = por %p95, %p96
    %p98 = scmp.ne.s32.totalorder %s89, %s90
    %p99 = scmp.eq.s32.totalorder %s16, 0
    %p100 = por %p98, %p99
    %p101 = scmp.ne.s32.totalorder %s89, %s90
    %p102 = scmp.eq.s32.totalorder %s17, 1
    %p103 = por %p101, %p102
    %p105 = scmp.ne.s32.totalorder %s90, %s104
    %p106 = scmp.eq.s32.totalorder %s17, 0
    %p107 = por %p105, %p106
    %s109 = sadd.s32 %s108, 1
    %p112 = scmp.eq.s32.totalorder %s11, 1
    %p113 = scmp.ne.s32.totalorder %s108, %s110
    %p114 = scmp.eq.s32.totalorder %s11, 0
    %p115 = por %p113, %p114
    %p116 = scmp.ne.s32.totalorder %s108, %s110
    %p117 = scmp.eq.s32.totalorder %s16, 1
    %p118 = por %p116, %p117
    %p119 = scmp.ne.s32.totalorder %s110, %s111
    %p120 = scmp.eq.s32.totalorder %s16, 0
    %p121 = por %p119, %p120
    %p122 = scmp.ne.s32.totalorder %s110, %s111
    %p123 = scmp.eq.s32.totalorder %s17, 1
    %p124 = por %p122, %p123
    %p126 = scmp.ne.s32.totalorder %s111, %s125
    %p127 = scmp.eq.s32.totalorder %s17, 0
    %p128 = por %p126, %p127
    %s129 = ssub.s32 %s11, %s18
    %p130 = scmp.eq.s32.totalorder %s129, 0
    %s132 = sadd.s32 %s131, 1
    %s133 = scalar_select %p130, %s131, %s132
    %p136 = pneg %p130
    %p137 = scmp.eq.s32.totalorder %s11, 1
    %p138 = por %p136, %p137
    %p139 = scmp.ne.s32.totalorder %s131, %s134
    %p140 = scmp.eq.s32.totalorder %s11, 0
    %p141 = por %p139, %p140
    %p142 = scmp.ne.s32.totalorder %s131, %s134
    %p143 = scmp.eq.s32.totalorder %s16, 1
    %p144 = por %p142, %p143
    %p145 = scmp.ne.s32.totalorder %s134, %s135
    %p146 = scmp.eq.s32.totalorder %s16, 0
    %p147 = por %p145, %p146
    %p148 = scmp.ne.s32.totalorder %s134, %s135
    %p149 = scmp.eq.s32.totalorder %s17, 1
    %p150 = por %p148, %p149
    %p152 = scmp.ne.s32.totalorder %s135, %s151
    %p153 = scmp.eq.s32.totalorder %s17, 0
    %p154 = por %p152, %p153
    %p155 = scmp.le.s32.totalorder 1, %s11
    %p156 = scmp.lt.s32.totalorder %s11, 3
    %p157 = pnand %p155, %p156
    %p158 = pneg %p157
    // Predicated region
    $region9: #{self_attention.1} parent=5 // pred_check
      _
    $region10: #{self_attention.1} parent=5 // pred_check_branch
      %160 = sbr.rel (%p157) target = $region12
    $region11: #{self_attention.1} parent=5 // pred_region
      %s161 = ssub.s32 %s11, 1
      // Predicated region
      $region13: #{self_attention.1} parent=11 // pred_check
        %p162 = pneg %p58
      $region14: #{self_attention.1} parent=11 // pred_check_branch
        %164 = sbr.rel (%p162) target = $region16
      $region15: #{self_attention.1} parent=11 // pred_region
        _
      $region16: #{self_attention.1} parent=11 // pred_fallthru
        _
      // Predicated region
      $region17: #{self_attention.1} parent=11 // pred_check
        %p165 = pneg %p79
      $region18: #{self_attention.1} parent=11 // pred_check_branch
        %167 = sbr.rel (%p165) target = $region20
      $region19: #{self_attention.1} parent=11 // pred_region
        _
      $region20: #{self_attention.1} parent=11 // pred_fallthru
        _
      // Predicated region
      $region21: #{self_attention.1} parent=11 // pred_check
        %p168 = pneg %p100
      $region22: #{self_attention.1} parent=11 // pred_check_branch
        %170 = sbr.rel (%p168) target = $region24
      $region23: #{self_attention.1} parent=11 // pred_region
        _
      $region24: #{self_attention.1} parent=11 // pred_fallthru
        _
      // Predicated region
      $region25: #{self_attention.1} parent=11 // pred_check
        %p171 = pneg %p121
      $region26: #{self_attention.1} parent=11 // pred_check_branch
        %173 = sbr.rel (%p171) target = $region28
      $region27: #{self_attention.1} parent=11 // pred_region
        _
      $region28: #{self_attention.1} parent=11 // pred_fallthru
        _
    $region12: #{self_attention.1} parent=5 // pred_fallthru
      _
    %p174 = scmp.lt.s32.totalorder %s11, 2
    // Predicated region
    $region29: #{self_attention.1} parent=5 // pred_check
      %p175 = pneg %p174
    $region30: #{self_attention.1} parent=5 // pred_check_branch
      %177 = sbr.rel (%p175) target = $region32
    $region31: #{self_attention.1} parent=5 // pred_region
      // Predicated region
      $region33: #{self_attention.1} parent=31 // pred_check
        %p178 = pneg %p31
      $region34: #{self_attention.1} parent=31 // pred_check_branch
        %180 = sbr.rel (%p178) target = $region36
      $region35: #{self_attention.1} parent=31 // pred_region
        %p181 = scmp.lt.s32.totalorder %s11, 1
        %s182 = scalar_select %p181, %s11, 1
        %s183 = smul.addr %s182, 8
        %s184 = smul.addr %s183, 8
        %s185 = scalar_lea.vmem %s0, %s184
      $region36: #{self_attention.1} parent=31 // pred_fallthru
        _
    $region32: #{self_attention.1} parent=5 // pred_fallthru
      _
    %p186 = scmp.le.s32.totalorder 1, %s11
    %p187 = scmp.lt.s32.totalorder %s11, 3
    %p188 = pnand %p186, %p187
    %p189 = pneg %p188
    // Predicated region
    $region37: #{self_attention.1} parent=5 // pred_check
      _
    $region38: #{self_attention.1} parent=5 // pred_check_branch
      %191 = sbr.rel (%p188) target = $region40
    $region39: #{self_attention.1} parent=5 // pred_region
      %s192 = ssub.s32 %s11, 1
      %p193 = scmp.lt.s32.totalorder %s16, 1
      %s194 = scalar_select %p193, %s16, 1
      %s195 = smul.addr %s194, 8
      %s196 = smul.addr %s195, 8
      %s197 = scalar_lea.vmem %s0, %s196
      %p198 = pneg %p37
      %p199 = pneg %p34
      %p200 = pneg %p58
      %p201 = pneg %p55
      %p202 = pneg %p79
      %p203 = pneg %p76
      %p204 = pneg %p100
      %p205 = pneg %p97
      %p206 = pneg %p121
      %p207 = pneg %p118
      %p208 = pneg %p147
      %p209 = pneg %p144
      %p210 = scmp.lt.s32.totalorder %s16, 1
      %s211 = scalar_select %p210, %s16, 1
      %s212 = smul.addr %s211, 8
      %s213 = smul.addr %s212, 8
      %s214 = scalar_lea.vmem %s5, %s213
      %p215 = scmp.lt.s32.totalorder %s16, 1
      %s216 = scalar_select %p215, %s16, 1
      %s217 = smul.addr %s216, 8
      %s218 = smul.addr %s217, 8
      %s219 = scalar_lea.vmem %s0, %s218
      %p220 = scmp.lt.s32.totalorder %s16, 1
      %s221 = scalar_select %p220, %s16, 1
      %s222 = smul.addr %s221, 8
      %s223 = smul.addr %s222, 8
      %s224 = scalar_lea.vmem %s5, %s223
      %v225 = vld [vmem:[%s219] sm:$0xff]
      %v226 = vld [vmem:[%s219 + $0x8] sm:$0xff]
      %v227 = vld [vmem:[%s219 + $0x10] sm:$0xff]
      %v228 = vld [vmem:[%s219 + $0x18] sm:$0xff]
      %v229 = vld [vmem:[%s219 + $0x20] sm:$0xff]
      %v230 = vld [vmem:[%s219 + $0x28] sm:$0xff]
      %v231 = vld [vmem:[%s219 + $0x30] sm:$0xff]
      %v232 = vld [vmem:[%s219 + $0x38] sm:$0xff]
      %v233 = vld [vmem:[%s1] sm:$0xff]
      %v234 = vld [vmem:[%s1 + $0x8] sm:$0xff]
      %v235 = vld [vmem:[%s1 + $0x10] sm:$0xff]
      %v236 = vld [vmem:[%s1 + $0x18] sm:$0xff]
      %v237 = vld [vmem:[%s1 + $0x20] sm:$0xff]
      %v238 = vld [vmem:[%s1 + $0x28] sm:$0xff]
      %v239 = vld [vmem:[%s1 + $0x30] sm:$0xff]
      %v240 = vld [vmem:[%s1 + $0x38] sm:$0xff]
      %v241 = vld [vmem:[%s1 + $0x40] sm:$0xff]
      %v242 = vld [vmem:[%s1 + $0x48] sm:$0xff]
      %v243 = vld [vmem:[%s1 + $0x50] sm:$0xff]
      %v244 = vld [vmem:[%s1 + $0x58] sm:$0xff]
      %v245 = vld [vmem:[%s2] sm:$0xff]
      %v246 = vld [vmem:[%s2 + $0x8] sm:$0xff]
      %v247 = vld [vmem:[%s2 + $0x10] sm:$0xff]
      %v248 = vld [vmem:[%s2 + $0x18] sm:$0xff]
      %v249 = vld [vmem:[%s2 + $0x20] sm:$0xff]
      %v250 = vld [vmem:[%s2 + $0x28] sm:$0xff]
      %v251 = vld [vmem:[%s2 + $0x30] sm:$0xff]
      %v252 = vld [vmem:[%s2 + $0x38] sm:$0xff]
      %v253 = vld [vmem:[%s2 + $0x40] sm:$0xff]
      %v254 = vld [vmem:[%s2 + $0x48] sm:$0xff]
      %v255 = vld [vmem:[%s2 + $0x50] sm:$0xff]
      %v256 = vld [vmem:[%s2 + $0x58] sm:$0xff]
      %258 = vset.pattern.permute.xlu0 0
      %259 = vperm.xlu0 %258, %v245
      %v260 = vpop.permute.xlu0 %259
      %263 = vset.pattern.permute.xlu0 0
      %264 = vperm.xlu0 %263, %v246
      %v265 = vpop.permute.xlu0 %264
      %268 = vset.pattern.permute.xlu0 0
      %269 = vperm.xlu0 %268, %v247
      %v270 = vpop.permute.xlu0 %269
      %273 = vset.pattern.permute.xlu0 0
      %274 = vperm.xlu0 %273, %v248
      %v275 = vpop.permute.xlu0 %274
      %278 = vset.pattern.permute.xlu0 0
      %279 = vperm.xlu0 %278, %v249
      %v280 = vpop.permute.xlu0 %279
      %283 = vset.pattern.permute.xlu0 0
      %284 = vperm.xlu0 %283, %v250
      %v285 = vpop.permute.xlu0 %284
      %288 = vset.pattern.permute.xlu0 0
      %289 = vperm.xlu0 %288, %v251
      %v290 = vpop.permute.xlu0 %289
      %293 = vset.pattern.permute.xlu0 0
      %294 = vperm.xlu0 %293, %v252
      %v295 = vpop.permute.xlu0 %294
      %298 = vset.pattern.permute.xlu0 0
      %299 = vperm.xlu0 %298, %v253
      %v300 = vpop.permute.xlu0 %299
      %303 = vset.pattern.permute.xlu0 0
      %304 = vperm.xlu0 %303, %v254
      %v305 = vpop.permute.xlu0 %304
      %308 = vset.pattern.permute.xlu0 0
      %309 = vperm.xlu0 %308, %v255
      %v310 = vpop.permute.xlu0 %309
      %313 = vset.pattern.permute.xlu0 0
      %314 = vperm.xlu0 %313, %v256
      %v315 = vpop.permute.xlu0 %314
      %vm317 = vcmask 261120
      %v319 = vsel %vm317, %v233, 0
      %v322 = vsel %vm317, %v234, 0
      %v325 = vsel %vm317, %v235, 0
      %v328 = vsel %vm317, %v236, 0
      %v331 = vsel %vm317, %v237, 0
      %v334 = vsel %vm317, %v238, 0
      %v337 = vsel %vm317, %v239, 0
      %v340 = vsel %vm317, %v240, 0
      %v343 = vsel %vm317, %v241, 0
      %v346 = vsel %vm317, %v242, 0
      %v349 = vsel %vm317, %v243, 0
      %v352 = vsel %vm317, %v244, 0
      %354 = vmatprep.subr.mxu0 %v226
      %355 = vmatpush1.msra.mxu0 %v225
      %356 = vmatprep.subr.mxu0 %v228
      %357 = vmatpush1.msra.mxu0 %v227
      %358 = vmatprep.subr.mxu0 %v230
      %359 = vmatpush1.msra.mxu0 %v229
      %360 = vmatprep.subr.mxu0 %v232
      %361 = vmatpush1.msra.mxu0 %v231
      %362 = vmatprep.subr.mxu0 0.0
      %363 = vmatpush1.msra.mxu0 0.0
      %364 = vmatprep.subr.mxu0 0.0
      %365 = vmatpush1.msra.mxu0 0.0
      %366 = vmatprep.subr.mxu0 0.0
      %367 = vmatpush1.msra.mxu0 0.0
      %368 = vmatprep.subr.mxu0 0.0
      %369 = vmatpush1.msra.mxu0 0.0
      %370 = vmatprep.subr.mxu0 0.0
      %371 = vmatpush1.msra.mxu0 0.0
      %372 = vmatprep.subr.mxu0 0.0
      %373 = vmatpush1.msra.mxu0 0.0
      %374 = vmatprep.subr.mxu0 0.0
      %375 = vmatpush1.msra.mxu0 0.0
      %376 = vmatprep.subr.mxu0 0.0
      %377 = vmatpush1.msra.mxu0 0.0
      %378 = vmatprep.subr.mxu0 0.0
      %379 = vmatpush1.msra.mxu0 0.0
      %380 = vmatprep.subr.mxu0 0.0
      %381 = vmatpush1.msra.mxu0 0.0
      %382 = vmatprep.subr.mxu0 0.0
      %383 = vmatpush1.msra.mxu0 0.0
      %384 = vmatprep.subr.mxu0 0.0
      %385 = vmatpush1.msra.mxu0 0.0
      %386 = vmatprep.subr.mxu0 0.0
      %387 = vmatpush1.msra.mxu0 0.0
      %388 = vmatprep.subr.mxu0 0.0
      %389 = vmatpush1.msra.mxu0 0.0
      %390 = vmatprep.subr.mxu0 0.0
      %391 = vmatpush1.msra.mxu0 0.0
      %392 = vmatprep.subr.mxu0 0.0
      %393 = vmatpush1.msra.mxu0 0.0
      %394 = vmatprep.subr.mxu0 0.0
      %395 = vmatpush1.msra.mxu0 0.0
      %396 = vmatprep.subr.mxu0 0.0
      %397 = vmatpush1.msra.mxu0 0.0
      %398 = vmatprep.subr.mxu0 0.0
      %399 = vmatpush1.msra.mxu0 0.0
      %400 = vmatprep.subr.mxu0 0.0
      %401 = vmatpush1.msra.mxu0 0.0
      %402 = vmatprep.subr.mxu0 0.0
      %403 = vmatpush1.msra.mxu0 0.0
      %404 = vmatprep.subr.mxu0 0.0
      %405 = vmatpush1.msra.mxu0 0.0
      %406 = vmatprep.subr.mxu0 0.0
      %407 = vmatpush1.msra.mxu0 0.0
      %408 = vmatprep.subr.mxu0 0.0
      %409 = vmatpush1.msra.mxu0 0.0
      %410 = vmatprep.subr.mxu0 0.0
      %411 = vmatpush1.msra.mxu0 0.0
      %412 = vmatprep.subr.mxu0 0.0
      %413 = vmatpush1.msra.mxu0 0.0
      %414 = vmatprep.subr.mxu0 0.0
      %415 = vmatpush1.msra.mxu0 0.0
      %416 = vmatprep.subr.mxu0 0.0
      %417 = vmatpush1.msra.mxu0 0.0
      %418 = vmatprep.mubr.f32.mxu0 0.0
      %419 = vmatmul.mubr.f32.gmra.mrb[0].mxu0 %v319
      %v420 = vpop.f32.mrb[0].mxu0
      %v421 = vadd.f32 %v260, %v420
      %v422 = vpop.f32.mrb[0].mxu0
      %v423 = vadd.f32 %v260, %v422
      %424 = vmatprep.mubr.f32.mxu0 0.0
      %425 = vmatmul.mubr.f32.gmra.mrb[0].mxu0 %v322
      %v426 = vpop.f32.mrb[0].mxu0
      %v427 = vadd.f32 %v265, %v426
      %v428 = vpop.f32.mrb[0].mxu0
      %v429 = vadd.f32 %v265, %v428
      %430 = vmatprep.mubr.f32.mxu0 0.0
      %431 = vmatmul.mubr.f32.gmra.mrb[0].mxu0 %v325
      %v432 = vpop.f32.mrb[0].mxu0
      %v433 = vadd.f32 %v270, %v432
      %v434 = vpop.f32.mrb[0].mxu0
      %v435 = vadd.f32 %v270, %v434
      %436 = vmatprep.mubr.f32.mxu0 0.0
      %437 = vmatmul.mubr.f32.gmra.mrb[0].mxu0 %v328
      %v438 = vpop.f32.mrb[0].mxu0
      %v439 = vadd.f32 %v275, %v438
      %v440 = vpop.f32.mrb[0].mxu0
      %v441 = vadd.f32 %v275, %v440
      %442 = vmatprep.mubr.f32.mxu0 0.0
      %443 = vmatmul.mubr.f32.gmra.mrb[0].mxu0 %v331
      %v444 = vpop.f32.mrb[0].mxu0
      %v445 = vadd.f32 %v280, %v444
      %v446 = vpop.f32.mrb[0].mxu0
      %v447 = vadd.f32 %v280, %v446
      %448 = vmatprep.mubr.f32.mxu0 0.0
      %449 = vmatmul.mubr.f32.gmra.mrb[0].mxu0 %v334
      %v450 = vpop.f32.mrb[0].mxu0
      %v451 = vadd.f32 %v285, %v450
      %v452 = vpop.f32.mrb[0].mxu0
      %v453 = vadd.f32 %v285, %v452
      %454 = vmatprep.mubr.f32.mxu0 0.0
      %455 = vmatmul.mubr.f32.gmra.mrb[0].mxu0 %v337
      %v456 = vpop.f32.mrb[0].mxu0
      %v457 = vadd.f32 %v290, %v456
      %v458 = vpop.f32.mrb[0].mxu0
      %v459 = vadd.f32 %v290, %v458
      %460 = vmatprep.mubr.f32.mxu0 0.0
      %461 = vmatmul.mubr.f32.gmra.mrb[0].mxu0 %v340
      %v462 = vpop.f32.mrb[0].mxu0
      %v463 = vadd.f32 %v295, %v462
      %v464 = vpop.f32.mrb[0].mxu0
      %v465 = vadd.f32 %v295, %v464
      %466 = vmatprep.mubr.f32.mxu0 0.0
      %467 = vmatmul.mubr.f32.gmra.mrb[0].mxu0 %v343
      %v468 = vpop.f32.mrb[0].mxu0
      %v469 = vadd.f32 %v300, %v468
      %v470 = vpop.f32.mrb[0].mxu0
      %v471 = vadd.f32 %v300, %v470
      %472 = vmatprep.mubr.f32.mxu0 0.0
      %473 = vmatmul.mubr.f32.gmra.mrb[0].mxu0 %v346
      %v474 = vpop.f32.mrb[0].mxu0
      %v475 = vadd.f32 %v305, %v474
      %v476 = vpop.f32.mrb[0].mxu0
      %v477 = vadd.f32 %v305, %v476
      %478 = vmatprep.mubr.f32.mxu0 0.0
      %479 = vmatmul.mubr.f32.gmra.mrb[0].mxu0 %v349
      %v480 = vpop.f32.mrb[0].mxu0
      %v481 = vadd.f32 %v310, %v480
      %v482 = vpop.f32.mrb[0].mxu0
      %v483 = vadd.f32 %v310, %v482
      %484 = vmatprep.mubr.f32.mxu0 0.0
      %485 = vmatmul.mubr.f32.gmra.mrb[0].mxu0 %v352
      %v486 = vpop.f32.mrb[0].mxu0
      %v487 = vadd.f32 %v315, %v486
      %v488 = vpop.f32.mrb[0].mxu0
      %v489 = vadd.f32 %v315, %v488
      %490 = vdwg.mxu0
      %491 = vxpose.xlu0.b32.start [1/16] %v421, 128
      %492 = vxpose.xlu0.b32.cont [2/16] 0.0, 128
      %493 = vxpose.xlu0.b32.cont [3/16] 0.0, 128
      %494 = vxpose.xlu0.b32.cont [4/16] 0.0, 128
      %495 = vxpose.xlu0.b32.cont [5/16] 0.0, 128
      %496 = vxpose.xlu0.b32.cont [6/16] 0.0, 128
      %497 = vxpose.xlu0.b32.cont [7/16] 0.0, 128
      %498 = vxpose.xlu0.b32.cont [8/16] 0.0, 128
      %499 = vxpose.xlu0.b32.cont [9/16] 0.0, 128
      %500 = vxpose.xlu0.b32.cont [10/16] 0.0, 128
      %501 = vxpose.xlu0.b32.cont [11/16] 0.0, 128
      %502 = vxpose.xlu0.b32.cont [12/16] 0.0, 128
      %503 = vxpose.xlu0.b32.cont [13/16] 0.0, 128
      %504 = vxpose.xlu0.b32.cont [14/16] 0.0, 128
      %505 = vxpose.xlu0.b32.cont [15/16] 0.0, 128
      %506 = vxpose.xlu0.b32.end [16/16] 0.0, 128
      %v507 = vpop.trf.xlu0
      %v508 = vpop.trf.xlu0
      %v509 = vpop.trf.xlu0
      %v510 = vpop.trf.xlu0
      %v511 = vpop.trf.xlu0
      %v512 = vpop.trf.xlu0
      %v513 = vpop.trf.xlu0
      %v514 = vpop.trf.xlu0
      %v515 = vpop.trf.xlu0
      %v516 = vpop.trf.xlu0
      %v517 = vpop.trf.xlu0
      %v518 = vpop.trf.xlu0
      %v519 = vpop.trf.xlu0
      %v520 = vpop.trf.xlu0
      %v521 = vpop.trf.xlu0
      %v522 = vpop.trf.xlu0
      %523 = vxpose.xlu0.b32.start [1/16] %v423, 128
      %524 = vxpose.xlu0.b32.cont [2/16] 0.0, 128
      %525 = vxpose.xlu0.b32.cont [3/16] 0.0, 128
      %526 = vxpose.xlu0.b32.cont [4/16] 0.0, 128
      %527 = vxpose.xlu0.b32.cont [5/16] 0.0, 128
      %528 = vxpose.xlu0.b32.cont [6/16] 0.0, 128
      %529 = vxpose.xlu0.b32.cont [7/16] 0.0, 128
      %530 = vxpose.xlu0.b32.cont [8/16] 0.0, 128
      %531 = vxpose.xlu0.b32.cont [9/16] 0.0, 128
      %532 = vxpose.xlu0.b32.cont [10/16] 0.0, 128
      %533 = vxpose.xlu0.b32.cont [11/16] 0.0, 128
      %534 = vxpose.xlu0.b32.cont [12/16] 0.0, 128
      %535 = vxpose.xlu0.b32.cont [13/16] 0.0, 128
      %536 = vxpose.xlu0.b32.cont [14/16] 0.0, 128
      %537 = vxpose.xlu0.b32.cont [15/16] 0.0, 128
      %538 = vxpose.xlu0.b32.end [16/16] 0.0, 128
      %v539 = vpop.trf.xlu0
      %v540 = vpop.trf.xlu0
      %v541 = vpop.trf.xlu0
      %v542 = vpop.trf.xlu0
      %v543 = vpop.trf.xlu0
      %v544 = vpop.trf.xlu0
      %v545 = vpop.trf.xlu0
      %v546 = vpop.trf.xlu0
      %v547 = vpop.trf.xlu0
      %v548 = vpop.trf.xlu0
      %v549 = vpop.trf.xlu0
      %v550 = vpop.trf.xlu0
      %v551 = vpop.trf.xlu0
      %v552 = vpop.trf.xlu0
      %v553 = vpop.trf.xlu0
      %v554 = vpop.trf.xlu0
      %vm555 = vcmask 64512
      %v557 = vsel %vm555, %v507, 0
      %v560 = vsel %vm555, %v508, 0
      %v563 = vsel %vm555, %v509, 0
      %v566 = vsel %vm555, %v510, 0
      %v569 = vsel %vm555, %v511, 0
      %v572 = vsel %vm555, %v512, 0
      %v575 = vsel %vm555, %v513, 0
      %v578 = vsel %vm555, %v514, 0
      %v581 = vsel %vm555, %v515, 0
      %v584 = vsel %vm555, %v516, 0
      %v587 = vsel %vm555, %v517, 0
      %v590 = vsel %vm555, %v518, 0
      %v593 = vsel %vm555, %v519, 0
      %v596 = vsel %vm555, %v520, 0
      %v599 = vsel %vm555, %v521, 0
      %v602 = vsel %vm555, %v522, 0
      %v605 = vsel %vm555, %v539, 0
      %v608 = vsel %vm555, %v540, 0
      %v611 = vsel %vm555, %v541, 0
      %v614 = vsel %vm555, %v542, 0
      %v617 = vsel %vm555, %v543, 0
      %v620 = vsel %vm555, %v544, 0
      %v623 = vsel %vm555, %v545, 0
      %v626 = vsel %vm555, %v546, 0
      %v629 = vsel %vm555, %v547, 0
      %v632 = vsel %vm555, %v548, 0
      %v635 = vsel %vm555, %v549, 0
      %v638 = vsel %vm555, %v550, 0
      %v641 = vsel %vm555, %v551, 0
      %v644 = vsel %vm555, %v552, 0
      %v647 = vsel %vm555, %v553, 0
      %v650 = vsel %vm555, %v554, 0
      %652 = vmatprep.subr.mxu0 %v447
      %653 = vmatpush1.msra.mxu0 %v445
      %654 = vmatprep.subr.mxu0 0.0
      %655 = vmatpush1.msra.mxu0 0.0
      %656 = vmatprep.subr.mxu0 0.0
      %657 = vmatpush1.msra.mxu0 0.0
      %658 = vmatprep.subr.mxu0 0.0
      %659 = vmatpush1.msra.mxu0 0.0
      %660 = vmatprep.subr.mxu0 0.0
      %661 = vmatpush1.msra.mxu0 0.0
      %662 = vmatprep.subr.mxu0 0.0
      %663 = vmatpush1.msra.mxu0 0.0
      %664 = vmatprep.subr.mxu0 0.0
      %665 = vmatpush1.msra.mxu0 0.0
      %666 = vmatprep.subr.mxu0 0.0
      %667 = vmatpush1.msra.mxu0 0.0
      %668 = vmatprep.subr.mxu0 0.0
      %669 = vmatpush1.msra.mxu0 0.0
      %670 = vmatprep.subr.mxu0 0.0
      %671 = vmatpush1.msra.mxu0 0.0
      %672 = vmatprep.subr.mxu0 0.0
      %673 = vmatpush1.msra.mxu0 0.0
      %674 = vmatprep.subr.mxu0 0.0
      %675 = vmatpush1.msra.mxu0 0.0
      %676 = vmatprep.subr.mxu0 0.0
      %677 = vmatpush1.msra.mxu0 0.0
      %678 = vmatprep.subr.mxu0 0.0
      %679 = vmatpush1.msra.mxu0 0.0
      %680 = vmatprep.subr.mxu0 0.0
      %681 = vmatpush1.msra.mxu0 0.0
      %682 = vmatprep.subr.mxu0 0.0
      %683 = vmatpush1.msra.mxu0 0.0
      %684 = vmatprep.subr.mxu0 0.0
      %685 = vmatpush1.msra.mxu0 0.0
      %686 = vmatprep.subr.mxu0 0.0
      %687 = vmatpush1.msra.mxu0 0.0
      %688 = vmatprep.subr.mxu0 0.0
      %689 = vmatpush1.msra.mxu0 0.0
      %690 = vmatprep.subr.mxu0 0.0
      %691 = vmatpush1.msra.mxu0 0.0
      %692 = vmatprep.subr.mxu0 0.0
      %693 = vmatpush1.msra.mxu0 0.0
      %694 = vmatprep.subr.mxu0 0.0
      %695 = vmatpush1.msra.mxu0 0.0
      %696 = vmatprep.subr.mxu0 0.0
      %697 = vmatpush1.msra.mxu0 0.0
      %698 = vmatprep.subr.mxu0 0.0
      %699 = vmatpush1.msra.mxu0 0.0
      %700 = vmatprep.subr.mxu0 0.0
      %701 = vmatpush1.msra.mxu0 0.0
      %702 = vmatprep.subr.mxu0 0.0
      %703 = vmatpush1.msra.mxu0 0.0
      %704 = vmatprep.subr.mxu0 0.0
      %705 = vmatpush1.msra.mxu0 0.0
      %706 = vmatprep.subr.mxu0 0.0
      %707 = vmatpush1.msra.mxu0 0.0
      %708 = vmatprep.subr.mxu0 0.0
      %709 = vmatpush1.msra.mxu0 0.0
      %710 = vmatprep.subr.mxu0 0.0
      %711 = vmatpush1.msra.mxu0 0.0
      %712 = vmatprep.subr.mxu0 0.0
      %713 = vmatpush1.msra.mxu0 0.0
      %714 = vmatprep.subr.mxu0 0.0
      %715 = vmatpush1.msra.mxu0 0.0
      %716 = vmatprep.mubr.f32.mxu0 0.0
      %717 = vmatmul.mubr.f32.gmra.mrb[0].mxu0 %v557
      %v718 = vpop.f32.mrb[0].mxu0
      %v719 = vadd.f32 0.0, %v718
      %v720 = vpop.f32.mrb[0].mxu0
      %v721 = vadd.f32 0.0, %v720
      %722 = vmatprep.mubr.f32.mxu0 0.0
      %723 = vmatmul.mubr.f32.gmra.mrb[0].mxu0 %v560
      %v724 = vpop.f32.mrb[0].mxu0
      %v725 = vadd.f32 0.0, %v724
      %v726 = vpop.f32.mrb[0].mxu0
      %v727 = vadd.f32 0.0, %v726
      %728 = vmatprep.mubr.f32.mxu0 0.0
      %729 = vmatmul.mubr.f32.gmra.mrb[0].mxu0 %v563
      %v730 = vpop.f32.mrb[0].mxu0
      %v731 = vadd.f32 0.0, %v730
      %v732 = vpop.f32.mrb[0].mxu0
      %v733 = vadd.f32 0.0, %v732
      %734 = vmatprep.mubr.f32.mxu0 0.0
      %735 = vmatmul.mubr.f32.gmra.mrb[0].mxu0 %v566
      %v736 = vpop.f32.mrb[0].mxu0
      %v737 = vadd.f32 0.0, %v736
      %v738 = vpop.f32.mrb[0].mxu0
      %v739 = vadd.f32 0.0, %v738
      %740 = vmatprep.mubr.f32.mxu0 0.0
      %741 = vmatmul.mubr.f32.gmra.mrb[0].mxu0 %v569
      %v742 = vpop.f32.mrb[0].mxu0
      %v743 = vadd.f32 0.0, %v742
      %v744 = vpop.f32.mrb[0].mxu0
      %v745 = vadd.f32 0.0, %v744
      %746 = vmatprep.mubr.f32.mxu0 0.0
      %747 = vmatmul.mubr.f32.gmra.mrb[0].mxu0 %v572
      %v748 = vpop.f32.mrb[0].mxu0
      %v749 = vadd.f32 0.0, %v748
      %v750 = vpop.f32.mrb[0].mxu0
      %v751 = vadd.f32 0.0, %v750
      %752 = vmatprep.mubr.f32.mxu0 0.0
      %753 = vmatmul.mubr.f32.gmra.mrb[0].mxu0 %v575
      %v754 = vpop.f32.mrb[0].mxu0
      %v755 = vadd.f32 0.0, %v754
      %v756 = vpop.f32.mrb[0].mxu0
      %v757 = vadd.f32 0.0, %v756
      %758 = vmatprep.mubr.f32.mxu0 0.0
      %759 = vmatmul.mubr.f32.gmra.mrb[0].mxu0 %v578
      %v760 = vpop.f32.mrb[0].mxu0
      %v761 = vadd.f32 0.0, %v760
      %v762 = vpop.f32.mrb[0].mxu0
      %v763 = vadd.f32 0.0, %v762
      %764 = vmatprep.mubr.f32.mxu0 0.0
      %765 = vmatmul.mubr.f32.gmra.mrb[0].mxu0 %v581
      %v766 = vpop.f32.mrb[0].mxu0
      %v767 = vadd.f32 0.0, %v766
      %v768 = vpop.f32.mrb[0].mxu0
      %v769 = vadd.f32 0.0, %v768
      %770 = vmatprep.mubr.f32.mxu0 0.0
      %771 = vmatmul.mubr.f32.gmra.mrb[0].mxu0 %v584
      %v772 = vpop.f32.mrb[0].mxu0
      %v773 = vadd.f32 0.0, %v772
      %v774 = vpop.f32.mrb[0].mxu0
      %v775 = vadd.f32 0.0, %v774
      %776 = vmatprep.mubr.f32.mxu0 0.0
      %777 = vmatmul.mubr.f32.gmra.mrb[0].mxu0 %v587
      %v778 = vpop.f32.mrb[0].mxu0
      %v779 = vadd.f32 0.0, %v778
      %v780 = vpop.f32.mrb[0].mxu0
      %v781 = vadd.f32 0.0, %v780
      %782 = vmatprep.mubr.f32.mxu0 0.0
      %783 = vmatmul.mubr.f32.gmra.mrb[0].mxu0 %v590
      %v784 = vpop.f32.mrb[0].mxu0
      %v785 = vadd.f32 0.0, %v784
      %v786 = vpop.f32.mrb[0].mxu0
      %v787 = vadd.f32 0.0, %v786
      %788 = vmatprep.mubr.f32.mxu0 0.0
      %789 = vmatmul.mubr.f32.gmra.mrb[0].mxu0 %v593
      %v790 = vpop.f32.mrb[0].mxu0
      %v791 = vadd.f32 0.0, %v790
      %v792 = vpop.f32.mrb[0].mxu0
      %v793 = vadd.f32 0.0, %v792
      %794 = vmatprep.mubr.f32.mxu0 0.0
      %795 = vmatmul.mubr.f32.gmra.mrb[0].mxu0 %v596
      %v796 = vpop.f32.mrb[0].mxu0
      %v797 = vadd.f32 0.0, %v796
      %v798 = vpop.f32.mrb[0].mxu0
      %v799 = vadd.f32 0.0, %v798
      %800 = vmatprep.mubr.f32.mxu0 0.0
      %801 = vmatmul.mubr.f32.gmra.mrb[0].mxu0 %v599
      %v802 = vpop.f32.mrb[0].mxu0
      %v803 = vadd.f32 0.0, %v802
      %v804 = vpop.f32.mrb[0].mxu0
      %v805 = vadd.f32 0.0, %v804
      %806 = vmatprep.mubr.f32.mxu0 0.0
      %807 = vmatmul.mubr.f32.gmra.mrb[0].mxu0 %v602
      %v808 = vpop.f32.mrb[0].mxu0
      %v809 = vadd.f32 0.0, %v808
      %v810 = vpop.f32.mrb[0].mxu0
      %v811 = vadd.f32 0.0, %v810
      %812 = vmatprep.mubr.f32.mxu0 0.0
      %813 = vmatmul.mubr.f32.gmra.mrb[0].mxu0 %v605
      %v814 = vpop.f32.mrb[0].mxu0
      %v815 = vadd.f32 0.0, %v814
      %v816 = vpop.f32.mrb[0].mxu0
      %v817 = vadd.f32 0.0, %v816
      %818 = vmatprep.mubr.f32.mxu0 0.0
      %819 = vmatmul.mubr.f32.gmra.mrb[0].mxu0 %v608
      %v820 = vpop.f32.mrb[0].mxu0
      %v821 = vadd.f32 0.0, %v820
      %v822 = vpop.f32.mrb[0].mxu0
      %v823 = vadd.f32 0.0, %v822
      %824 = vmatprep.mubr.f32.mxu0 0.0
      %825 = vmatmul.mubr.f32.gmra.mrb[0].mxu0 %v611
      %v826 = vpop.f32.mrb[0].mxu0
      %v827 = vadd.f32 0.0, %v826
      %v828 = vpop.f32.mrb[0].mxu0
      %v829 = vadd.f32 0.0, %v828
      %830 = vmatprep.mubr.f32.mxu0 0.0
      %831 = vmatmul.mubr.f32.gmra.mrb[0].mxu0 %v614
      %v832 = vpop.f32.mrb[0].mxu0
      %v833 = vadd.f32 0.0, %v832
      %v834 = vpop.f32.mrb[0].mxu0
      %v835 = vadd.f32 0.0, %v834
      %836 = vmatprep.mubr.f32.mxu0 0.0
      %837 = vmatmul.mubr.f32.gmra.mrb[0].mxu0 %v617
      %v838 = vpop.f32.mrb[0].mxu0
      %v839 = vadd.f32 0.0, %v838
      %v840 = vpop.f32.mrb[0].mxu0
      %v841 = vadd.f32 0.0, %v840
      %842 = vmatprep.mubr.f32.mxu0 0.0
      %843 = vmatmul.mubr.f32.gmra.mrb[0].mxu0 %v620
      %v844 = vpop.f32.mrb[0].mxu0
      %v845 = vadd.f32 0.0, %v844
      %v846 = vpop.f32.mrb[0].mxu0
      %v847 = vadd.f32 0.0, %v846
      %848 = vmatprep.mubr.f32.mxu0 0.0
      %849 = vmatmul.mubr.f32.gmra.mrb[0].mxu0 %v623
      %v850 = vpop.f32.mrb[0].mxu0
      %v851 = vadd.f32 0.0, %v850
      %v852 = vpop.f32.mrb[0].mxu0
      %v853 = vadd.f32 0.0, %v852
      %854 = vmatprep.mubr.f32.mxu0 0.0
      %855 = vmatmul.mubr.f32.gmra.mrb[0].mxu0 %v626
      %v856 = vpop.f32.mrb[0].mxu0
      %v857 = vadd.f32 0.0, %v856
      %v858 = vpop.f32.mrb[0].mxu0
      %v859 = vadd.f32 0.0, %v858
      %860 = vmatprep.mubr.f32.mxu0 0.0
      %861 = vmatmul.mubr.f32.gmra.mrb[0].mxu0 %v629
      %v862 = vpop.f32.mrb[0].mxu0
      %v863 = vadd.f32 0.0, %v862
      %v864 = vpop.f32.mrb[0].mxu0
      %v865 = vadd.f32 0.0, %v864
      %866 = vmatprep.mubr.f32.mxu0 0.0
      %867 = vmatmul.mubr.f32.gmra.mrb[0].mxu0 %v632
      %v868 = vpop.f32.mrb[0].mxu0
      %v869 = vadd.f32 0.0, %v868
      %v870 = vpop.f32.mrb[0].mxu0
      %v871 = vadd.f32 0.0, %v870
      %872 = vmatprep.mubr.f32.mxu0 0.0
      %873 = vmatmul.mubr.f32.gmra.mrb[0].mxu0 %v635
      %v874 = vpop.f32.mrb[0].mxu0
      %v875 = vadd.f32 0.0, %v874
      %v876 = vpop.f32.mrb[0].mxu0
      %v877 = vadd.f32 0.0, %v876
      %878 = vmatprep.mubr.f32.mxu0 0.0
      %879 = vmatmul.mubr.f32.gmra.mrb[0].mxu0 %v638
      %v880 = vpop.f32.mrb[0].mxu0
      %v881 = vadd.f32 0.0, %v880
      %v882 = vpop.f32.mrb[0].mxu0
      %v883 = vadd.f32 0.0, %v882
      %884 = vmatprep.mubr.f32.mxu0 0.0
      %885 = vmatmul.mubr.f32.gmra.mrb[0].mxu0 %v641
      %v886 = vpop.f32.mrb[0].mxu0
      %v887 = vadd.f32 0.0, %v886
      %v888 = vpop.f32.mrb[0].mxu0
      %v889 = vadd.f32 0.0, %v888
      %890 = vmatprep.mubr.f32.mxu0 0.0
      %891 = vmatmul.mubr.f32.gmra.mrb[0].mxu0 %v644
      %v892 = vpop.f32.mrb[0].mxu0
      %v893 = vadd.f32 0.0, %v892
      %v894 = vpop.f32.mrb[0].mxu0
      %v895 = vadd.f32 0.0, %v894
      %896 = vmatprep.mubr.f32.mxu0 0.0
      %897 = vmatmul.mubr.f32.gmra.mrb[0].mxu0 %v647
      %v898 = vpop.f32.mrb[0].mxu0
      %v899 = vadd.f32 0.0, %v898
      %v900 = vpop.f32.mrb[0].mxu0
      %v901 = vadd.f32 0.0, %v900
      %902 = vmatprep.mubr.f32.mxu0 0.0
      %903 = vmatmul.mubr.f32.gmra.mrb[0].mxu0 %v650
      %v904 = vpop.f32.mrb[0].mxu0
      %v905 = vadd.f32 0.0, %v904
      %v906 = vpop.f32.mrb[0].mxu0
      %v907 = vadd.f32 0.0, %v906
      %908 = vdwg.mxu0
      %909 = vxpose.xlu0.b32.start [1/16] %v427, 128
      %910 = vxpose.xlu0.b32.cont [2/16] 0.0, 128
      %911 = vxpose.xlu0.b32.cont [3/16] 0.0, 128
      %912 = vxpose.xlu0.b32.cont [4/16] 0.0, 128
      %913 = vxpose.xlu0.b32.cont [5/16] 0.0, 128
      %914 = vxpose.xlu0.b32.cont [6/16] 0.0, 128
      %915 = vxpose.xlu0.b32.cont [7/16] 0.0, 128
      %916 = vxpose.xlu0.b32.cont [8/16] 0.0, 128
      %917 = vxpose.xlu0.b32.cont [9/16] 0.0, 128
      %918 = vxpose.xlu0.b32.cont [10/16] 0.0, 128
      %919 = vxpose.xlu0.b32.cont [11/16] 0.0, 128
      %920 = vxpose.xlu0.b32.cont [12/16] 0.0, 128
      %921 = vxpose.xlu0.b32.cont [13/16] 0.0, 128
      %922 = vxpose.xlu0.b32.cont [14/16] 0.0, 128
      %923 = vxpose.xlu0.b32.cont [15/16] 0.0, 128
      %924 = vxpose.xlu0.b32.end [16/16] 0.0, 128
      %v925 = vpop.trf.xlu0
      %v926 = vpop.trf.xlu0
      %v927 = vpop.trf.xlu0
      %v928 = vpop.trf.xlu0
      %v929 = vpop.trf.xlu0
      %v930 = vpop.trf.xlu0
      %v931 = vpop.trf.xlu0
      %v932 = vpop.trf.xlu0
      %v933 = vpop.trf.xlu0
      %v934 = vpop.trf.xlu0
      %v935 = vpop.trf.xlu0
      %v936 = vpop.trf.xlu0
      %v937 = vpop.trf.xlu0
      %v938 = vpop.trf.xlu0
      %v939 = vpop.trf.xlu0
      %v940 = vpop.trf.xlu0
      %941 = vxpose.xlu0.b32.start [1/16] %v429, 128
      %942 = vxpose.xlu0.b32.cont [2/16] 0.0, 128
      %943 = vxpose.xlu0.b32.cont [3/16] 0.0, 128
      %944 = vxpose.xlu0.b32.cont [4/16] 0.0, 128
      %945 = vxpose.xlu0.b32.cont [5/16] 0.0, 128
      %946 = vxpose.xlu0.b32.cont [6/16] 0.0, 128
      %947 = vxpose.xlu0.b32.cont [7/16] 0.0, 128
      %948 = vxpose.xlu0.b32.cont [8/16] 0.0, 128
      %949 = vxpose.xlu0.b32.cont [9/16] 0.0, 128
      %950 = vxpose.xlu0.b32.cont [10/16] 0.0, 128
      %951 = vxpose.xlu0.b32.cont [11/16] 0.0, 128
      %952 = vxpose.xlu0.b32.cont [12/16] 0.0, 128
      %953 = vxpose.xlu0.b32.cont [13/16] 0.0, 128
      %954 = vxpose.xlu0.b32.cont [14/16] 0.0, 128
      %955 = vxpose.xlu0.b32.cont [15/16] 0.0, 128
      %956 = vxpose.xlu0.b32.end [16/16] 0.0, 128
      %v957 = vpop.trf.xlu0
      %v958 = vpop.trf.xlu0
      %v959 = vpop.trf.xlu0
      %v960 = vpop.trf.xlu0
      %v961 = vpop.trf.xlu0
      %v962 = vpop.trf.xlu0
      %v963 = vpop.trf.xlu0
      %v964 = vpop.trf.xlu0
      %v965 = vpop.trf.xlu0
      %v966 = vpop.trf.xlu0
      %v967 = vpop.trf.xlu0
      %v968 = vpop.trf.xlu0
      %v969 = vpop.trf.xlu0
      %v970 = vpop.trf.xlu0
      %v971 = vpop.trf.xlu0
      %v972 = vpop.trf.xlu0
      %v974 = vsel %vm555, %v925, 0
      %v977 = vsel %vm555, %v926, 0
      %v980 = vsel %vm555, %v927, 0
      %v983 = vsel %vm555, %v928, 0
      %v986 = vsel %vm555, %v929, 0
      %v989 = vsel %vm555, %v930, 0
      %v992 = vsel %vm555, %v931, 0
      %v995 = vsel %vm555, %v932, 0
      %v998 = vsel %vm555, %v933, 0
      %v1001 = vsel %vm555, %v934, 0
      %v1004 = vsel %vm555, %v935, 0
      %v1007 = vsel %vm555, %v936, 0
      %v1010 = vsel %vm555, %v937, 0
      %v1013 = vsel %vm555, %v938, 0
      %v1016 = vsel %vm555, %v939, 0
      %v1019 = vsel %vm555, %v940, 0
      %v1022 = vsel %vm555, %v957, 0
      %v1025 = vsel %vm555, %v958, 0
      %v1028 = vsel %vm555, %v959, 0
      %v1031 = vsel %vm555, %v960, 0
      %v1034 = vsel %vm555, %v961, 0
      %v1037 = vsel %vm555, %v962, 0
      %v1040 = vsel %vm555, %v963, 0
      %v1043 = vsel %vm555, %v964, 0
      %v1046 = vsel %vm555, %v965, 0
      %v1049 = vsel %vm555, %v966, 0
      %v1052 = vsel %vm555, %v967, 0
      %v1055 = vsel %vm555, %v968, 0
      %v1058 = vsel %vm555, %v969, 0
      %v1061 = vsel %vm555, %v970, 0
      %v1064 = vsel %vm555, %v971, 0
      %v1067 = vsel %vm555, %v972, 0
      %1069 = vmatprep.subr.mxu0 %v453
      %1070 = vmatpush1.msra.mxu0 %v451
      %1071 = vmatprep.subr.mxu0 0.0
      %1072 = vmatpush1.msra.mxu0 0.0
      %1073 = vmatprep.subr.mxu0 0.0
      %1074 = vmatpush1.msra.mxu0 0.0
      %1075 = vmatprep.subr.mxu0 0.0
      %1076 = vmatpush1.msra.mxu0 0.0
      %1077 = vmatprep.subr.mxu0 0.0
      %1078 = vmatpush1.msra.mxu0 0.0
      %1079 = vmatprep.subr.mxu0 0.0
      %1080 = vmatpush1.msra.mxu0 0.0
      %1081 = vmatprep.subr.mxu0 0.0
      %1082 = vmatpush1.msra.mxu0 0.0
      %1083 = vmatprep.subr.mxu0 0.0
      %1084 = vmatpush1.msra.mxu0 0.0
      %1085 = vmatprep.subr.mxu0 0.0
      %1086 = vmatpush1.msra.mxu0 0.0
      %1087 = vmatprep.subr.mxu0 0.0
      %1088 = vmatpush1.msra.mxu0 0.0
      %1089 = vmatprep.subr.mxu0 0.0
      %1090 = vmatpush1.msra.mxu0 0.0
      %1091 = vmatprep.subr.mxu0 0.0
      %1092 = vmatpush1.msra.mxu0 0.0
      %1093 = vmatprep.subr.mxu0 0.0
      %1094 = vmatpush1.msra.mxu0 0.0
      %1095 = vmatprep.subr.mxu0 0.0
      %1096 = vmatpush1.msra.mxu0 0.0
      %1097 = vmatprep.subr.mxu0 0.0
      %1098 = vmatpush1.msra.mxu0 0.0
      %1099 = vmatprep.subr.mxu0 0.0
      %1100 = vmatpush1.msra.mxu0 0.0
      %1101 = vmatprep.subr.mxu0 0.0
      %1102 = vmatpush1.msra.mxu0 0.0
      %1103 = vmatprep.subr.mxu0 0.0
      %1104 = vmatpush1.msra.mxu0 0.0
      %1105 = vmatprep.subr.mxu0 0.0
      %1106 = vmatpush1.msra.mxu0 0.0
      %1107 = vmatprep.subr.mxu0 0.0
      %1108 = vmatpush1.msra.mxu0 0.0
      %1109 = vmatprep.subr.mxu0 0.0
      %1110 = vmatpush1.msra.mxu0 0.0
      %1111 = vmatprep.subr.mxu0 0.0
      %1112 = vmatpush1.msra.mxu0 0.0
      %1113 = vmatprep.subr.mxu0 0.0
      %1114 = vmatpush1.msra.mxu0 0.0
      %1115 = vmatprep.subr.mxu0 0.0
      %1116 = vmatpush1.msra.mxu0 0.0
      %1117 = vmatprep.subr.mxu0 0.0
      %1118 = vmatpush1.msra.mxu0 0.0
      %1119 = vmatprep.subr.mxu0 0.0
      %1120 = vmatpush1.msra.mxu0 0.0
      %1121 = vmatprep.subr.mxu0 0.0
      %1122 = vmatpush1.msra.mxu0 0.0
      %1123 = vmatprep.subr.mxu0 0.0
      %1124 = vmatpush1.msra.mxu0 0.0
      %1125 = vmatprep.subr.mxu0 0.0
      %1126 = vmatpush1.msra.mxu0 0.0
      %1127 = vmatprep.subr.mxu0 0.0
      %1128 = vmatpush1.msra.mxu0 0.0
      %1129 = vmatprep.subr.mxu0 0.0
      %1130 = vmatpush1.msra.mxu0 0.0
      %1131 = vmatprep.subr.mxu0 0.0
      %1132 = vmatpush1.msra.mxu0 0.0
      %1133 = vmatprep.mubr.f32.mxu0 0.0
      %1134 = vmatmul.mubr.f32.gmra.mrb[0].mxu0 %v974
      %v1135 = vpop.f32.mrb[0].mxu0
      %v1136 = vadd.f32 0.0, %v1135
      %v1137 = vpop.f32.mrb[0].mxu0
      %v1138 = vadd.f32 0.0, %v1137
      %1139 = vmatprep.mubr.f32.mxu0 0.0
      %1140 = vmatmul.mubr.f32.gmra.mrb[0].mxu0 %v977
      %v1141 = vpop.f32.mrb[0].mxu0
      %v1142 = vadd.f32 0.0, %v1141
      %v1143 = vpop.f32.mrb[0].mxu0
      %v1144 = vadd.f32 0.0, %v1143
      %1145 = vmatprep.mubr.f32.mxu0 0.0
      %1146 = vmatmul.mubr.f32.gmra.mrb[0].mxu0 %v980
      %v1147 = vpop.f32.mrb[0].mxu0
      %v1148 = vadd.f32 0.0, %v1147
      %v1149 = vpop.f32.mrb[0].mxu0
      %v1150 = vadd.f32 0.0, %v1149
      %1151 = vmatprep.mubr.f32.mxu0 0.0
      %1152 = vmatmul.mubr.f32.gmra.mrb[0].mxu0 %v983
      %v1153 = vpop.f32.mrb[0].mxu0
      %v1154 = vadd.f32 0.0, %v1153
      %v1155 = vpop.f32.mrb[0].mxu0
      %v1156 = vadd.f32 0.0, %v1155
      %1157 = vmatprep.mubr.f32.mxu0 0.0
      %1158 = vmatmul.mubr.f32.gmra.mrb[0].mxu0 %v986
      %v1159 = vpop.f32.mrb[0].mxu0
      %v1160 = vadd.f32 0.0, %v1159
      %v1161 = vpop.f32.mrb[0].mxu0
      %v1162 = vadd.f32 0.0, %v1161
      %1163 = vmatprep.mubr.f32.mxu0 0.0
      %1164 = vmatmul.mubr.f32.gmra.mrb[0].mxu0 %v989
      %v1165 = vpop.f32.mrb[0].mxu0
      %v1166 = vadd.f32 0.0, %v1165
      %v1167 = vpop.f32.mrb[0].mxu0
      %v1168 = vadd.f32 0.0, %v1167
      %1169 = vmatprep.mubr.f32.mxu0 0.0
      %1170 = vmatmul.mubr.f32.gmra.mrb[0].mxu0 %v992
      %v1171 = vpop.f32.mrb[0].mxu0
      %v1172 = vadd.f32 0.0, %v1171
      %v1173 = vpop.f32.mrb[0].mxu0
      %v1174 = vadd.f32 0.0, %v1173
      %1175 = vmatprep.mubr.f32.mxu0 0.0
      %1176 = vmatmul.mubr.f32.gmra.mrb[0].mxu0 %v995
      %v1177 = vpop.f32.mrb[0].mxu0
      %v1178 = vadd.f32 0.0, %v1177
      %v1179 = vpop.f32.mrb[0].mxu0
      %v1180 = vadd.f32 0.0, %v1179
      %1181 = vmatprep.mubr.f32.mxu0 0.0
      %1182 = vmatmul.mubr.f32.gmra.mrb[0].mxu0 %v998
      %v1183 = vpop.f32.mrb[0].mxu0
      %v1184 = vadd.f32 0.0, %v1183
      %v1185 = vpop.f32.mrb[0].mxu0
      %v1186 = vadd.f32 0.0, %v1185
      %1187 = vmatprep.mubr.f32.mxu0 0.0
      %1188 = vmatmul.mubr.f32.gmra.mrb[0].mxu0 %v1001
      %v1189 = vpop.f32.mrb[0].mxu0
      %v1190 = vadd.f32 0.0, %v1189
      %v1191 = vpop.f32.mrb[0].mxu0
      %v1192 = vadd.f32 0.0, %v1191
      %1193 = vmatprep.mubr.f32.mxu0 0.0
      %1194 = vmatmul.mubr.f32.gmra.mrb[0].mxu0 %v1004
      %v1195 = vpop.f32.mrb[0].mxu0
      %v1196 = vadd.f32 0.0, %v1195
      %v1197 = vpop.f32.mrb[0].mxu0
      %v1198 = vadd.f32 0.0, %v1197
      %1199 = vmatprep.mubr.f32.mxu0 0.0
      %1200 = vmatmul.mubr.f32.gmra.mrb[0].mxu0 %v1007
      %v1201 = vpop.f32.mrb[0].mxu0
      %v1202 = vadd.f32 0.0, %v1201
      %v1203 = vpop.f32.mrb[0].mxu0
      %v1204 = vadd.f32 0.0, %v1203
      %1205 = vmatprep.mubr.f32.mxu0 0.0
      %1206 = vmatmul.mubr.f32.gmra.mrb[0].mxu0 %v1010
      %v1207 = vpop.f32.mrb[0].mxu0
      %v1208 = vadd.f32 0.0, %v1207
      %v1209 = vpop.f32.mrb[0].mxu0
      %v1210 = vadd.f32 0.0, %v1209
      %1211 = vmatprep.mubr.f32.mxu0 0.0
      %1212 = vmatmul.mubr.f32.gmra.mrb[0].mxu0 %v1013
      %v1213 = vpop.f32.mrb[0].mxu0
      %v1214 = vadd.f32 0.0, %v1213
      %v1215 = vpop.f32.mrb[0].mxu0
      %v1216 = vadd.f32 0.0, %v1215
      %1217 = vmatprep.mubr.f32.mxu0 0.0
      %1218 = vmatmul.mubr.f32.gmra.mrb[0].mxu0 %v1016
      %v1219 = vpop.f32.mrb[0].mxu0
      %v1220 = vadd.f32 0.0, %v1219
      %v1221 = vpop.f32.mrb[0].mxu0
      %v1222 = vadd.f32 0.0, %v1221
      %1223 = vmatprep.mubr.f32.mxu0 0.0
      %1224 = vmatmul.mubr.f32.gmra.mrb[0].mxu0 %v1019
      %v1225 = vpop.f32.mrb[0].mxu0
      %v1226 = vadd.f32 0.0, %v1225
      %v1227 = vpop.f32.mrb[0].mxu0
      %v1228 = vadd.f32 0.0, %v1227
      %1229 = vmatprep.mubr.f32.mxu0 0.0
      %1230 = vmatmul.mubr.f32.gmra.mrb[0].mxu0 %v1022
      %v1231 = vpop.f32.mrb[0].mxu0
      %v1232 = vadd.f32 0.0, %v1231
      %v1233 = vpop.f32.mrb[0].mxu0
      %v1234 = vadd.f32 0.0, %v1233
      %1235 = vmatprep.mubr.f32.mxu0 0.0
      %1236 = vmatmul.mubr.f32.gmra.mrb[0].mxu0 %v1025
      %v1237 = vpop.f32.mrb[0].mxu0
      %v1238 = vadd.f32 0.0, %v1237
      %v1239 = vpop.f32.mrb[0].mxu0
      %v1240 = vadd.f32 0.0, %v1239
      %1241 = vmatprep.mubr.f32.mxu0 0.0
      %1242 = vmatmul.mubr.f32.gmra.mrb[0].mxu0 %v1028
      %v1243 = vpop.f32.mrb[0].mxu0
      %v1244 = vadd.f32 0.0, %v1243
      %v1245 = vpop.f32.mrb[0].mxu0
      %v1246 = vadd.f32 0.0, %v1245
      %1247 = vmatprep.mubr.f32.mxu0 0.0
      %1248 = vmatmul.mubr.f32.gmra.mrb[0].mxu0 %v1031
      %v1249 = vpop.f32.mrb[0].mxu0
      %v1250 = vadd.f32 0.0, %v1249
      %v1251 = vpop.f32.mrb[0].mxu0
      %v1252 = vadd.f32 0.0, %v1251
      %1253 = vmatprep.mubr.f32.mxu0 0.0
      %1254 = vmatmul.mubr.f32.gmra.mrb[0].mxu0 %v1034
      %v1255 = vpop.f32.mrb[0].mxu0
      %v1256 = vadd.f32 0.0, %v1255
      %v1257 = vpop.f32.mrb[0].mxu0
      %v1258 = vadd.f32 0.0, %v1257
      %1259 = vmatprep.mubr.f32.mxu0 0.0
      %1260 = vmatmul.mubr.f32.gmra.mrb[0].mxu0 %v1037
      %v1261 = vpop.f32.mrb[0].mxu0
      %v1262 = vadd.f32 0.0, %v1261
      %v1263 = vpop.f32.mrb[0].mxu0
      %v1264 = vadd.f32 0.0, %v1263
      %1265 = vmatprep.mubr.f32.mxu0 0.0
      %1266 = vmatmul.mubr.f32.gmra.mrb[0].mxu0 %v1040
      %v1267 = vpop.f32.mrb[0].mxu0
      %v1268 = vadd.f32 0.0, %v1267
      %v1269 = vpop.f32.mrb[0].mxu0
      %v1270 = vadd.f32 0.0, %v1269
      %1271 = vmatprep.mubr.f32.mxu0 0.0
      %1272 = vmatmul.mubr.f32.gmra.mrb[0].mxu0 %v1043
      %v1273 = vpop.f32.mrb[0].mxu0
      %v1274 = vadd.f32 0.0, %v1273
      %v1275 = vpop.f32.mrb[0].mxu0
      %v1276 = vadd.f32 0.0, %v1275
      %1277 = vmatprep.mubr.f32.mxu0 0.0
      %1278 = vmatmul.mubr.f32.gmra.mrb[0].mxu0 %v1046
      %v1279 = vpop.f32.mrb[0].mxu0
      %v1280 = vadd.f32 0.0, %v1279
      %v1281 = vpop.f32.mrb[0].mxu0
      %v1282 = vadd.f32 0.0, %v1281
      %1283 = vmatprep.mubr.f32.mxu0 0.0
      %1284 = vmatmul.mubr.f32.gmra.mrb[0].mxu0 %v1049
      %v1285 = vpop.f32.mrb[0].mxu0
      %v1286 = vadd.f32 0.0, %v1285
      %v1287 = vpop.f32.mrb[0].mxu0
      %v1288 = vadd.f32 0.0, %v1287
      %1289 = vmatprep.mubr.f32.mxu0 0.0
      %1290 = vmatmul.mubr.f32.gmra.mrb[0].mxu0 %v1052
      %v1291 = vpop.f32.mrb[0].mxu0
      %v1292 = vadd.f32 0.0, %v1291
      %v1293 = vpop.f32.mrb[0].mxu0
      %v1294 = vadd.f32 0.0, %v1293
      %1295 = vmatprep.mubr.f32.mxu0 0.0
      %1296 = vmatmul.mubr.f32.gmra.mrb[0].mxu0 %v1055
      %v1297 = vpop.f32.mrb[0].mxu0
      %v1298 = vadd.f32 0.0, %v1297
      %v1299 = vpop.f32.mrb[0].mxu0
      %v1300 = vadd.f32 0.0, %v1299
      %1301 = vmatprep.mubr.f32.mxu0 0.0
      %1302 = vmatmul.mubr.f32.gmra.mrb[0].mxu0 %v1058
      %v1303 = vpop.f32.mrb[0].mxu0
      %v1304 = vadd.f32 0.0, %v1303
      %v1305 = vpop.f32.mrb[0].mxu0
      %v1306 = vadd.f32 0.0, %v1305
      %1307 = vmatprep.mubr.f32.mxu0 0.0
      %1308 = vmatmul.mubr.f32.gmra.mrb[0].mxu0 %v1061
      %v1309 = vpop.f32.mrb[0].mxu0
      %v1310 = vadd.f32 0.0, %v1309
      %v1311 = vpop.f32.mrb[0].mxu0
      %v1312 = vadd.f32 0.0, %v1311
      %1313 = vmatprep.mubr.f32.mxu0 0.0
      %1314 = vmatmul.mubr.f32.gmra.mrb[0].mxu0 %v1064
      %v1315 = vpop.f32.mrb[0].mxu0
      %v1316 = vadd.f32 0.0, %v1315
      %v1317 = vpop.f32.mrb[0].mxu0
      %v1318 = vadd.f32 0.0, %v1317
      %1319 = vmatprep.mubr.f32.mxu0 0.0
      %1320 = vmatmul.mubr.f32.gmra.mrb[0].mxu0 %v1067
      %v1321 = vpop.f32.mrb[0].mxu0
      %v1322 = vadd.f32 0.0, %v1321
      %v1323 = vpop.f32.mrb[0].mxu0
      %v1324 = vadd.f32 0.0, %v1323
      %1325 = vdwg.mxu0
      %1326 = vxpose.xlu0.b32.start [1/16] %v433, 128
      %1327 = vxpose.xlu0.b32.cont [2/16] 0.0, 128
      %1328 = vxpose.xlu0.b32.cont [3/16] 0.0, 128
      %1329 = vxpose.xlu0.b32.cont [4/16] 0.0, 128
      %1330 = vxpose.xlu0.b32.cont [5/16] 0.0, 128
      %1331 = vxpose.xlu0.b32.cont [6/16] 0.0, 128
      %1332 = vxpose.xlu0.b32.cont [7/16] 0.0, 128
      %1333 = vxpose.xlu0.b32.cont [8/16] 0.0, 128
      %1334 = vxpose.xlu0.b32.cont [9/16] 0.0, 128
      %1335 = vxpose.xlu0.b32.cont [10/16] 0.0, 128
      %1336 = vxpose.xlu0.b32.cont [11/16] 0.0, 128
      %1337 = vxpose.xlu0.b32.cont [12/16] 0.0, 128
      %1338 = vxpose.xlu0.b32.cont [13/16] 0.0, 128
      %1339 = vxpose.xlu0.b32.cont [14/16] 0.0, 128
      %1340 = vxpose.xlu0.b32.cont [15/16] 0.0, 128
      %1341 = vxpose.xlu0.b32.end [16/16] 0.0, 128
      %v1342 = vpop.trf.xlu0
      %v1343 = vpop.trf.xlu0
      %v1344 = vpop.trf.xlu0
      %v1345 = vpop.trf.xlu0
      %v1346 = vpop.trf.xlu0
      %v1347 = vpop.trf.xlu0
      %v1348 = vpop.trf.xlu0
      %v1349 = vpop.trf.xlu0
      %v1350 = vpop.trf.xlu0
      %v1351 = vpop.trf.xlu0
      %v1352 = vpop.trf.xlu0
      %v1353 = vpop.trf.xlu0
      %v1354 = vpop.trf.xlu0
      %v1355 = vpop.trf.xlu0
      %v1356 = vpop.trf.xlu0
      %v1357 = vpop.trf.xlu0
      %1358 = vxpose.xlu0.b32.start [1/16] %v435, 128
      %1359 = vxpose.xlu0.b32.cont [2/16] 0.0, 128
      %1360 = vxpose.xlu0.b32.cont [3/16] 0.0, 128
      %1361 = vxpose.xlu0.b32.cont [4/16] 0.0, 128
      %1362 = vxpose.xlu0.b32.cont [5/16] 0.0, 128
      %1363 = vxpose.xlu0.b32.cont [6/16] 0.0, 128
      %1364 = vxpose.xlu0.b32.cont [7/16] 0.0, 128
      %1365 = vxpose.xlu0.b32.cont [8/16] 0.0, 128
      %1366 = vxpose.xlu0.b32.cont [9/16] 0.0, 128
      %1367 = vxpose.xlu0.b32.cont [10/16] 0.0, 128
      %1368 = vxpose.xlu0.b32.cont [11/16] 0.0, 128
      %1369 = vxpose.xlu0.b32.cont [12/16] 0.0, 128
      %1370 = vxpose.xlu0.b32.cont [13/16] 0.0, 128
      %1371 = vxpose.xlu0.b32.cont [14/16] 0.0, 128
      %1372 = vxpose.xlu0.b32.cont [15/16] 0.0, 128
      %1373 = vxpose.xlu0.b32.end [16/16] 0.0, 128
      %v1374 = vpop.trf.xlu0
      %v1375 = vpop.trf.xlu0
      %v1376 = vpop.trf.xlu0
      %v1377 = vpop.trf.xlu0
      %v1378 = vpop.trf.xlu0
      %v1379 = vpop.trf.xlu0
      %v1380 = vpop.trf.xlu0
      %v1381 = vpop.trf.xlu0
      %v1382 = vpop.trf.xlu0
      %v1383 = vpop.trf.xlu0
      %v1384 = vpop.trf.xlu0
      %v1385 = vpop.trf.xlu0
      %v1386 = vpop.trf.xlu0
      %v1387 = vpop.trf.xlu0
      %v1388 = vpop.trf.xlu0
      %v1389 = vpop.trf.xlu0
      %v1391 = vsel %vm555, %v1342, 0
      %v1394 = vsel %vm555, %v1343, 0
      %v1397 = vsel %vm555, %v1344, 0
      %v1400 = vsel %vm555, %v1345, 0
      %v1403 = vsel %vm555, %v1346, 0
      %v1406 = vsel %vm555, %v1347, 0
      %v1409 = vsel %vm555, %v1348, 0
      %v1412 = vsel %vm555, %v1349, 0
      %v1415 = vsel %vm555, %v1350, 0
      %v1418 = vsel %vm555, %v1351, 0
      %v1421 = vsel %vm555, %v1352, 0
      %v1424 = vsel %vm555, %v1353, 0
      %v1427 = vsel %vm555, %v1354, 0
      %v1430 = vsel %vm555, %v1355, 0
      %v1433 = vsel %vm555, %v1356, 0
      %v1436 = vsel %vm555, %v1357, 0
      %v1439 = vsel %vm555, %v1374, 0
      %v1442 = vsel %vm555, %v1375, 0
      %v1445 = vsel %vm555, %v1376, 0
      %v1448 = vsel %vm555, %v1377, 0
      %v1451 = vsel %vm555, %v1378, 0
      %v1454 = vsel %vm555, %v1379, 0
      %v1457 = vsel %vm555, %v1380, 0
      %v1460 = vsel %vm555, %v1381, 0
      %v1463 = vsel %vm555, %v1382, 0
      %v1466 = vsel %vm555, %v1383, 0
      %v1469 = vsel %vm555, %v1384, 0
      %v1472 = vsel %vm555, %v1385, 0
      %v1475 = vsel %vm555, %v1386, 0
      %v1478 = vsel %vm555, %v1387, 0
      %v1481 = vsel %vm555, %v1388, 0
      %v1484 = vsel %vm555, %v1389, 0
      %1486 = vmatprep.subr.mxu0 %v459
      %1487 = vmatpush1.msra.mxu0 %v457
      %1488 = vmatprep.subr.mxu0 0.0
      %1489 = vmatpush1.msra.mxu0 0.0
      %1490 = vmatprep.subr.mxu0 0.0
      %1491 = vmatpush1.msra.mxu0 0.0
      %1492 = vmatprep.subr.mxu0 0.0
      %1493 = vmatpush1.msra.mxu0 0.0
      %1494 = vmatprep.subr.mxu0 0.0
      %1495 = vmatpush1.msra.mxu0 0.0
      %1496 = vmatprep.subr.mxu0 0.0
      %1497 = vmatpush1.msra.mxu0 0.0
      %1498 = vmatprep.subr.mxu0 0.0
      %1499 = vmatpush1.msra.mxu0 0.0
      %1500 = vmatprep.subr.mxu0 0.0
      %1501 = vmatpush1.msra.mxu0 0.0
      %1502 = vmatprep.subr.mxu0 0.0
      %1503 = vmatpush1.msra.mxu0 0.0
      %1504 = vmatprep.subr.mxu0 0.0
      %1505 = vmatpush1.msra.mxu0 0.0
      %1506 = vmatprep.subr.mxu0 0.0
      %1507 = vmatpush1.msra.mxu0 0.0
      %1508 = vmatprep.subr.mxu0 0.0
      %1509 = vmatpush1.msra.mxu0 0.0
      %1510 = vmatprep.subr.mxu0 0.0
      %1511 = vmatpush1.msra.mxu0 0.0
      %1512 = vmatprep.subr.mxu0 0.0
      %1513 = vmatpush1.msra.mxu0 0.0
      %1514 = vmatprep.subr.mxu0 0.0
      %1515 = vmatpush1.msra.mxu0 0.0
      %1516 = vmatprep.subr.mxu0 0.0
      %1517 = vmatpush1.msra.mxu0 0.0
      %1518 = vmatprep.subr.mxu0 0.0
      %1519 = vmatpush1.msra.mxu0 0.0
      %1520 = vmatprep.subr.mxu0 0.0
      %1521 = vmatpush1.msra.mxu0 0.0
      %1522 = vmatprep.subr.mxu0 0.0
      %1523 = vmatpush1.msra.mxu0 0.0
      %1524 = vmatprep.subr.mxu0 0.0
      %1525 = vmatpush1.msra.mxu0 0.0
      %1526 = vmatprep.subr.mxu0 0.0
      %1527 = vmatpush1.msra.mxu0 0.0
      %1528 = vmatprep.subr.mxu0 0.0
      %1529 = vmatpush1.msra.mxu0 0.0
      %1530 = vmatprep.subr.mxu0 0.0
      %1531 = vmatpush1.msra.mxu0 0.0
      %1532 = vmatprep.subr.mxu0 0.0
      %1533 = vmatpush1.msra.mxu0 0.0
      %1534 = vmatprep.subr.mxu0 0.0
      %1535 = vmatpush1.msra.mxu0 0.0
      %1536 = vmatprep.subr.mxu0 0.0
      %1537 = vmatpush1.msra.mxu0 0.0
      %1538 = vmatprep.subr.mxu0 0.0
      %1539 = vmatpush1.msra.mxu0 0.0
      %1540 = vmatprep.subr.mxu0 0.0
      %1541 = vmatpush1.msra.mxu0 0.0
      %1542 = vmatprep.subr.mxu0 0.0
      %1543 = vmatpush1.msra.mxu0 0.0
      %1544 = vmatprep.subr.mxu0 0.0
      %1545 = vmatpush1.msra.mxu0 0.0
      %1546 = vmatprep.subr.mxu0 0.0
      %1547 = vmatpush1.msra.mxu0 0.0
      %1548 = vmatprep.subr.mxu0 0.0
      %1549 = vmatpush1.msra.mxu0 0.0
      %1550 = vmatprep.mubr.f32.mxu0 0.0
      %1551 = vmatmul.mubr.f32.gmra.mrb[0].mxu0 %v1391
      %v1552 = vpop.f32.mrb[0].mxu0
      %v1553 = vadd.f32 0.0, %v1552
      %v1554 = vpop.f32.mrb[0].mxu0
      %v1555 = vadd.f32 0.0, %v1554
      %1556 = vmatprep.mubr.f32.mxu0 0.0
      %1557 = vmatmul.mubr.f32.gmra.mrb[0].mxu0 %v1394
      %v1558 = vpop.f32.mrb[0].mxu0
      %v1559 = vadd.f32 0.0, %v1558
      %v1560 = vpop.f32.mrb[0].mxu0
      %v1561 = vadd.f32 0.0, %v1560
      %1562 = vmatprep.mubr.f32.mxu0 0.0
      %1563 = vmatmul.mubr.f32.gmra.mrb[0].mxu0 %v1397
      %v1564 = vpop.f32.mrb[0].mxu0
      %v1565 = vadd.f32 0.0, %v1564
      %v1566 = vpop.f32.mrb[0].mxu0
      %v1567 = vadd.f32 0.0, %v1566
      %1568 = vmatprep.mubr.f32.mxu0 0.0
      %1569 = vmatmul.mubr.f32.gmra.mrb[0].mxu0 %v1400
      %v1570 = vpop.f32.mrb[0].mxu0
      %v1571 = vadd.f32 0.0, %v1570
      %v1572 = vpop.f32.mrb[0].mxu0
      %v1573 = vadd.f32 0.0, %v1572
      %1574 = vmatprep.mubr.f32.mxu0 0.0
      %1575 = vmatmul.mubr.f32.gmra.mrb[0].mxu0 %v1403
      %v1576 = vpop.f32.mrb[0].mxu0
      %v1577 = vadd.f32 0.0, %v1576
      %v1578 = vpop.f32.mrb[0].mxu0
      %v1579 = vadd.f32 0.0, %v1578
      %1580 = vmatprep.mubr.f32.mxu0 0.0
      %1581 = vmatmul.mubr.f32.gmra.mrb[0].mxu0 %v1406
      %v1582 = vpop.f32.mrb[0].mxu0
      %v1583 = vadd.f32 0.0, %v1582
      %v1584 = vpop.f32.mrb[0].mxu0
      %v1585 = vadd.f32 0.0, %v1584
      %1586 = vmatprep.mubr.f32.mxu0 0.0
      %1587 = vmatmul.mubr.f32.gmra.mrb[0].mxu0 %v1409
      %v1588 = vpop.f32.mrb[0].mxu0
      %v1589 = vadd.f32 0.0, %v1588
      %v1590 = vpop.f32.mrb[0].mxu0
      %v1591 = vadd.f32 0.0, %v1590
      %1592 = vmatprep.mubr.f32.mxu0 0.0
      %1593 = vmatmul.mubr.f32.gmra.mrb[0].mxu0 %v1412
      %v1594 = vpop.f32.mrb[0].mxu0
      %v1595 = vadd.f32 0.0, %v1594
      %v1596 = vpop.f32.mrb[0].mxu0
      %v1597 = vadd.f32 0.0, %v1596
      %1598 = vmatprep.mubr.f32.mxu0 0.0
      %1599 = vmatmul.mubr.f32.gmra.mrb[0].mxu0 %v1415
      %v1600 = vpop.f32.mrb[0].mxu0
      %v1601 = vadd.f32 0.0, %v1600
      %v1602 = vpop.f32.mrb[0].mxu0
      %v1603 = vadd.f32 0.0, %v1602
      %1604 = vmatprep.mubr.f32.mxu0 0.0
      %1605 = vmatmul.mubr.f32.gmra.mrb[0].mxu0 %v1418
      %v1606 = vpop.f32.mrb[0].mxu0
      %v1607 = vadd.f32 0.0, %v1606
      %v1608 = vpop.f32.mrb[0].mxu0
      %v1609 = vadd.f32 0.0, %v1608
      %1610 = vmatprep.mubr.f32.mxu0 0.0
      %1611 = vmatmul.mubr.f32.gmra.mrb[0].mxu0 %v1421
      %v1612 = vpop.f32.mrb[0].mxu0
      %v1613 = vadd.f32 0.0, %v1612
      %v1614 = vpop.f32.mrb[0].mxu0
      %v1615 = vadd.f32 0.0, %v1614
      %1616 = vmatprep.mubr.f32.mxu0 0.0
      %1617 = vmatmul.mubr.f32.gmra.mrb[0].mxu0 %v1424
      %v1618 = vpop.f32.mrb[0].mxu0
      %v1619 = vadd.f32 0.0, %v1618
      %v1620 = vpop.f32.mrb[0].mxu0
      %v1621 = vadd.f32 0.0, %v1620
      %1622 = vmatprep.mubr.f32.mxu0 0.0
      %1623 = vmatmul.mubr.f32.gmra.mrb[0].mxu0 %v1427
      %v1624 = vpop.f32.mrb[0].mxu0
      %v1625 = vadd.f32 0.0, %v1624
      %v1626 = vpop.f32.mrb[0].mxu0
      %v1627 = vadd.f32 0.0, %v1626
      %1628 = vmatprep.mubr.f32.mxu0 0.0
      %1629 = vmatmul.mubr.f32.gmra.mrb[0].mxu0 %v1430
      %v1630 = vpop.f32.mrb[0].mxu0
      %v1631 = vadd.f32 0.0, %v1630
      %v1632 = vpop.f32.mrb[0].mxu0
      %v1633 = vadd.f32 0.0, %v1632
      %1634 = vmatprep.mubr.f32.mxu0 0.0
      %1635 = vmatmul.mubr.f32.gmra.mrb[0].mxu0 %v1433
      %v1636 = vpop.f32.mrb[0].mxu0
      %v1637 = vadd.f32 0.0, %v1636
      %v1638 = vpop.f32.mrb[0].mxu0
      %v1639 = vadd.f32 0.0, %v1638
      %1640 = vmatprep.mubr.f32.mxu0 0.0
      %1641 = vmatmul.mubr.f32.gmra.mrb[0].mxu0 %v1436
      %v1642 = vpop.f32.mrb[0].mxu0
      %v1643 = vadd.f32 0.0, %v1642
      %v1644 = vpop.f32.mrb[0].mxu0
      %v1645 = vadd.f32 0.0, %v1644
      %1646 = vmatprep.mubr.f32.mxu0 0.0
      %1647 = vmatmul.mubr.f32.gmra.mrb[0].mxu0 %v1439
      %v1648 = vpop.f32.mrb[0].mxu0
      %v1649 = vadd.f32 0.0, %v1648
      %v1650 = vpop.f32.mrb[0].mxu0
      %v1651 = vadd.f32 0.0, %v1650
      %1652 = vmatprep.mubr.f32.mxu0 0.0
      %1653 = vmatmul.mubr.f32.gmra.mrb[0].mxu0 %v1442
      %v1654 = vpop.f32.mrb[0].mxu0
      %v1655 = vadd.f32 0.0, %v1654
      %v1656 = vpop.f32.mrb[0].mxu0
      %v1657 = vadd.f32 0.0, %v1656
      %1658 = vmatprep.mubr.f32.mxu0 0.0
      %1659 = vmatmul.mubr.f32.gmra.mrb[0].mxu0 %v1445
      %v1660 = vpop.f32.mrb[0].mxu0
      %v1661 = vadd.f32 0.0, %v1660
      %v1662 = vpop.f32.mrb[0].mxu0
      %v1663 = vadd.f32 0.0, %v1662
      %1664 = vmatprep.mubr.f32.mxu0 0.0
      %1665 = vmatmul.mubr.f32.gmra.mrb[0].mxu0 %v1448
      %v1666 = vpop.f32.mrb[0].mxu0
      %v1667 = vadd.f32 0.0, %v1666
      %v1668 = vpop.f32.mrb[0].mxu0
      %v1669 = vadd.f32 0.0, %v1668
      %1670 = vmatprep.mubr.f32.mxu0 0.0
      %1671 = vmatmul.mubr.f32.gmra.mrb[0].mxu0 %v1451
      %v1672 = vpop.f32.mrb[0].mxu0
      %v1673 = vadd.f32 0.0, %v1672
      %v1674 = vpop.f32.mrb[0].mxu0
      %v1675 = vadd.f32 0.0, %v1674
      %1676 = vmatprep.mubr.f32.mxu0 0.0
      %1677 = vmatmul.mubr.f32.gmra.mrb[0].mxu0 %v1454
      %v1678 = vpop.f32.mrb[0].mxu0
      %v1679 = vadd.f32 0.0, %v1678
      %v1680 = vpop.f32.mrb[0].mxu0
      %v1681 = vadd.f32 0.0, %v1680
      %1682 = vmatprep.mubr.f32.mxu0 0.0
      %1683 = vmatmul.mubr.f32.gmra.mrb[0].mxu0 %v1457
      %v1684 = vpop.f32.mrb[0].mxu0
      %v1685 = vadd.f32 0.0, %v1684
      %v1686 = vpop.f32.mrb[0].mxu0
      %v1687 = vadd.f32 0.0, %v1686
      %1688 = vmatprep.mubr.f32.mxu0 0.0
      %1689 = vmatmul.mubr.f32.gmra.mrb[0].mxu0 %v1460
      %v1690 = vpop.f32.mrb[0].mxu0
      %v1691 = vadd.f32 0.0, %v1690
      %v1692 = vpop.f32.mrb[0].mxu0
      %v1693 = vadd.f32 0.0, %v1692
      %1694 = vmatprep.mubr.f32.mxu0 0.0
      %1695 = vmatmul.mubr.f32.gmra.mrb[0].mxu0 %v1463
      %v1696 = vpop.f32.mrb[0].mxu0
      %v1697 = vadd.f32 0.0, %v1696
      %v1698 = vpop.f32.mrb[0].mxu0
      %v1699 = vadd.f32 0.0, %v1698
      %1700 = vmatprep.mubr.f32.mxu0 0.0
      %1701 = vmatmul.mubr.f32.gmra.mrb[0].mxu0 %v1466
      %v1702 = vpop.f32.mrb[0].mxu0
      %v1703 = vadd.f32 0.0, %v1702
      %v1704 = vpop.f32.mrb[0].mxu0
      %v1705 = vadd.f32 0.0, %v1704
      %1706 = vmatprep.mubr.f32.mxu0 0.0
      %1707 = vmatmul.mubr.f32.gmra.mrb[0].mxu0 %v1469
      %v1708 = vpop.f32.mrb[0].mxu0
      %v1709 = vadd.f32 0.0, %v1708
      %v1710 = vpop.f32.mrb[0].mxu0
      %v1711 = vadd.f32 0.0, %v1710
      %1712 = vmatprep.mubr.f32.mxu0 0.0
      %1713 = vmatmul.mubr.f32.gmra.mrb[0].mxu0 %v1472
      %v1714 = vpop.f32.mrb[0].mxu0
      %v1715 = vadd.f32 0.0, %v1714
      %v1716 = vpop.f32.mrb[0].mxu0
      %v1717 = vadd.f32 0.0, %v1716
      %1718 = vmatprep.mubr.f32.mxu0 0.0
      %1719 = vmatmul.mubr.f32.gmra.mrb[0].mxu0 %v1475
      %v1720 = vpop.f32.mrb[0].mxu0
      %v1721 = vadd.f32 0.0, %v1720
      %v1722 = vpop.f32.mrb[0].mxu0
      %v1723 = vadd.f32 0.0, %v1722
      %1724 = vmatprep.mubr.f32.mxu0 0.0
      %1725 = vmatmul.mubr.f32.gmra.mrb[0].mxu0 %v1478
      %v1726 = vpop.f32.mrb[0].mxu0
      %v1727 = vadd.f32 0.0, %v1726
      %v1728 = vpop.f32.mrb[0].mxu0
      %v1729 = vadd.f32 0.0, %v1728
      %1730 = vmatprep.mubr.f32.mxu0 0.0
      %1731 = vmatmul.mubr.f32.gmra.mrb[0].mxu0 %v1481
      %v1732 = vpop.f32.mrb[0].mxu0
      %v1733 = vadd.f32 0.0, %v1732
      %v1734 = vpop.f32.mrb[0].mxu0
      %v1735 = vadd.f32 0.0, %v1734
      %1736 = vmatprep.mubr.f32.mxu0 0.0
      %1737 = vmatmul.mubr.f32.gmra.mrb[0].mxu0 %v1484
      %v1738 = vpop.f32.mrb[0].mxu0
      %v1739 = vadd.f32 0.0, %v1738
      %v1740 = vpop.f32.mrb[0].mxu0
      %v1741 = vadd.f32 0.0, %v1740
      %1742 = vdwg.mxu0
      %1743 = vxpose.xlu0.b32.start [1/16] %v439, 128
      %1744 = vxpose.xlu0.b32.cont [2/16] 0.0, 128
      %1745 = vxpose.xlu0.b32.cont [3/16] 0.0, 128
      %1746 = vxpose.xlu0.b32.cont [4/16] 0.0, 128
      %1747 = vxpose.xlu0.b32.cont [5/16] 0.0, 128
      %1748 = vxpose.xlu0.b32.cont [6/16] 0.0, 128
      %1749 = vxpose.xlu0.b32.cont [7/16] 0.0, 128
      %1750 = vxpose.xlu0.b32.cont [8/16] 0.0, 128
      %1751 = vxpose.xlu0.b32.cont [9/16] 0.0, 128
      %1752 = vxpose.xlu0.b32.cont [10/16] 0.0, 128
      %1753 = vxpose.xlu0.b32.cont [11/16] 0.0, 128
      %1754 = vxpose.xlu0.b32.cont [12/16] 0.0, 128
      %1755 = vxpose.xlu0.b32.cont [13/16] 0.0, 128
      %1756 = vxpose.xlu0.b32.cont [14/16] 0.0, 128
      %1757 = vxpose.xlu0.b32.cont [15/16] 0.0, 128
      %1758 = vxpose.xlu0.b32.end [16/16] 0.0, 128
      %v1759 = vpop.trf.xlu0
      %v1760 = vpop.trf.xlu0
      %v1761 = vpop.trf.xlu0
      %v1762 = vpop.trf.xlu0
      %v1763 = vpop.trf.xlu0
      %v1764 = vpop.trf.xlu0
      %v1765 = vpop.trf.xlu0
      %v1766 = vpop.trf.xlu0
      %v1767 = vpop.trf.xlu0
      %v1768 = vpop.trf.xlu0
      %v1769 = vpop.trf.xlu0
      %v1770 = vpop.trf.xlu0
      %v1771 = vpop.trf.xlu0
      %v1772 = vpop.trf.xlu0
      %v1773 = vpop.trf.xlu0
      %v1774 = vpop.trf.xlu0
      %1775 = vxpose.xlu0.b32.start [1/16] %v441, 128
      %1776 = vxpose.xlu0.b32.cont [2/16] 0.0, 128
      %1777 = vxpose.xlu0.b32.cont [3/16] 0.0, 128
      %1778 = vxpose.xlu0.b32.cont [4/16] 0.0, 128
      %1779 = vxpose.xlu0.b32.cont [5/16] 0.0, 128
      %1780 = vxpose.xlu0.b32.cont [6/16] 0.0, 128
      %1781 = vxpose.xlu0.b32.cont [7/16] 0.0, 128
      %1782 = vxpose.xlu0.b32.cont [8/16] 0.0, 128
      %1783 = vxpose.xlu0.b32.cont [9/16] 0.0, 128
      %1784 = vxpose.xlu0.b32.cont [10/16] 0.0, 128
      %1785 = vxpose.xlu0.b32.cont [11/16] 0.0, 128
      %1786 = vxpose.xlu0.b32.cont [12/16] 0.0, 128
      %1787 = vxpose.xlu0.b32.cont [13/16] 0.0, 128
      %1788 = vxpose.xlu0.b32.cont [14/16] 0.0, 128
      %1789 = vxpose.xlu0.b32.cont [15/16] 0.0, 128
      %1790 = vxpose.xlu0.b32.end [16/16] 0.0, 128
      %v1791 = vpop.trf.xlu0
      %v1792 = vpop.trf.xlu0
      %v1793 = vpop.trf.xlu0
      %v1794 = vpop.trf.xlu0
      %v1795 = vpop.trf.xlu0
      %v1796 = vpop.trf.xlu0
      %v1797 = vpop.trf.xlu0
      %v1798 = vpop.trf.xlu0
      %v1799 = vpop.trf.xlu0
      %v1800 = vpop.trf.xlu0
      %v1801 = vpop.trf.xlu0
      %v1802 = vpop.trf.xlu0
      %v1803 = vpop.trf.xlu0
      %v1804 = vpop.trf.xlu0
      %v1805 = vpop.trf.xlu0
      %v1806 = vpop.trf.xlu0
      %v1808 = vsel %vm555, %v1759, 0
      %v1811 = vsel %vm555, %v1760, 0
      %v1814 = vsel %vm555, %v1761, 0
      %v1817 = vsel %vm555, %v1762, 0
      %v1820 = vsel %vm555, %v1763, 0
      %v1823 = vsel %vm555, %v1764, 0
      %v1826 = vsel %vm555, %v1765, 0
      %v1829 = vsel %vm555, %v1766, 0
      %v1832 = vsel %vm555, %v1767, 0
      %v1835 = vsel %vm555, %v1768, 0
      %v1838 = vsel %vm555, %v1769, 0
      %v1841 = vsel %vm555, %v1770, 0
      %v1844 = vsel %vm555, %v1771, 0
      %v1847 = vsel %vm555, %v1772, 0
      %v1850 = vsel %vm555, %v1773, 0
      %v1853 = vsel %vm555, %v1774, 0
      %v1856 = vsel %vm555, %v1791, 0
      %v1859 = vsel %vm555, %v1792, 0
      %v1862 = vsel %vm555, %v1793, 0
      %v1865 = vsel %vm555, %v1794, 0
      %v1868 = vsel %vm555, %v1795, 0
      %v1871 = vsel %vm555, %v1796, 0
      %v1874 = vsel %vm555, %v1797, 0
      %v1877 = vsel %vm555, %v1798, 0
      %v1880 = vsel %vm555, %v1799, 0
      %v1883 = vsel %vm555, %v1800, 0
      %v1886 = vsel %vm555, %v1801, 0
      %v1889 = vsel %vm555, %v1802, 0
      %v1892 = vsel %vm555, %v1803, 0
      %v1895 = vsel %vm555, %v1804, 0
      %v1898 = vsel %vm555, %v1805, 0
      %v1901 = vsel %vm555, %v1806, 0
      %1903 = vmatprep.subr.mxu0 %v465
      %1904 = vmatpush1.msra.mxu0 %v463
      %1905 = vmatprep.subr.mxu0 0.0
      %1906 = vmatpush1.msra.mxu0 0.0
      %1907 = vmatprep.subr.mxu0 0.0
      %1908 = vmatpush1.msra.mxu0 0.0
      %1909 = vmatprep.subr.mxu0 0.0
      %1910 = vmatpush1.msra.mxu0 0.0
      %1911 = vmatprep.subr.mxu0 0.0
      %1912 = vmatpush1.msra.mxu0 0.0
      %1913 = vmatprep.subr.mxu0 0.0
      %1914 = vmatpush1.msra.mxu0 0.0
      %1915 = vmatprep.subr.mxu0 0.0
      %1916 = vmatpush1.msra.mxu0 0.0
      %1917 = vmatprep.subr.mxu0 0.0
      %1918 = vmatpush1.msra.mxu0 0.0
      %1919 = vmatprep.subr.mxu0 0.0
      %1920 = vmatpush1.msra.mxu0 0.0
      %1921 = vmatprep.subr.mxu0 0.0
      %1922 = vmatpush1.msra.mxu0 0.0
      %1923 = vmatprep.subr.mxu0 0.0
      %1924 = vmatpush1.msra.mxu0 0.0
      %1925 = vmatprep.subr.mxu0 0.0
      %1926 = vmatpush1.msra.mxu0 0.0
      %1927 = vmatprep.subr.mxu0 0.0
      %1928 = vmatpush1.msra.mxu0 0.0
      %1929 = vmatprep.subr.mxu0 0.0
      %1930 = vmatpush1.msra.mxu0 0.0
      %1931 = vmatprep.subr.mxu0 0.0
      %1932 = vmatpush1.msra.mxu0 0.0
      %1933 = vmatprep.subr.mxu0 0.0
      %1934 = vmatpush1.msra.mxu0 0.0
      %1935 = vmatprep.subr.mxu0 0.0
      %1936 = vmatpush1.msra.mxu0 0.0
      %1937 = vmatprep.subr.mxu0 0.0
      %1938 = vmatpush1.msra.mxu0 0.0
      %1939 = vmatprep.subr.mxu0 0.0
      %1940 = vmatpush1.msra.mxu0 0.0
      %1941 = vmatprep.subr.mxu0 0.0
      %1942 = vmatpush1.msra.mxu0 0.0
      %1943 = vmatprep.subr.mxu0 0.0
      %1944 = vmatpush1.msra.mxu0 0.0
      %1945 = vmatprep.subr.mxu0 0.0
      %1946 = vmatpush1.msra.mxu0 0.0
      %1947 = vmatprep.subr.mxu0 0.0
      %1948 = vmatpush1.msra.mxu0 0.0
      %1949 = vmatprep.subr.mxu0 0.0
      %1950 = vmatpush1.msra.mxu0 0.0
      %1951 = vmatprep.subr.mxu0 0.0
      %1952 = vmatpush1.msra.mxu0 0.0
      %1953 = vmatprep.subr.mxu0 0.0
      %1954 = vmatpush1.msra.mxu0 0.0
      %1955 = vmatprep.subr.mxu0 0.0
      %1956 = vmatpush1.msra.mxu0 0.0
      %1957 = vmatprep.subr.mxu0 0.0
      %1958 = vmatpush1.msra.mxu0 0.0
      %1959 = vmatprep.subr.mxu0 0.0
      %1960 = vmatpush1.msra.mxu0 0.0
      %1961 = vmatprep.subr.mxu0 0.0
      %1962 = vmatpush1.msra.mxu0 0.0
      %1963 = vmatprep.subr.mxu0 0.0
      %1964 = vmatpush1.msra.mxu0 0.0
      %1965 = vmatprep.subr.mxu0 0.0
      %1966 = vmatpush1.msra.mxu0 0.0
      %1967 = vmatprep.mubr.f32.mxu0 0.0
      %1968 = vmatmul.mubr.f32.gmra.mrb[0].mxu0 %v1808
      %v1969 = vpop.f32.mrb[0].mxu0
      %v1970 = vadd.f32 0.0, %v1969
      %v1971 = vpop.f32.mrb[0].mxu0
      %v1972 = vadd.f32 0.0, %v1971
      %1973 = vmatprep.mubr.f32.mxu0 0.0
      %1974 = vmatmul.mubr.f32.gmra.mrb[0].mxu0 %v1811
      %v1975 = vpop.f32.mrb[0].mxu0
      %v1976 = vadd.f32 0.0, %v1975
      %v1977 = vpop.f32.mrb[0].mxu0
      %v1978 = vadd.f32 0.0, %v1977
      %1979 = vmatprep.mubr.f32.mxu0 0.0
      %1980 = vmatmul.mubr.f32.gmra.mrb[0].mxu0 %v1814
      %v1981 = vpop.f32.mrb[0].mxu0
      %v1982 = vadd.f32 0.0, %v1981
      %v1983 = vpop.f32.mrb[0].mxu0
      %v1984 = vadd.f32 0.0, %v1983
      %1985 = vmatprep.mubr.f32.mxu0 0.0
      %1986 = vmatmul.mubr.f32.gmra.mrb[0].mxu0 %v1817
      %v1987 = vpop.f32.mrb[0].mxu0
      %v1988 = vadd.f32 0.0, %v1987
      %v1989 = vpop.f32.mrb[0].mxu0
      %v1990 = vadd.f32 0.0, %v1989
      %1991 = vmatprep.mubr.f32.mxu0 0.0
      %1992 = vmatmul.mubr.f32.gmra.mrb[0].mxu0 %v1820
      %v1993 = vpop.f32.mrb[0].mxu0
      %v1994 = vadd.f32 0.0, %v1993
      %v1995 = vpop.f32.mrb[0].mxu0
      %v1996 = vadd.f32 0.0, %v1995
      %1997 = vmatprep.mubr.f32.mxu0 0.0
      %1998 = vmatmul.mubr.f32.gmra.mrb[0].mxu0 %v1823
      %v1999 = vpop.f32.mrb[0].mxu0
      %v2000 = vadd.f32 0.0, %v1999
      %v2001 = vpop.f32.mrb[0].mxu0
      %v2002 = vadd.f32 0.0, %v2001
      %2003 = vmatprep.mubr.f32.mxu0 0.0
      %2004 = vmatmul.mubr.f32.gmra.mrb[0].mxu0 %v1826
      %v2005 = vpop.f32.mrb[0].mxu0
      %v2006 = vadd.f32 0.0, %v2005
      %v2007 = vpop.f32.mrb[0].mxu0
      %v2008 = vadd.f32 0.0, %v2007
      %2009 = vmatprep.mubr.f32.mxu0 0.0
      %2010 = vmatmul.mubr.f32.gmra.mrb[0].mxu0 %v1829
      %v2011 = vpop.f32.mrb[0].mxu0
      %v2012 = vadd.f32 0.0, %v2011
      %v2013 = vpop.f32.mrb[0].mxu0
      %v2014 = vadd.f32 0.0, %v2013
      %2015 = vmatprep.mubr.f32.mxu0 0.0
      %2016 = vmatmul.mubr.f32.gmra.mrb[0].mxu0 %v1832
      %v2017 = vpop.f32.mrb[0].mxu0
      %v2018 = vadd.f32 0.0, %v2017
      %v2019 = vpop.f32.mrb[0].mxu0
      %v2020 = vadd.f32 0.0, %v2019
      %2021 = vmatprep.mubr.f32.mxu0 0.0
      %2022 = vmatmul.mubr.f32.gmra.mrb[0].mxu0 %v1835
      %v2023 = vpop.f32.mrb[0].mxu0
      %v2024 = vadd.f32 0.0, %v2023
      %v2025 = vpop.f32.mrb[0].mxu0
      %v2026 = vadd.f32 0.0, %v2025
      %2027 = vmatprep.mubr.f32.mxu0 0.0
      %2028 = vmatmul.mubr.f32.gmra.mrb[0].mxu0 %v1838
      %v2029 = vpop.f32.mrb[0].mxu0
      %v2030 = vadd.f32 0.0, %v2029
      %v2031 = vpop.f32.mrb[0].mxu0
      %v2032 = vadd.f32 0.0, %v2031
      %2033 = vmatprep.mubr.f32.mxu0 0.0
      %2034 = vmatmul.mubr.f32.gmra.mrb[0].mxu0 %v1841
      %v2035 = vpop.f32.mrb[0].mxu0
      %v2036 = vadd.f32 0.0, %v2035
      %v2037 = vpop.f32.mrb[0].mxu0
      %v2038 = vadd.f32 0.0, %v2037
      %2039 = vmatprep.mubr.f32.mxu0 0.0
      %2040 = vmatmul.mubr.f32.gmra.mrb[0].mxu0 %v1844
      %v2041 = vpop.f32.mrb[0].mxu0
      %v2042 = vadd.f32 0.0, %v2041
      %v2043 = vpop.f32.mrb[0].mxu0
      %v2044 = vadd.f32 0.0, %v2043
      %2045 = vmatprep.mubr.f32.mxu0 0.0
      %2046 = vmatmul.mubr.f32.gmra.mrb[0].mxu0 %v1847
      %v2047 = vpop.f32.mrb[0].mxu0
      %v2048 = vadd.f32 0.0, %v2047
      %v2049 = vpop.f32.mrb[0].mxu0
      %v2050 = vadd.f32 0.0, %v2049
      %2051 = vmatprep.mubr.f32.mxu0 0.0
      %2052 = vmatmul.mubr.f32.gmra.mrb[0].mxu0 %v1850
      %v2053 = vpop.f32.mrb[0].mxu0
      %v2054 = vadd.f32 0.0, %v2053
      %v2055 = vpop.f32.mrb[0].mxu0
      %v2056 = vadd.f32 0.0, %v2055
      %2057 = vmatprep.mubr.f32.mxu0 0.0
      %2058 = vmatmul.mubr.f32.gmra.mrb[0].mxu0 %v1853
      %v2059 = vpop.f32.mrb[0].mxu0
      %v2060 = vadd.f32 0.0, %v2059
      %v2061 = vpop.f32.mrb[0].mxu0
      %v2062 = vadd.f32 0.0, %v2061
      %2063 = vmatprep.mubr.f32.mxu0 0.0
      %2064 = vmatmul.mubr.f32.gmra.mrb[0].mxu0 %v1856
      %v2065 = vpop.f32.mrb[0].mxu0
      %v2066 = vadd.f32 0.0, %v2065
      %v2067 = vpop.f32.mrb[0].mxu0
      %v2068 = vadd.f32 0.0, %v2067
      %2069 = vmatprep.mubr.f32.mxu0 0.0
      %2070 = vmatmul.mubr.f32.gmra.mrb[0].mxu0 %v1859
      %v2071 = vpop.f32.mrb[0].mxu0
      %v2072 = vadd.f32 0.0, %v2071
      %v2073 = vpop.f32.mrb[0].mxu0
      %v2074 = vadd.f32 0.0, %v2073
      %2075 = vmatprep.mubr.f32.mxu0 0.0
      %2076 = vmatmul.mubr.f32.gmra.mrb[0].mxu0 %v1862
      %v2077 = vpop.f32.mrb[0].mxu0
      %v2078 = vadd.f32 0.0, %v2077
      %v2079 = vpop.f32.mrb[0].mxu0
      %v2080 = vadd.f32 0.0, %v2079
      %2081 = vmatprep.mubr.f32.mxu0 0.0
      %2082 = vmatmul.mubr.f32.gmra.mrb[0].mxu0 %v1865
      %v2083 = vpop.f32.mrb[0].mxu0
      %v2084 = vadd.f32 0.0, %v2083
      %v2085 = vpop.f32.mrb[0].mxu0
      %v2086 = vadd.f32 0.0, %v2085
      %2087 = vmatprep.mubr.f32.mxu0 0.0
      %2088 = vmatmul.mubr.f32.gmra.mrb[0].mxu0 %v1868
      %v2089 = vpop.f32.mrb[0].mxu0
      %v2090 = vadd.f32 0.0, %v2089
      %v2091 = vpop.f32.mrb[0].mxu0
      %v2092 = vadd.f32 0.0, %v2091
      %2093 = vmatprep.mubr.f32.mxu0 0.0
      %2094 = vmatmul.mubr.f32.gmra.mrb[0].mxu0 %v1871
      %v2095 = vpop.f32.mrb[0].mxu0
      %v2096 = vadd.f32 0.0, %v2095
      %v2097 = vpop.f32.mrb[0].mxu0
      %v2098 = vadd.f32 0.0, %v2097
      %2099 = vmatprep.mubr.f32.mxu0 0.0
      %2100 = vmatmul.mubr.f32.gmra.mrb[0].mxu0 %v1874
      %v2101 = vpop.f32.mrb[0].mxu0
      %v2102 = vadd.f32 0.0, %v2101
      %v2103 = vpop.f32.mrb[0].mxu0
      %v2104 = vadd.f32 0.0, %v2103
      %2105 = vmatprep.mubr.f32.mxu0 0.0
      %2106 = vmatmul.mubr.f32.gmra.mrb[0].mxu0 %v1877
      %v2107 = vpop.f32.mrb[0].mxu0
      %v2108 = vadd.f32 0.0, %v2107
      %v2109 = vpop.f32.mrb[0].mxu0
      %v2110 = vadd.f32 0.0, %v2109
      %2111 = vmatprep.mubr.f32.mxu0 0.0
      %2112 = vmatmul.mubr.f32.gmra.mrb[0].mxu0 %v1880
      %v2113 = vpop.f32.mrb[0].mxu0
      %v2114 = vadd.f32 0.0, %v2113
      %v2115 = vpop.f32.mrb[0].mxu0
      %v2116 = vadd.f32 0.0, %v2115
      %2117 = vmatprep.mubr.f32.mxu0 0.0
      %2118 = vmatmul.mubr.f32.gmra.mrb[0].mxu0 %v1883
      %v2119 = vpop.f32.mrb[0].mxu0
      %v2120 = vadd.f32 0.0, %v2119
      %v2121 = vpop.f32.mrb[0].mxu0
      %v2122 = vadd.f32 0.0, %v2121
      %2123 = vmatprep.mubr.f32.mxu0 0.0
      %2124 = vmatmul.mubr.f32.gmra.mrb[0].mxu0 %v1886
      %v2125 = vpop.f32.mrb[0].mxu0
      %v2126 = vadd.f32 0.0, %v2125
      %v2127 = vpop.f32.mrb[0].mxu0
      %v2128 = vadd.f32 0.0, %v2127
      %2129 = vmatprep.mubr.f32.mxu0 0.0
      %2130 = vmatmul.mubr.f32.gmra.mrb[0].mxu0 %v1889
      %v2131 = vpop.f32.mrb[0].mxu0
      %v2132 = vadd.f32 0.0, %v2131
      %v2133 = vpop.f32.mrb[0].mxu0
      %v2134 = vadd.f32 0.0, %v2133
      %2135 = vmatprep.mubr.f32.mxu0 0.0
      %2136 = vmatmul.mubr.f32.gmra.mrb[0].mxu0 %v1892
      %v2137 = vpop.f32.mrb[0].mxu0
      %v2138 = vadd.f32 0.0, %v2137
      %v2139 = vpop.f32.mrb[0].mxu0
      %v2140 = vadd.f32 0.0, %v2139
      %2141 = vmatprep.mubr.f32.mxu0 0.0
      %2142 = vmatmul.mubr.f32.gmra.mrb[0].mxu0 %v1895
      %v2143 = vpop.f32.mrb[0].mxu0
      %v2144 = vadd.f32 0.0, %v2143
      %v2145 = vpop.f32.mrb[0].mxu0
      %v2146 = vadd.f32 0.0, %v2145
      %2147 = vmatprep.mubr.f32.mxu0 0.0
      %2148 = vmatmul.mubr.f32.gmra.mrb[0].mxu0 %v1898
      %v2149 = vpop.f32.mrb[0].mxu0
      %v2150 = vadd.f32 0.0, %v2149
      %v2151 = vpop.f32.mrb[0].mxu0
      %v2152 = vadd.f32 0.0, %v2151
      %2153 = vmatprep.mubr.f32.mxu0 0.0
      %2154 = vmatmul.mubr.f32.gmra.mrb[0].mxu0 %v1901
      %v2155 = vpop.f32.mrb[0].mxu0
      %v2156 = vadd.f32 0.0, %v2155
      %v2157 = vpop.f32.mrb[0].mxu0
      %v2158 = vadd.f32 0.0, %v2157
      %2159 = vdwg.mxu0
      %v2160 = vmax.f32 %v719, %v721
      %2161 = vmax.xlane.f32.xlu0 %v2160
      %v2162 = vpop.xlane.xlu0 %2161
      %v2163 = vmax.f32 %v725, %v727
      %2164 = vmax.xlane.f32.xlu0 %v2163
      %v2165 = vpop.xlane.xlu0 %2164
      %v2166 = vmax.f32 %v731, %v733
      %2167 = vmax.xlane.f32.xlu0 %v2166
      %v2168 = vpop.xlane.xlu0 %2167
      %v2169 = vmax.f32 %v737, %v739
      %2170 = vmax.xlane.f32.xlu0 %v2169
      %v2171 = vpop.xlane.xlu0 %2170
      %v2172 = vmax.f32 %v743, %v745
      %2173 = vmax.xlane.f32.xlu0 %v2172
      %v2174 = vpop.xlane.xlu0 %2173
      %v2175 = vmax.f32 %v749, %v751
      %2176 = vmax.xlane.f32.xlu0 %v2175
      %v2177 = vpop.xlane.xlu0 %2176
      %v2178 = vmax.f32 %v755, %v757
      %2179 = vmax.xlane.f32.xlu0 %v2178
      %v2180 = vpop.xlane.xlu0 %2179
      %v2181 = vmax.f32 %v761, %v763
      %2182 = vmax.xlane.f32.xlu0 %v2181
      %v2183 = vpop.xlane.xlu0 %2182
      %v2184 = vmax.f32 %v767, %v769
      %2185 = vmax.xlane.f32.xlu0 %v2184
      %v2186 = vpop.xlane.xlu0 %2185
      %v2187 = vmax.f32 %v773, %v775
      %2188 = vmax.xlane.f32.xlu0 %v2187
      %v2189 = vpop.xlane.xlu0 %2188
      %v2190 = vmax.f32 %v779, %v781
      %2191 = vmax.xlane.f32.xlu0 %v2190
      %v2192 = vpop.xlane.xlu0 %2191
      %v2193 = vmax.f32 %v785, %v787
      %2194 = vmax.xlane.f32.xlu0 %v2193
      %v2195 = vpop.xlane.xlu0 %2194
      %v2196 = vmax.f32 %v791, %v793
      %2197 = vmax.xlane.f32.xlu0 %v2196
      %v2198 = vpop.xlane.xlu0 %2197
      %v2199 = vmax.f32 %v797, %v799
      %2200 = vmax.xlane.f32.xlu0 %v2199
      %v2201 = vpop.xlane.xlu0 %2200
      %v2202 = vmax.f32 %v803, %v805
      %2203 = vmax.xlane.f32.xlu0 %v2202
      %v2204 = vpop.xlane.xlu0 %2203
      %v2205 = vmax.f32 %v809, %v811
      %2206 = vmax.xlane.f32.xlu0 %v2205
      %v2207 = vpop.xlane.xlu0 %2206
      %v2208 = vmax.f32 %v815, %v817
      %2209 = vmax.xlane.f32.xlu0 %v2208
      %v2210 = vpop.xlane.xlu0 %2209
      %v2211 = vmax.f32 %v821, %v823
      %2212 = vmax.xlane.f32.xlu0 %v2211
      %v2213 = vpop.xlane.xlu0 %2212
      %v2214 = vmax.f32 %v827, %v829
      %2215 = vmax.xlane.f32.xlu0 %v2214
      %v2216 = vpop.xlane.xlu0 %2215
      %v2217 = vmax.f32 %v833, %v835
      %2218 = vmax.xlane.f32.xlu0 %v2217
      %v2219 = vpop.xlane.xlu0 %2218
      %v2220 = vmax.f32 %v839, %v841
      %2221 = vmax.xlane.f32.xlu0 %v2220
      %v2222 = vpop.xlane.xlu0 %2221
      %v2223 = vmax.f32 %v845, %v847
      %2224 = vmax.xlane.f32.xlu0 %v2223
      %v2225 = vpop.xlane.xlu0 %2224
      %v2226 = vmax.f32 %v851, %v853
      %2227 = vmax.xlane.f32.xlu0 %v2226
      %v2228 = vpop.xlane.xlu0 %2227
      %v2229 = vmax.f32 %v857, %v859
      %2230 = vmax.xlane.f32.xlu0 %v2229
      %v2231 = vpop.xlane.xlu0 %2230
      %v2232 = vmax.f32 %v863, %v865
      %2233 = vmax.xlane.f32.xlu0 %v2232
      %v2234 = vpop.xlane.xlu0 %2233
      %v2235 = vmax.f32 %v869, %v871
      %2236 = vmax.xlane.f32.xlu0 %v2235
      %v2237 = vpop.xlane.xlu0 %2236
      %v2238 = vmax.f32 %v875, %v877
      %2239 = vmax.xlane.f32.xlu0 %v2238
      %v2240 = vpop.xlane.xlu0 %2239
      %v2241 = vmax.f32 %v881, %v883
      %2242 = vmax.xlane.f32.xlu0 %v2241
      %v2243 = vpop.xlane.xlu0 %2242
      %v2244 = vmax.f32 %v887, %v889
      %2245 = vmax.xlane.f32.xlu0 %v2244
      %v2246 = vpop.xlane.xlu0 %2245
      %v2247 = vmax.f32 %v893, %v895
      %2248 = vmax.xlane.f32.xlu0 %v2247
      %v2249 = vpop.xlane.xlu0 %2248
      %v2250 = vmax.f32 %v899, %v901
      %2251 = vmax.xlane.f32.xlu0 %v2250
      %v2252 = vpop.xlane.xlu0 %2251
      %v2253 = vmax.f32 %v905, %v907
      %2254 = vmax.xlane.f32.xlu0 %v2253
      %v2255 = vpop.xlane.xlu0 %2254
      %v2256 = vmax.f32 %v1136, %v1138
      %2257 = vmax.xlane.f32.xlu0 %v2256
      %v2258 = vpop.xlane.xlu0 %2257
      %v2259 = vmax.f32 %v1142, %v1144
      %2260 = vmax.xlane.f32.xlu0 %v2259
      %v2261 = vpop.xlane.xlu0 %2260
      %v2262 = vmax.f32 %v1148, %v1150
      %2263 = vmax.xlane.f32.xlu0 %v2262
      %v2264 = vpop.xlane.xlu0 %2263
      %v2265 = vmax.f32 %v1154, %v1156
      %2266 = vmax.xlane.f32.xlu0 %v2265
      %v2267 = vpop.xlane.xlu0 %2266
      %v2268 = vmax.f32 %v1160, %v1162
      %2269 = vmax.xlane.f32.xlu0 %v2268
      %v2270 = vpop.xlane.xlu0 %2269
      %v2271 = vmax.f32 %v1166, %v1168
      %2272 = vmax.xlane.f32.xlu0 %v2271
      %v2273 = vpop.xlane.xlu0 %2272
      %v2274 = vmax.f32 %v1172, %v1174
      %2275 = vmax.xlane.f32.xlu0 %v2274
      %v2276 = vpop.xlane.xlu0 %2275
      %v2277 = vmax.f32 %v1178, %v1180
      %2278 = vmax.xlane.f32.xlu0 %v2277
      %v2279 = vpop.xlane.xlu0 %2278
      %v2280 = vmax.f32 %v1184, %v1186
      %2281 = vmax.xlane.f32.xlu0 %v2280
      %v2282 = vpop.xlane.xlu0 %2281
      %v2283 = vmax.f32 %v1190, %v1192
      %2284 = vmax.xlane.f32.xlu0 %v2283
      %v2285 = vpop.xlane.xlu0 %2284
      %v2286 = vmax.f32 %v1196, %v1198
      %2287 = vmax.xlane.f32.xlu0 %v2286
      %v2288 = vpop.xlane.xlu0 %2287
      %v2289 = vmax.f32 %v1202, %v1204
      %2290 = vmax.xlane.f32.xlu0 %v2289
      %v2291 = vpop.xlane.xlu0 %2290
      %v2292 = vmax.f32 %v1208, %v1210
      %2293 = vmax.xlane.f32.xlu0 %v2292
      %v2294 = vpop.xlane.xlu0 %2293
      %v2295 = vmax.f32 %v1214, %v1216
      %2296 = vmax.xlane.f32.xlu0 %v2295
      %v2297 = vpop.xlane.xlu0 %2296
      %v2298 = vmax.f32 %v1220, %v1222
      %2299 = vmax.xlane.f32.xlu0 %v2298
      %v2300 = vpop.xlane.xlu0 %2299
      %v2301 = vmax.f32 %v1226, %v1228
      %2302 = vmax.xlane.f32.xlu0 %v2301
      %v2303 = vpop.xlane.xlu0 %2302
      %v2304 = vmax.f32 %v1232, %v1234
      %2305 = vmax.xlane.f32.xlu0 %v2304
      %v2306 = vpop.xlane.xlu0 %2305
      %v2307 = vmax.f32 %v1238, %v1240
      %2308 = vmax.xlane.f32.xlu0 %v2307
      %v2309 = vpop.xlane.xlu0 %2308
      %v2310 = vmax.f32 %v1244, %v1246
      %2311 = vmax.xlane.f32.xlu0 %v2310
      %v2312 = vpop.xlane.xlu0 %2311
      %v2313 = vmax.f32 %v1250, %v1252
      %2314 = vmax.xlane.f32.xlu0 %v2313
      %v2315 = vpop.xlane.xlu0 %2314
      %v2316 = vmax.f32 %v1256, %v1258
      %2317 = vmax.xlane.f32.xlu0 %v2316
      %v2318 = vpop.xlane.xlu0 %2317
      %v2319 = vmax.f32 %v1262, %v1264
      %2320 = vmax.xlane.f32.xlu0 %v2319
      %v2321 = vpop.xlane.xlu0 %2320
      %v2322 = vmax.f32 %v1268, %v1270
      %2323 = vmax.xlane.f32.xlu0 %v2322
      %v2324 = vpop.xlane.xlu0 %2323
      %v2325 = vmax.f32 %v1274, %v1276
      %2326 = vmax.xlane.f32.xlu0 %v2325
      %v2327 = vpop.xlane.xlu0 %2326
      %v2328 = vmax.f32 %v1280, %v1282
      %2329 = vmax.xlane.f32.xlu0 %v2328
      %v2330 = vpop.xlane.xlu0 %2329
      %v2331 = vmax.f32 %v1286, %v1288
      %2332 = vmax.xlane.f32.xlu0 %v2331
      %v2333 = vpop.xlane.xlu0 %2332
      %v2334 = vmax.f32 %v1292, %v1294
      %2335 = vmax.xlane.f32.xlu0 %v2334
      %v2336 = vpop.xlane.xlu0 %2335
      %v2337 = vmax.f32 %v1298, %v1300
      %2338 = vmax.xlane.f32.xlu0 %v2337
      %v2339 = vpop.xlane.xlu0 %2338
      %v2340 = vmax.f32 %v1304, %v1306
      %2341 = vmax.xlane.f32.xlu0 %v2340
      %v2342 = vpop.xlane.xlu0 %2341
      %v2343 = vmax.f32 %v1310, %v1312
      %2344 = vmax.xlane.f32.xlu0 %v2343
      %v2345 = vpop.xlane.xlu0 %2344
      %v2346 = vmax.f32 %v1316, %v1318
      %2347 = vmax.xlane.f32.xlu0 %v2346
      %v2348 = vpop.xlane.xlu0 %2347
      %v2349 = vmax.f32 %v1322, %v1324
      %2350 = vmax.xlane.f32.xlu0 %v2349
      %v2351 = vpop.xlane.xlu0 %2350
      %v2352 = vmax.f32 %v1553, %v1555
      %2353 = vmax.xlane.f32.xlu0 %v2352
      %v2354 = vpop.xlane.xlu0 %2353
      %v2355 = vmax.f32 %v1559, %v1561
      %2356 = vmax.xlane.f32.xlu0 %v2355
      %v2357 = vpop.xlane.xlu0 %2356
      %v2358 = vmax.f32 %v1565, %v1567
      %2359 = vmax.xlane.f32.xlu0 %v2358
      %v2360 = vpop.xlane.xlu0 %2359
      %v2361 = vmax.f32 %v1571, %v1573
      %2362 = vmax.xlane.f32.xlu0 %v2361
      %v2363 = vpop.xlane.xlu0 %2362
      %v2364 = vmax.f32 %v1577, %v1579
      %2365 = vmax.xlane.f32.xlu0 %v2364
      %v2366 = vpop.xlane.xlu0 %2365
      %v2367 = vmax.f32 %v1583, %v1585
      %2368 = vmax.xlane.f32.xlu0 %v2367
      %v2369 = vpop.xlane.xlu0 %2368
      %v2370 = vmax.f32 %v1589, %v1591
      %2371 = vmax.xlane.f32.xlu0 %v2370
      %v2372 = vpop.xlane.xlu0 %2371
      %v2373 = vmax.f32 %v1595, %v1597
      %2374 = vmax.xlane.f32.xlu0 %v2373
      %v2375 = vpop.xlane.xlu0 %2374
      %v2376 = vmax.f32 %v1601, %v1603
      %2377 = vmax.xlane.f32.xlu0 %v2376
      %v2378 = vpop.xlane.xlu0 %2377
      %v2379 = vmax.f32 %v1607, %v1609
      %2380 = vmax.xlane.f32.xlu0 %v2379
      %v2381 = vpop.xlane.xlu0 %2380
      %v2382 = vmax.f32 %v1613, %v1615
      %2383 = vmax.xlane.f32.xlu0 %v2382
      %v2384 = vpop.xlane.xlu0 %2383
      %v2385 = vmax.f32 %v1619, %v1621
      %2386 = vmax.xlane.f32.xlu0 %v2385
      %v2387 = vpop.xlane.xlu0 %2386
      %v2388 = vmax.f32 %v1625, %v1627
      %2389 = vmax.xlane.f32.xlu0 %v2388
      %v2390 = vpop.xlane.xlu0 %2389
      %v2391 = vmax.f32 %v1631, %v1633
      %2392 = vmax.xlane.f32.xlu0 %v2391
      %v2393 = vpop.xlane.xlu0 %2392
      %v2394 = vmax.f32 %v1637, %v1639
      %2395 = vmax.xlane.f32.xlu0 %v2394
      %v2396 = vpop.xlane.xlu0 %2395
      %v2397 = vmax.f32 %v1643, %v1645
      %2398 = vmax.xlane.f32.xlu0 %v2397
      %v2399 = vpop.xlane.xlu0 %2398
      %v2400 = vmax.f32 %v1649, %v1651
      %2401 = vmax.xlane.f32.xlu0 %v2400
      %v2402 = vpop.xlane.xlu0 %2401
      %v2403 = vmax.f32 %v1655, %v1657
      %2404 = vmax.xlane.f32.xlu0 %v2403
      %v2405 = vpop.xlane.xlu0 %2404
      %v2406 = vmax.f32 %v1661, %v1663
      %2407 = vmax.xlane.f32.xlu0 %v2406
      %v2408 = vpop.xlane.xlu0 %2407
      %v2409 = vmax.f32 %v1667, %v1669
      %2410 = vmax.xlane.f32.xlu0 %v2409
      %v2411 = vpop.xlane.xlu0 %2410
      %v2412 = vmax.f32 %v1673, %v1675
      %2413 = vmax.xlane.f32.xlu0 %v2412
      %v2414 = vpop.xlane.xlu0 %2413
      %v2415 = vmax.f32 %v1679, %v1681
      %2416 = vmax.xlane.f32.xlu0 %v2415
      %v2417 = vpop.xlane.xlu0 %2416
      %v2418 = vmax.f32 %v1685, %v1687
      %2419 = vmax.xlane.f32.xlu0 %v2418
      %v2420 = vpop.xlane.xlu0 %2419
      %v2421 = vmax.f32 %v1691, %v1693
      %2422 = vmax.xlane.f32.xlu0 %v2421
      %v2423 = vpop.xlane.xlu0 %2422
      %v2424 = vmax.f32 %v1697, %v1699
      %2425 = vmax.xlane.f32.xlu0 %v2424
      %v2426 = vpop.xlane.xlu0 %2425
      %v2427 = vmax.f32 %v1703, %v1705
      %2428 = vmax.xlane.f32.xlu0 %v2427
      %v2429 = vpop.xlane.xlu0 %2428
      %v2430 = vmax.f32 %v1709, %v1711
      %2431 = vmax.xlane.f32.xlu0 %v2430
      %v2432 = vpop.xlane.xlu0 %2431
      %v2433 = vmax.f32 %v1715, %v1717
      %2434 = vmax.xlane.f32.xlu0 %v2433
      %v2435 = vpop.xlane.xlu0 %2434
      %v2436 = vmax.f32 %v1721, %v1723
      %2437 = vmax.xlane.f32.xlu0 %v2436
      %v2438 = vpop.xlane.xlu0 %2437
      %v2439 = vmax.f32 %v1727, %v1729
      %2440 = vmax.xlane.f32.xlu0 %v2439
      %v2441 = vpop.xlane.xlu0 %2440
      %v2442 = vmax.f32 %v1733, %v1735
      %2443 = vmax.xlane.f32.xlu0 %v2442
      %v2444 = vpop.xlane.xlu0 %2443
      %v2445 = vmax.f32 %v1739, %v1741
      %2446 = vmax.xlane.f32.xlu0 %v2445
      %v2447 = vpop.xlane.xlu0 %2446
      %v2448 = vmax.f32 %v1970, %v1972
      %2449 = vmax.xlane.f32.xlu0 %v2448
      %v2450 = vpop.xlane.xlu0 %2449
      %v2451 = vmax.f32 %v1976, %v1978
      %2452 = vmax.xlane.f32.xlu0 %v2451
      %v2453 = vpop.xlane.xlu0 %2452
      %v2454 = vmax.f32 %v1982, %v1984
      %2455 = vmax.xlane.f32.xlu0 %v2454
      %v2456 = vpop.xlane.xlu0 %2455
      %v2457 = vmax.f32 %v1988, %v1990
      %2458 = vmax.xlane.f32.xlu0 %v2457
      %v2459 = vpop.xlane.xlu0 %2458
      %v2460 = vmax.f32 %v1994, %v1996
      %2461 = vmax.xlane.f32.xlu0 %v2460
      %v2462 = vpop.xlane.xlu0 %2461
      %v2463 = vmax.f32 %v2000, %v2002
      %2464 = vmax.xlane.f32.xlu0 %v2463
      %v2465 = vpop.xlane.xlu0 %2464
      %v2466 = vmax.f32 %v2006, %v2008
      %2467 = vmax.xlane.f32.xlu0 %v2466
      %v2468 = vpop.xlane.xlu0 %2467
      %v2469 = vmax.f32 %v2012, %v2014
      %2470 = vmax.xlane.f32.xlu0 %v2469
      %v2471 = vpop.xlane.xlu0 %2470
      %v2472 = vmax.f32 %v2018, %v2020
      %2473 = vmax.xlane.f32.xlu0 %v2472
      %v2474 = vpop.xlane.xlu0 %2473
      %v2475 = vmax.f32 %v2024, %v2026
      %2476 = vmax.xlane.f32.xlu0 %v2475
      %v2477 = vpop.xlane.xlu0 %2476
      %v2478 = vmax.f32 %v2030, %v2032
      %2479 = vmax.xlane.f32.xlu0 %v2478
      %v2480 = vpop.xlane.xlu0 %2479
      %v2481 = vmax.f32 %v2036, %v2038
      %2482 = vmax.xlane.f32.xlu0 %v2481
      %v2483 = vpop.xlane.xlu0 %2482
      %v2484 = vmax.f32 %v2042, %v2044
      %2485 = vmax.xlane.f32.xlu0 %v2484
      %v2486 = vpop.xlane.xlu0 %2485
      %v2487 = vmax.f32 %v2048, %v2050
      %2488 = vmax.xlane.f32.xlu0 %v2487
      %v2489 = vpop.xlane.xlu0 %2488
      %v2490 = vmax.f32 %v2054, %v2056
      %2491 = vmax.xlane.f32.xlu0 %v2490
      %v2492 = vpop.xlane.xlu0 %2491
      %v2493 = vmax.f32 %v2060, %v2062
      %2494 = vmax.xlane.f32.xlu0 %v2493
      %v2495 = vpop.xlane.xlu0 %2494
      %v2496 = vmax.f32 %v2066, %v2068
      %2497 = vmax.xlane.f32.xlu0 %v2496
      %v2498 = vpop.xlane.xlu0 %2497
      %v2499 = vmax.f32 %v2072, %v2074
      %2500 = vmax.xlane.f32.xlu0 %v2499
      %v2501 = vpop.xlane.xlu0 %2500
      %v2502 = vmax.f32 %v2078, %v2080
      %2503 = vmax.xlane.f32.xlu0 %v2502
      %v2504 = vpop.xlane.xlu0 %2503
      %v2505 = vmax.f32 %v2084, %v2086
      %2506 = vmax.xlane.f32.xlu0 %v2505
      %v2507 = vpop.xlane.xlu0 %2506
      %v2508 = vmax.f32 %v2090, %v2092
      %2509 = vmax.xlane.f32.xlu0 %v2508
      %v2510 = vpop.xlane.xlu0 %2509
      %v2511 = vmax.f32 %v2096, %v2098
      %2512 = vmax.xlane.f32.xlu0 %v2511
      %v2513 = vpop.xlane.xlu0 %2512
      %v2514 = vmax.f32 %v2102, %v2104
      %2515 = vmax.xlane.f32.xlu0 %v2514
      %v2516 = vpop.xlane.xlu0 %2515
      %v2517 = vmax.f32 %v2108, %v2110
      %2518 = vmax.xlane.f32.xlu0 %v2517
      %v2519 = vpop.xlane.xlu0 %2518
      %v2520 = vmax.f32 %v2114, %v2116
      %2521 = vmax.xlane.f32.xlu0 %v2520
      %v2522 = vpop.xlane.xlu0 %2521
      %v2523 = vmax.f32 %v2120, %v2122
      %2524 = vmax.xlane.f32.xlu0 %v2523
      %v2525 = vpop.xlane.xlu0 %2524
      %v2526 = vmax.f32 %v2126, %v2128
      %2527 = vmax.xlane.f32.xlu0 %v2526
      %v2528 = vpop.xlane.xlu0 %2527
      %v2529 = vmax.f32 %v2132, %v2134
      %2530 = vmax.xlane.f32.xlu0 %v2529
      %v2531 = vpop.xlane.xlu0 %2530
      %v2532 = vmax.f32 %v2138, %v2140
      %2533 = vmax.xlane.f32.xlu0 %v2532
      %v2534 = vpop.xlane.xlu0 %2533
      %v2535 = vmax.f32 %v2144, %v2146
      %2536 = vmax.xlane.f32.xlu0 %v2535
      %v2537 = vpop.xlane.xlu0 %2536
      %v2538 = vmax.f32 %v2150, %v2152
      %2539 = vmax.xlane.f32.xlu0 %v2538
      %v2540 = vpop.xlane.xlu0 %2539
      %v2541 = vmax.f32 %v2156, %v2158
      %2542 = vmax.xlane.f32.xlu0 %v2541
      %v2543 = vpop.xlane.xlu0 %2542
      %v2544 = vsub.f32 %v719, %v2162
      %v2545 = vsub.f32 %v721, %v2162
      %v2546 = vsub.f32 %v725, %v2165
      %v2547 = vsub.f32 %v727, %v2165
      %v2548 = vsub.f32 %v731, %v2168
      %v2549 = vsub.f32 %v733, %v2168
      %v2550 = vsub.f32 %v737, %v2171
      %v2551 = vsub.f32 %v739, %v2171
      %v2552 = vsub.f32 %v743, %v2174
      %v2553 = vsub.f32 %v745, %v2174
      %v2554 = vsub.f32 %v749, %v2177
      %v2555 = vsub.f32 %v751, %v2177
      %v2556 = vsub.f32 %v755, %v2180
      %v2557 = vsub.f32 %v757, %v2180
      %v2558 = vsub.f32 %v761, %v2183
      %v2559 = vsub.f32 %v763, %v2183
      %v2560 = vsub.f32 %v767, %v2186
      %v2561 = vsub.f32 %v769, %v2186
      %v2562 = vsub.f32 %v773, %v2189
      %v2563 = vsub.f32 %v775, %v2189
      %v2564 = vsub.f32 %v779, %v2192
      %v2565 = vsub.f32 %v781, %v2192
      %v2566 = vsub.f32 %v785, %v2195
      %v2567 = vsub.f32 %v787, %v2195
      %v2568 = vsub.f32 %v791, %v2198
      %v2569 = vsub.f32 %v793, %v2198
      %v2570 = vsub.f32 %v797, %v2201
      %v2571 = vsub.f32 %v799, %v2201
      %v2572 = vsub.f32 %v803, %v2204
      %v2573 = vsub.f32 %v805, %v2204
      %v2574 = vsub.f32 %v809, %v2207
      %v2575 = vsub.f32 %v811, %v2207
      %v2576 = vsub.f32 %v815, %v2210
      %v2577 = vsub.f32 %v817, %v2210
      %v2578 = vsub.f32 %v821, %v2213
      %v2579 = vsub.f32 %v823, %v2213
      %v2580 = vsub.f32 %v827, %v2216
      %v2581 = vsub.f32 %v829, %v2216
      %v2582 = vsub.f32 %v833, %v2219
      %v2583 = vsub.f32 %v835, %v2219
      %v2584 = vsub.f32 %v839, %v2222
      %v2585 = vsub.f32 %v841, %v2222
      %v2586 = vsub.f32 %v845, %v2225
      %v2587 = vsub.f32 %v847, %v2225
      %v2588 = vsub.f32 %v851, %v2228
      %v2589 = vsub.f32 %v853, %v2228
      %v2590 = vsub.f32 %v857, %v2231
      %v2591 = vsub.f32 %v859, %v2231
      %v2592 = vsub.f32 %v863, %v2234
      %v2593 = vsub.f32 %v865, %v2234
      %v2594 = vsub.f32 %v869, %v2237
      %v2595 = vsub.f32 %v871, %v2237
      %v2596 = vsub.f32 %v875, %v2240
      %v2597 = vsub.f32 %v877, %v2240
      %v2598 = vsub.f32 %v881, %v2243
      %v2599 = vsub.f32 %v883, %v2243
      %v2600 = vsub.f32 %v887, %v2246
      %v2601 = vsub.f32 %v889, %v2246
      %v2602 = vsub.f32 %v893, %v2249
      %v2603 = vsub.f32 %v895, %v2249
      %v2604 = vsub.f32 %v899, %v2252
      %v2605 = vsub.f32 %v901, %v2252
      %v2606 = vsub.f32 %v905, %v2255
      %v2607 = vsub.f32 %v907, %v2255
      %v2608 = vsub.f32 %v1136, %v2258
      %v2609 = vsub.f32 %v1138, %v2258
      %v2610 = vsub.f32 %v1142, %v2261
      %v2611 = vsub.f32 %v1144, %v2261
      %v2612 = vsub.f32 %v1148, %v2264
      %v2613 = vsub.f32 %v1150, %v2264
      %v2614 = vsub.f32 %v1154, %v2267
      %v2615 = vsub.f32 %v1156, %v2267
      %v2616 = vsub.f32 %v1160, %v2270
      %v2617 = vsub.f32 %v1162, %v2270
      %v2618 = vsub.f32 %v1166, %v2273
      %v2619 = vsub.f32 %v1168, %v2273
      %v2620 = vsub.f32 %v1172, %v2276
      %v2621 = vsub.f32 %v1174, %v2276
      %v2622 = vsub.f32 %v1178, %v2279
      %v2623 = vsub.f32 %v1180, %v2279
      %v2624 = vsub.f32 %v1184, %v2282
      %v2625 = vsub.f32 %v1186, %v2282
      %v2626 = vsub.f32 %v1190, %v2285
      %v2627 = vsub.f32 %v1192, %v2285
      %v2628 = vsub.f32 %v1196, %v2288
      %v2629 = vsub.f32 %v1198, %v2288
      %v2630 = vsub.f32 %v1202, %v2291
      %v2631 = vsub.f32 %v1204, %v2291
      %v2632 = vsub.f32 %v1208, %v2294
      %v2633 = vsub.f32 %v1210, %v2294
      %v2634 = vsub.f32 %v1214, %v2297
      %v2635 = vsub.f32 %v1216, %v2297
      %v2636 = vsub.f32 %v1220, %v2300
      %v2637 = vsub.f32 %v1222, %v2300
      %v2638 = vsub.f32 %v1226, %v2303
      %v2639 = vsub.f32 %v1228, %v2303
      %v2640 = vsub.f32 %v1232, %v2306
      %v2641 = vsub.f32 %v1234, %v2306
      %v2642 = vsub.f32 %v1238, %v2309
      %v2643 = vsub.f32 %v1240, %v2309
      %v2644 = vsub.f32 %v1244, %v2312
      %v2645 = vsub.f32 %v1246, %v2312
      %v2646 = vsub.f32 %v1250, %v2315
      %v2647 = vsub.f32 %v1252, %v2315
      %v2648 = vsub.f32 %v1256, %v2318
      %v2649 = vsub.f32 %v1258, %v2318
      %v2650 = vsub.f32 %v1262, %v2321
      %v2651 = vsub.f32 %v1264, %v2321
      %v2652 = vsub.f32 %v1268, %v2324
      %v2653 = vsub.f32 %v1270, %v2324
      %v2654 = vsub.f32 %v1274, %v2327
      %v2655 = vsub.f32 %v1276, %v2327
      %v2656 = vsub.f32 %v1280, %v2330
      %v2657 = vsub.f32 %v1282, %v2330
      %v2658 = vsub.f32 %v1286, %v2333
      %v2659 = vsub.f32 %v1288, %v2333
      %v2660 = vsub.f32 %v1292, %v2336
      %v2661 = vsub.f32 %v1294, %v2336
      %v2662 = vsub.f32 %v1298, %v2339
      %v2663 = vsub.f32 %v1300, %v2339
      %v2664 = vsub.f32 %v1304, %v2342
      %v2665 = vsub.f32 %v1306, %v2342
      %v2666 = vsub.f32 %v1310, %v2345
      %v2667 = vsub.f32 %v1312, %v2345
      %v2668 = vsub.f32 %v1316, %v2348
      %v2669 = vsub.f32 %v1318, %v2348
      %v2670 = vsub.f32 %v1322, %v2351
      %v2671 = vsub.f32 %v1324, %v2351
      %v2672 = vsub.f32 %v1553, %v2354
      %v2673 = vsub.f32 %v1555, %v2354
      %v2674 = vsub.f32 %v1559, %v2357
      %v2675 = vsub.f32 %v1561, %v2357
      %v2676 = vsub.f32 %v1565, %v2360
      %v2677 = vsub.f32 %v1567, %v2360
      %v2678 = vsub.f32 %v1571, %v2363
      %v2679 = vsub.f32 %v1573, %v2363
      %v2680 = vsub.f32 %v1577, %v2366
      %v2681 = vsub.f32 %v1579, %v2366
      %v2682 = vsub.f32 %v1583, %v2369
      %v2683 = vsub.f32 %v1585, %v2369
      %v2684 = vsub.f32 %v1589, %v2372
      %v2685 = vsub.f32 %v1591, %v2372
      %v2686 = vsub.f32 %v1595, %v2375
      %v2687 = vsub.f32 %v1597, %v2375
      %v2688 = vsub.f32 %v1601, %v2378
      %v2689 = vsub.f32 %v1603, %v2378
      %v2690 = vsub.f32 %v1607, %v2381
      %v2691 = vsub.f32 %v1609, %v2381
      %v2692 = vsub.f32 %v1613, %v2384
      %v2693 = vsub.f32 %v1615, %v2384
      %v2694 = vsub.f32 %v1619, %v2387
      %v2695 = vsub.f32 %v1621, %v2387
      %v2696 = vsub.f32 %v1625, %v2390
      %v2697 = vsub.f32 %v1627, %v2390
      %v2698 = vsub.f32 %v1631, %v2393
      %v2699 = vsub.f32 %v1633, %v2393
      %v2700 = vsub.f32 %v1637, %v2396
      %v2701 = vsub.f32 %v1639, %v2396
      %v2702 = vsub.f32 %v1643, %v2399
      %v2703 = vsub.f32 %v1645, %v2399
      %v2704 = vsub.f32 %v1649, %v2402
      %v2705 = vsub.f32 %v1651, %v2402
      %v2706 = vsub.f32 %v1655, %v2405
      %v2707 = vsub.f32 %v1657, %v2405
      %v2708 = vsub.f32 %v1661, %v2408
      %v2709 = vsub.f32 %v1663, %v2408
      %v2710 = vsub.f32 %v1667, %v2411
      %v2711 = vsub.f32 %v1669, %v2411
      %v2712 = vsub.f32 %v1673, %v2414
      %v2713 = vsub.f32 %v1675, %v2414
      %v2714 = vsub.f32 %v1679, %v2417
      %v2715 = vsub.f32 %v1681, %v2417
      %v2716 = vsub.f32 %v1685, %v2420
      %v2717 = vsub.f32 %v1687, %v2420
      %v2718 = vsub.f32 %v1691, %v2423
      %v2719 = vsub.f32 %v1693, %v2423
      %v2720 = vsub.f32 %v1697, %v2426
      %v2721 = vsub.f32 %v1699, %v2426
      %v2722 = vsub.f32 %v1703, %v2429
      %v2723 = vsub.f32 %v1705, %v2429
      %v2724 = vsub.f32 %v1709, %v2432
      %v2725 = vsub.f32 %v1711, %v2432
      %v2726 = vsub.f32 %v1715, %v2435
      %v2727 = vsub.f32 %v1717, %v2435
      %v2728 = vsub.f32 %v1721, %v2438
      %v2729 = vsub.f32 %v1723, %v2438
      %v2730 = vsub.f32 %v1727, %v2441
      %v2731 = vsub.f32 %v1729, %v2441
      %v2732 = vsub.f32 %v1733, %v2444
      %v2733 = vsub.f32 %v1735, %v2444
      %v2734 = vsub.f32 %v1739, %v2447
      %v2735 = vsub.f32 %v1741, %v2447
      %v2736 = vsub.f32 %v1970, %v2450
      %v2737 = vsub.f32 %v1972, %v2450
      %v2738 = vsub.f32 %v1976, %v2453
      %v2739 = vsub.f32 %v1978, %v2453
      %v2740 = vsub.f32 %v1982, %v2456
      %v2741 = vsub.f32 %v1984, %v2456
      %v2742 = vsub.f32 %v1988, %v2459
      %v2743 = vsub.f32 %v1990, %v2459
      %v2744 = vsub.f32 %v1994, %v2462
      %v2745 = vsub.f32 %v1996, %v2462
      %v2746 = vsub.f32 %v2000, %v2465
      %v2747 = vsub.f32 %v2002, %v2465
      %v2748 = vsub.f32 %v2006, %v2468
      %v2749 = vsub.f32 %v2008, %v2468
      %v2750 = vsub.f32 %v2012, %v2471
      %v2751 = vsub.f32 %v2014, %v2471
      %v2752 = vsub.f32 %v2018, %v2474
      %v2753 = vsub.f32 %v2020, %v2474
      %v2754 = vsub.f32 %v2024, %v2477
      %v2755 = vsub.f32 %v2026, %v2477
      %v2756 = vsub.f32 %v2030, %v2480
      %v2757 = vsub.f32 %v2032, %v2480
      %v2758 = vsub.f32 %v2036, %v2483
      %v2759 = vsub.f32 %v2038, %v2483
      %v2760 = vsub.f32 %v2042, %v2486
      %v2761 = vsub.f32 %v2044, %v2486
      %v2762 = vsub.f32 %v2048, %v2489
      %v2763 = vsub.f32 %v2050, %v2489
      %v2764 = vsub.f32 %v2054, %v2492
      %v2765 = vsub.f32 %v2056, %v2492
      %v2766 = vsub.f32 %v2060, %v2495
      %v2767 = vsub.f32 %v2062, %v2495
      %v2768 = vsub.f32 %v2066, %v2498
      %v2769 = vsub.f32 %v2068, %v2498
      %v2770 = vsub.f32 %v2072, %v2501
      %v2771 = vsub.f32 %v2074, %v2501
      %v2772 = vsub.f32 %v2078, %v2504
      %v2773 = vsub.f32 %v2080, %v2504
      %v2774 = vsub.f32 %v2084, %v2507
      %v2775 = vsub.f32 %v2086, %v2507
      %v2776 = vsub.f32 %v2090, %v2510
      %v2777 = vsub.f32 %v2092, %v2510
      %v2778 = vsub.f32 %v2096, %v2513
      %v2779 = vsub.f32 %v2098, %v2513
      %v2780 = vsub.f32 %v2102, %v2516
      %v2781 = vsub.f32 %v2104, %v2516
      %v2782 = vsub.f32 %v2108, %v2519
      %v2783 = vsub.f32 %v2110, %v2519
      %v2784 = vsub.f32 %v2114, %v2522
      %v2785 = vsub.f32 %v2116, %v2522
      %v2786 = vsub.f32 %v2120, %v2525
      %v2787 = vsub.f32 %v2122, %v2525
      %v2788 = vsub.f32 %v2126, %v2528
      %v2789 = vsub.f32 %v2128, %v2528
      %v2790 = vsub.f32 %v2132, %v2531
      %v2791 = vsub.f32 %v2134, %v2531
      %v2792 = vsub.f32 %v2138, %v2534
      %v2793 = vsub.f32 %v2140, %v2534
      %v2794 = vsub.f32 %v2144, %v2537
      %v2795 = vsub.f32 %v2146, %v2537
      %v2796 = vsub.f32 %v2150, %v2540
      %v2797 = vsub.f32 %v2152, %v2540
      %v2798 = vsub.f32 %v2156, %v2543
      %v2799 = vsub.f32 %v2158, %v2543
      %v2800 = vmul.f32 %v2544, 1.442695
      %v2801 = vpow.pop %v2800
      %v2802 = vmul.f32 %v2545, 1.442695
      %v2803 = vpow.pop %v2802
      %v2804 = vmul.f32 %v2546, 1.442695
      %v2805 = vpow.pop %v2804
      %v2806 = vmul.f32 %v2547, 1.442695
      %v2807 = vpow.pop %v2806
      %v2808 = vmul.f32 %v2548, 1.442695
      %v2809 = vpow.pop %v2808
      %v2810 = vmul.f32 %v2549, 1.442695
      %v2811 = vpow.pop %v2810
      %v2812 = vmul.f32 %v2550, 1.442695
      %v2813 = vpow.pop %v2812
      %v2814 = vmul.f32 %v2551, 1.442695
      %v2815 = vpow.pop %v2814
      %v2816 = vmul.f32 %v2552, 1.442695
      %v2817 = vpow.pop %v2816
      %v2818 = vmul.f32 %v2553, 1.442695
      %v2819 = vpow.pop %v2818
      %v2820 = vmul.f32 %v2554, 1.442695
      %v2821 = vpow.pop %v2820
      %v2822 = vmul.f32 %v2555, 1.442695
      %v2823 = vpow.pop %v2822
      %v2824 = vmul.f32 %v2556, 1.442695
      %v2825 = vpow.pop %v2824
      %v2826 = vmul.f32 %v2557, 1.442695
      %v2827 = vpow.pop %v2826
      %v2828 = vmul.f32 %v2558, 1.442695
      %v2829 = vpow.pop %v2828
      %v2830 = vmul.f32 %v2559, 1.442695
      %v2831 = vpow.pop %v2830
      %v2832 = vmul.f32 %v2560, 1.442695
      %v2833 = vpow.pop %v2832
      %v2834 = vmul.f32 %v2561, 1.442695
      %v2835 = vpow.pop %v2834
      %v2836 = vmul.f32 %v2562, 1.442695
      %v2837 = vpow.pop %v2836
      %v2838 = vmul.f32 %v2563, 1.442695
      %v2839 = vpow.pop %v2838
      %v2840 = vmul.f32 %v2564, 1.442695
      %v2841 = vpow.pop %v2840
      %v2842 = vmul.f32 %v2565, 1.442695
      %v2843 = vpow.pop %v2842
      %v2844 = vmul.f32 %v2566, 1.442695
      %v2845 = vpow.pop %v2844
      %v2846 = vmul.f32 %v2567, 1.442695
      %v2847 = vpow.pop %v2846
      %v2848 = vmul.f32 %v2568, 1.442695
      %v2849 = vpow.pop %v2848
      %v2850 = vmul.f32 %v2569, 1.442695
      %v2851 = vpow.pop %v2850
      %v2852 = vmul.f32 %v2570, 1.442695
      %v2853 = vpow.pop %v2852
      %v2854 = vmul.f32 %v2571, 1.442695
      %v2855 = vpow.pop %v2854
      %v2856 = vmul.f32 %v2572, 1.442695
      %v2857 = vpow.pop %v2856
      %v2858 = vmul.f32 %v2573, 1.442695
      %v2859 = vpow.pop %v2858
      %v2860 = vmul.f32 %v2574, 1.442695
      %v2861 = vpow.pop %v2860
      %v2862 = vmul.f32 %v2575, 1.442695
      %v2863 = vpow.pop %v2862
      %v2864 = vmul.f32 %v2576, 1.442695
      %v2865 = vpow.pop %v2864
      %v2866 = vmul.f32 %v2577, 1.442695
      %v2867 = vpow.pop %v2866
      %v2868 = vmul.f32 %v2578, 1.442695
      %v2869 = vpow.pop %v2868
      %v2870 = vmul.f32 %v2579, 1.442695
      %v2871 = vpow.pop %v2870
      %v2872 = vmul.f32 %v2580, 1.442695
      %v2873 = vpow.pop %v2872
      %v2874 = vmul.f32 %v2581, 1.442695
      %v2875 = vpow.pop %v2874
      %v2876 = vmul.f32 %v2582, 1.442695
      %v2877 = vpow.pop %v2876
      %v2878 = vmul.f32 %v2583, 1.442695
      %v2879 = vpow.pop %v2878
      %v2880 = vmul.f32 %v2584, 1.442695
      %v2881 = vpow.pop %v2880
      %v2882 = vmul.f32 %v2585, 1.442695
      %v2883 = vpow.pop %v2882
      %v2884 = vmul.f32 %v2586, 1.442695
      %v2885 = vpow.pop %v2884
      %v2886 = vmul.f32 %v2587, 1.442695
      %v2887 = vpow.pop %v2886
      %v2888 = vmul.f32 %v2588, 1.442695
      %v2889 = vpow.pop %v2888
      %v2890 = vmul.f32 %v2589, 1.442695
      %v2891 = vpow.pop %v2890
      %v2892 = vmul.f32 %v2590, 1.442695
      %v2893 = vpow.pop %v2892
      %v2894 = vmul.f32 %v2591, 1.442695
      %v2895 = vpow.pop %v2894
      %v2896 = vmul.f32 %v2592, 1.442695
      %v2897 = vpow.pop %v2896
      %v2898 = vmul.f32 %v2593, 1.442695
      %v2899 = vpow.pop %v2898
      %v2900 = vmul.f32 %v2594, 1.442695
      %v2901 = vpow.pop %v2900
      %v2902 = vmul.f32 %v2595, 1.442695
      %v2903 = vpow.pop %v2902
      %v2904 = vmul.f32 %v2596, 1.442695
      %v2905 = vpow.pop %v2904
      %v2906 = vmul.f32 %v2597, 1.442695
      %v2907 = vpow.pop %v2906
      %v2908 = vmul.f32 %v2598, 1.442695
      %v2909 = vpow.pop %v2908
      %v2910 = vmul.f32 %v2599, 1.442695
      %v2911 = vpow.pop %v2910
      %v2912 = vmul.f32 %v2600, 1.442695
      %v2913 = vpow.pop %v2912
      %v2914 = vmul.f32 %v2601, 1.442695
      %v2915 = vpow.pop %v2914
      %v2916 = vmul.f32 %v2602, 1.442695
      %v2917 = vpow.pop %v2916
      %v2918 = vmul.f32 %v2603, 1.442695
      %v2919 = vpow.pop %v2918
      %v2920 = vmul.f32 %v2604, 1.442695
      %v2921 = vpow.pop %v2920
      %v2922 = vmul.f32 %v2605, 1.442695
      %v2923 = vpow.pop %v2922
      %v2924 = vmul.f32 %v2606, 1.442695
      %v2925 = vpow.pop %v2924
      %v2926 = vmul.f32 %v2607, 1.442695
      %v2927 = vpow.pop %v2926
      %v2928 = vmul.f32 %v2608, 1.442695
      %v2929 = vpow.pop %v2928
      %v2930 = vmul.f32 %v2609, 1.442695
      %v2931 = vpow.pop %v2930
      %v2932 = vmul.f32 %v2610, 1.442695
      %v2933 = vpow.pop %v2932
      %v2934 = vmul.f32 %v2611, 1.442695
      %v2935 = vpow.pop %v2934
      %v2936 = vmul.f32 %v2612, 1.442695
      %v2937 = vpow.pop %v2936
      %v2938 = vmul.f32 %v2613, 1.442695
      %v2939 = vpow.pop %v2938
      %v2940 = vmul.f32 %v2614, 1.442695
      %v2941 = vpow.pop %v2940
      %v2942 = vmul.f32 %v2615, 1.442695
      %v2943 = vpow.pop %v2942
      %v2944 = vmul.f32 %v2616, 1.442695
      %v2945 = vpow.pop %v2944
      %v2946 = vmul.f32 %v2617, 1.442695
      %v2947 = vpow.pop %v2946
      %v2948 = vmul.f32 %v2618, 1.442695
      %v2949 = vpow.pop %v2948
      %v2950 = vmul.f32 %v2619, 1.442695
      %v2951 = vpow.pop %v2950
      %v2952 = vmul.f32 %v2620, 1.442695
      %v2953 = vpow.pop %v2952
      %v2954 = vmul.f32 %v2621, 1.442695
      %v2955 = vpow.pop %v2954
      %v2956 = vmul.f32 %v2622, 1.442695
      %v2957 = vpow.pop %v2956
      %v2958 = vmul.f32 %v2623, 1.442695
      %v2959 = vpow.pop %v2958
      %v2960 = vmul.f32 %v2624, 1.442695
      %v2961 = vpow.pop %v2960
      %v2962 = vmul.f32 %v2625, 1.442695
      %v2963 = vpow.pop %v2962
      %v2964 = vmul.f32 %v2626, 1.442695
      %v2965 = vpow.pop %v2964
      %v2966 = vmul.f32 %v2627, 1.442695
      %v2967 = vpow.pop %v2966
      %v2968 = vmul.f32 %v2628, 1.442695
      %v2969 = vpow.pop %v2968
      %v2970 = vmul.f32 %v2629, 1.442695
      %v2971 = vpow.pop %v2970
      %v2972 = vmul.f32 %v2630, 1.442695
      %v2973 = vpow.pop %v2972
      %v2974 = vmul.f32 %v2631, 1.442695
      %v2975 = vpow.pop %v2974
      %v2976 = vmul.f32 %v2632, 1.442695
      %v2977 = vpow.pop %v2976
      %v2978 = vmul.f32 %v2633, 1.442695
      %v2979 = vpow.pop %v2978
      %v2980 = vmul.f32 %v2634, 1.442695
      %v2981 = vpow.pop %v2980
      %v2982 = vmul.f32 %v2635, 1.442695
      %v2983 = vpow.pop %v2982
      %v2984 = vmul.f32 %v2636, 1.442695
      %v2985 = vpow.pop %v2984
      %v2986 = vmul.f32 %v2637, 1.442695
      %v2987 = vpow.pop %v2986
      %v2988 = vmul.f32 %v2638, 1.442695
      %v2989 = vpow.pop %v2988
      %v2990 = vmul.f32 %v2639, 1.442695
      %v2991 = vpow.pop %v2990
      %v2992 = vmul.f32 %v2640, 1.442695
      %v2993 = vpow.pop %v2992
      %v2994 = vmul.f32 %v2641, 1.442695
      %v2995 = vpow.pop %v2994
      %v2996 = vmul.f32 %v2642, 1.442695
      %v2997 = vpow.pop %v2996
      %v2998 = vmul.f32 %v2643, 1.442695
      %v2999 = vpow.pop %v2998
      %v3000 = vmul.f32 %v2644, 1.442695
      %v3001 = vpow.pop %v3000
      %v3002 = vmul.f32 %v2645, 1.442695
      %v3003 = vpow.pop %v3002
      %v3004 = vmul.f32 %v2646, 1.442695
      %v3005 = vpow.pop %v3004
      %v3006 = vmul.f32 %v2647, 1.442695
      %v3007 = vpow.pop %v3006
      %v3008 = vmul.f32 %v2648, 1.442695
      %v3009 = vpow.pop %v3008
      %v3010 = vmul.f32 %v2649, 1.442695
      %v3011 = vpow.pop %v3010
      %v3012 = vmul.f32 %v2650, 1.442695
      %v3013 = vpow.pop %v3012
      %v3014 = vmul.f32 %v2651, 1.442695
      %v3015 = vpow.pop %v3014
      %v3016 = vmul.f32 %v2652, 1.442695
      %v3017 = vpow.pop %v3016
      %v3018 = vmul.f32 %v2653, 1.442695
      %v3019 = vpow.pop %v3018
      %v3020 = vmul.f32 %v2654, 1.442695
      %v3021 = vpow.pop %v3020
      %v3022 = vmul.f32 %v2655, 1.442695
      %v3023 = vpow.pop %v3022
      %v3024 = vmul.f32 %v2656, 1.442695
      %v3025 = vpow.pop %v3024
      %v3026 = vmul.f32 %v2657, 1.442695
      %v3027 = vpow.pop %v3026
      %v3028 = vmul.f32 %v2658, 1.442695
      %v3029 = vpow.pop %v3028
      %v3030 = vmul.f32 %v2659, 1.442695
      %v3031 = vpow.pop %v3030
      %v3032 = vmul.f32 %v2660, 1.442695
      %v3033 = vpow.pop %v3032
      %v3034 = vmul.f32 %v2661, 1.442695
      %v3035 = vpow.pop %v3034
      %v3036 = vmul.f32 %v2662, 1.442695
      %v3037 = vpow.pop %v3036
      %v3038 = vmul.f32 %v2663, 1.442695
      %v3039 = vpow.pop %v3038
      %v3040 = vmul.f32 %v2664, 1.442695
      %v3041 = vpow.pop %v3040
      %v3042 = vmul.f32 %v2665, 1.442695
      %v3043 = vpow.pop %v3042
      %v3044 = vmul.f32 %v2666, 1.442695
      %v3045 = vpow.pop %v3044
      %v3046 = vmul.f32 %v2667, 1.442695
      %v3047 = vpow.pop %v3046
      %v3048 = vmul.f32 %v2668, 1.442695
      %v3049 = vpow.pop %v3048
      %v3050 = vmul.f32 %v2669, 1.442695
      %v3051 = vpow.pop %v3050
      %v3052 = vmul.f32 %v2670, 1.442695
      %v3053 = vpow.pop %v3052
      %v3054 = vmul.f32 %v2671, 1.442695
      %v3055 = vpow.pop %v3054
      %v3056 = vmul.f32 %v2672, 1.442695
      %v3057 = vpow.pop %v3056
      %v3058 = vmul.f32 %v2673, 1.442695
      %v3059 = vpow.pop %v3058
      %v3060 = vmul.f32 %v2674, 1.442695
      %v3061 = vpow.pop %v3060
      %v3062 = vmul.f32 %v2675, 1.442695
      %v3063 = vpow.pop %v3062
      %v3064 = vmul.f32 %v2676, 1.442695
      %v3065 = vpow.pop %v3064
      %v3066 = vmul.f32 %v2677, 1.442695
      %v3067 = vpow.pop %v3066
      %v3068 = vmul.f32 %v2678, 1.442695
      %v3069 = vpow.pop %v3068
      %v3070 = vmul.f32 %v2679, 1.442695
      %v3071 = vpow.pop %v3070
      %v3072 = vmul.f32 %v2680, 1.442695
      %v3073 = vpow.pop %v3072
      %v3074 = vmul.f32 %v2681, 1.442695
      %v3075 = vpow.pop %v3074
      %v3076 = vmul.f32 %v2682, 1.442695
      %v3077 = vpow.pop %v3076
      %v3078 = vmul.f32 %v2683, 1.442695
      %v3079 = vpow.pop %v3078
      %v3080 = vmul.f32 %v2684, 1.442695
      %v3081 = vpow.pop %v3080
      %v3082 = vmul.f32 %v2685, 1.442695
      %v3083 = vpow.pop %v3082
      %v3084 = vmul.f32 %v2686, 1.442695
      %v3085 = vpow.pop %v3084
      %v3086 = vmul.f32 %v2687, 1.442695
      %v3087 = vpow.pop %v3086
      %v3088 = vmul.f32 %v2688, 1.442695
      %v3089 = vpow.pop %v3088
      %v3090 = vmul.f32 %v2689, 1.442695
      %v3091 = vpow.pop %v3090
      %v3092 = vmul.f32 %v2690, 1.442695
      %v3093 = vpow.pop %v3092
      %v3094 = vmul.f32 %v2691, 1.442695
      %v3095 = vpow.pop %v3094
      %v3096 = vmul.f32 %v2692, 1.442695
      %v3097 = vpow.pop %v3096
      %v3098 = vmul.f32 %v2693, 1.442695
      %v3099 = vpow.pop %v3098
      %v3100 = vmul.f32 %v2694, 1.442695
      %v3101 = vpow.pop %v3100
      %v3102 = vmul.f32 %v2695, 1.442695
      %v3103 = vpow.pop %v3102
      %v3104 = vmul.f32 %v2696, 1.442695
      %v3105 = vpow.pop %v3104
      %v3106 = vmul.f32 %v2697, 1.442695
      %v3107 = vpow.pop %v3106
      %v3108 = vmul.f32 %v2698, 1.442695
      %v3109 = vpow.pop %v3108
      %v3110 = vmul.f32 %v2699, 1.442695
      %v3111 = vpow.pop %v3110
      %v3112 = vmul.f32 %v2700, 1.442695
      %v3113 = vpow.pop %v3112
      %v3114 = vmul.f32 %v2701, 1.442695
      %v3115 = vpow.pop %v3114
      %v3116 = vmul.f32 %v2702, 1.442695
      %v3117 = vpow.pop %v3116
      %v3118 = vmul.f32 %v2703, 1.442695
      %v3119 = vpow.pop %v3118
      %v3120 = vmul.f32 %v2704, 1.442695
      %v3121 = vpow.pop %v3120
      %v3122 = vmul.f32 %v2705, 1.442695
      %v3123 = vpow.pop %v3122
      %v3124 = vmul.f32 %v2706, 1.442695
      %v3125 = vpow.pop %v3124
      %v3126 = vmul.f32 %v2707, 1.442695
      %v3127 = vpow.pop %v3126
      %v3128 = vmul.f32 %v2708, 1.442695
      %v3129 = vpow.pop %v3128
      %v3130 = vmul.f32 %v2709, 1.442695
      %v3131 = vpow.pop %v3130
      %v3132 = vmul.f32 %v2710, 1.442695
      %v3133 = vpow.pop %v3132
      %v3134 = vmul.f32 %v2711, 1.442695
      %v3135 = vpow.pop %v3134
      %v3136 = vmul.f32 %v2712, 1.442695
      %v3137 = vpow.pop %v3136
      %v3138 = vmul.f32 %v2713, 1.442695
      %v3139 = vpow.pop %v3138
      %v3140 = vmul.f32 %v2714, 1.442695
      %v3141 = vpow.pop %v3140
      %v3142 = vmul.f32 %v2715, 1.442695
      %v3143 = vpow.pop %v3142
      %v3144 = vmul.f32 %v2716, 1.442695
      %v3145 = vpow.pop %v3144
      %v3146 = vmul.f32 %v2717, 1.442695
      %v3147 = vpow.pop %v3146
      %v3148 = vmul.f32 %v2718, 1.442695
      %v3149 = vpow.pop %v3148
      %v3150 = vmul.f32 %v2719, 1.442695
      %v3151 = vpow.pop %v3150
      %v3152 = vmul.f32 %v2720, 1.442695
      %v3153 = vpow.pop %v3152
      %v3154 = vmul.f32 %v2721, 1.442695
      %v3155 = vpow.pop %v3154
      %v3156 = vmul.f32 %v2722, 1.442695
      %v3157 = vpow.pop %v3156
      %v3158 = vmul.f32 %v2723, 1.442695
      %v3159 = vpow.pop %v3158
      %v3160 = vmul.f32 %v2724, 1.442695
      %v3161 = vpow.pop %v3160
      %v3162 = vmul.f32 %v2725, 1.442695
      %v3163 = vpow.pop %v3162
      %v3164 = vmul.f32 %v2726, 1.442695
      %v3165 = vpow.pop %v3164
      %v3166 = vmul.f32 %v2727, 1.442695
      %v3167 = vpow.pop %v3166
      %v3168 = vmul.f32 %v2728, 1.442695
      %v3169 = vpow.pop %v3168
      %v3170 = vmul.f32 %v2729, 1.442695
      %v3171 = vpow.pop %v3170
      %v3172 = vmul.f32 %v2730, 1.442695
      %v3173 = vpow.pop %v3172
      %v3174 = vmul.f32 %v2731, 1.442695
      %v3175 = vpow.pop %v3174
      %v3176 = vmul.f32 %v2732, 1.442695
      %v3177 = vpow.pop %v3176
      %v3178 = vmul.f32 %v2733, 1.442695
      %v3179 = vpow.pop %v3178
      %v3180 = vmul.f32 %v2734, 1.442695
      %v3181 = vpow.pop %v3180
      %v3182 = vmul.f32 %v2735, 1.442695
      %v3183 = vpow.pop %v3182
      %v3184 = vmul.f32 %v2736, 1.442695
      %v3185 = vpow.pop %v3184
      %v3186 = vmul.f32 %v2737, 1.442695
      %v3187 = vpow.pop %v3186
      %v3188 = vmul.f32 %v2738, 1.442695
      %v3189 = vpow.pop %v3188
      %v3190 = vmul.f32 %v2739, 1.442695
      %v3191 = vpow.pop %v3190
      %v3192 = vmul.f32 %v2740, 1.442695
      %v3193 = vpow.pop %v3192
      %v3194 = vmul.f32 %v2741, 1.442695
      %v3195 = vpow.pop %v3194
      %v3196 = vmul.f32 %v2742, 1.442695
      %v3197 = vpow.pop %v3196
      %v3198 = vmul.f32 %v2743, 1.442695
      %v3199 = vpow.pop %v3198
      %v3200 = vmul.f32 %v2744, 1.442695
      %v3201 = vpow.pop %v3200
      %v3202 = vmul.f32 %v2745, 1.442695
      %v3203 = vpow.pop %v3202
      %v3204 = vmul.f32 %v2746, 1.442695
      %v3205 = vpow.pop %v3204
      %v3206 = vmul.f32 %v2747, 1.442695
      %v3207 = vpow.pop %v3206
      %v3208 = vmul.f32 %v2748, 1.442695
      %v3209 = vpow.pop %v3208
      %v3210 = vmul.f32 %v2749, 1.442695
      %v3211 = vpow.pop %v3210
      %v3212 = vmul.f32 %v2750, 1.442695
      %v3213 = vpow.pop %v3212
      %v3214 = vmul.f32 %v2751, 1.442695
      %v3215 = vpow.pop %v3214
      %v3216 = vmul.f32 %v2752, 1.442695
      %v3217 = vpow.pop %v3216
      %v3218 = vmul.f32 %v2753, 1.442695
      %v3219 = vpow.pop %v3218
      %v3220 = vmul.f32 %v2754, 1.442695
      %v3221 = vpow.pop %v3220
      %v3222 = vmul.f32 %v2755, 1.442695
      %v3223 = vpow.pop %v3222
      %v3224 = vmul.f32 %v2756, 1.442695
      %v3225 = vpow.pop %v3224
      %v3226 = vmul.f32 %v2757, 1.442695
      %v3227 = vpow.pop %v3226
      %v3228 = vmul.f32 %v2758, 1.442695
      %v3229 = vpow.pop %v3228
      %v3230 = vmul.f32 %v2759, 1.442695
      %v3231 = vpow.pop %v3230
      %v3232 = vmul.f32 %v2760, 1.442695
      %v3233 = vpow.pop %v3232
      %v3234 = vmul.f32 %v2761, 1.442695
      %v3235 = vpow.pop %v3234
      %v3236 = vmul.f32 %v2762, 1.442695
      %v3237 = vpow.pop %v3236
      %v3238 = vmul.f32 %v2763, 1.442695
      %v3239 = vpow.pop %v3238
      %v3240 = vmul.f32 %v2764, 1.442695
      %v3241 = vpow.pop %v3240
      %v3242 = vmul.f32 %v2765, 1.442695
      %v3243 = vpow.pop %v3242
      %v3244 = vmul.f32 %v2766, 1.442695
      %v3245 = vpow.pop %v3244
      %v3246 = vmul.f32 %v2767, 1.442695
      %v3247 = vpow.pop %v3246
      %v3248 = vmul.f32 %v2768, 1.442695
      %v3249 = vpow.pop %v3248
      %v3250 = vmul.f32 %v2769, 1.442695
      %v3251 = vpow.pop %v3250
      %v3252 = vmul.f32 %v2770, 1.442695
      %v3253 = vpow.pop %v3252
      %v3254 = vmul.f32 %v2771, 1.442695
      %v3255 = vpow.pop %v3254
      %v3256 = vmul.f32 %v2772, 1.442695
      %v3257 = vpow.pop %v3256
      %v3258 = vmul.f32 %v2773, 1.442695
      %v3259 = vpow.pop %v3258
      %v3260 = vmul.f32 %v2774, 1.442695
      %v3261 = vpow.pop %v3260
      %v3262 = vmul.f32 %v2775, 1.442695
      %v3263 = vpow.pop %v3262
      %v3264 = vmul.f32 %v2776, 1.442695
      %v3265 = vpow.pop %v3264
      %v3266 = vmul.f32 %v2777, 1.442695
      %v3267 = vpow.pop %v3266
      %v3268 = vmul.f32 %v2778, 1.442695
      %v3269 = vpow.pop %v3268
      %v3270 = vmul.f32 %v2779, 1.442695
      %v3271 = vpow.pop %v3270
      %v3272 = vmul.f32 %v2780, 1.442695
      %v3273 = vpow.pop %v3272
      %v3274 = vmul.f32 %v2781, 1.442695
      %v3275 = vpow.pop %v3274
      %v3276 = vmul.f32 %v2782, 1.442695
      %v3277 = vpow.pop %v3276
      %v3278 = vmul.f32 %v2783, 1.442695
      %v3279 = vpow.pop %v3278
      %v3280 = vmul.f32 %v2784, 1.442695
      %v3281 = vpow.pop %v3280
      %v3282 = vmul.f32 %v2785, 1.442695
      %v3283 = vpow.pop %v3282
      %v3284 = vmul.f32 %v2786, 1.442695
      %v3285 = vpow.pop %v3284
      %v3286 = vmul.f32 %v2787, 1.442695
      %v3287 = vpow.pop %v3286
      %v3288 = vmul.f32 %v2788, 1.442695
      %v3289 = vpow.pop %v3288
      %v3290 = vmul.f32 %v2789, 1.442695
      %v3291 = vpow.pop %v3290
      %v3292 = vmul.f32 %v2790, 1.442695
      %v3293 = vpow.pop %v3292
      %v3294 = vmul.f32 %v2791, 1.442695
      %v3295 = vpow.pop %v3294
      %v3296 = vmul.f32 %v2792, 1.442695
      %v3297 = vpow.pop %v3296
      %v3298 = vmul.f32 %v2793, 1.442695
      %v3299 = vpow.pop %v3298
      %v3300 = vmul.f32 %v2794, 1.442695
      %v3301 = vpow.pop %v3300
      %v3302 = vmul.f32 %v2795, 1.442695
      %v3303 = vpow.pop %v3302
      %v3304 = vmul.f32 %v2796, 1.442695
      %v3305 = vpow.pop %v3304
      %v3306 = vmul.f32 %v2797, 1.442695
      %v3307 = vpow.pop %v3306
      %v3308 = vmul.f32 %v2798, 1.442695
      %v3309 = vpow.pop %v3308
      %v3310 = vmul.f32 %v2799, 1.442695
      %v3311 = vpow.pop %v3310
      %v3312 = vadd.f32 %v2801, %v2803
      %3313 = vadd.xlane.f32.xlu0 %v3312
      %v3314 = vpop.xlane.xlu0 %3313
      %v3315 = vadd.f32 %v2805, %v2807
      %3316 = vadd.xlane.f32.xlu0 %v3315
      %v3317 = vpop.xlane.xlu0 %3316
      %v3318 = vadd.f32 %v2809, %v2811
      %3319 = vadd.xlane.f32.xlu0 %v3318
      %v3320 = vpop.xlane.xlu0 %3319
      %v3321 = vadd.f32 %v2813, %v2815
      %3322 = vadd.xlane.f32.xlu0 %v3321
      %v3323 = vpop.xlane.xlu0 %3322
      %v3324 = vadd.f32 %v2817, %v2819
      %3325 = vadd.xlane.f32.xlu0 %v3324
      %v3326 = vpop.xlane.xlu0 %3325
      %v3327 = vadd.f32 %v2821, %v2823
      %3328 = vadd.xlane.f32.xlu0 %v3327
      %v3329 = vpop.xlane.xlu0 %3328
      %v3330 = vadd.f32 %v2825, %v2827
      %3331 = vadd.xlane.f32.xlu0 %v3330
      %v3332 = vpop.xlane.xlu0 %3331
      %v3333 = vadd.f32 %v2829, %v2831
      %3334 = vadd.xlane.f32.xlu0 %v3333
      %v3335 = vpop.xlane.xlu0 %3334
      %v3336 = vadd.f32 %v2833, %v2835
      %3337 = vadd.xlane.f32.xlu0 %v3336
      %v3338 = vpop.xlane.xlu0 %3337
      %v3339 = vadd.f32 %v2837, %v2839
      %3340 = vadd.xlane.f32.xlu0 %v3339
      %v3341 = vpop.xlane.xlu0 %3340
      %v3342 = vadd.f32 %v2841, %v2843
      %3343 = vadd.xlane.f32.xlu0 %v3342
      %v3344 = vpop.xlane.xlu0 %3343
      %v3345 = vadd.f32 %v2845, %v2847
      %3346 = vadd.xlane.f32.xlu0 %v3345
      %v3347 = vpop.xlane.xlu0 %3346
      %v3348 = vadd.f32 %v2849, %v2851
      %3349 = vadd.xlane.f32.xlu0 %v3348
      %v3350 = vpop.xlane.xlu0 %3349
      %v3351 = vadd.f32 %v2853, %v2855
      %3352 = vadd.xlane.f32.xlu0 %v3351
      %v3353 = vpop.xlane.xlu0 %3352
      %v3354 = vadd.f32 %v2857, %v2859
      %3355 = vadd.xlane.f32.xlu0 %v3354
      %v3356 = vpop.xlane.xlu0 %3355
      %v3357 = vadd.f32 %v2861, %v2863
      %3358 = vadd.xlane.f32.xlu0 %v3357
      %v3359 = vpop.xlane.xlu0 %3358
      %v3360 = vadd.f32 %v2865, %v2867
      %3361 = vadd.xlane.f32.xlu0 %v3360
      %v3362 = vpop.xlane.xlu0 %3361
      %v3363 = vadd.f32 %v2869, %v2871
      %3364 = vadd.xlane.f32.xlu0 %v3363
      %v3365 = vpop.xlane.xlu0 %3364
      %v3366 = vadd.f32 %v2873, %v2875
      %3367 = vadd.xlane.f32.xlu0 %v3366
      %v3368 = vpop.xlane.xlu0 %3367
      %v3369 = vadd.f32 %v2877, %v2879
      %3370 = vadd.xlane.f32.xlu0 %v3369
      %v3371 = vpop.xlane.xlu0 %3370
      %v3372 = vadd.f32 %v2881, %v2883
      %3373 = vadd.xlane.f32.xlu0 %v3372
      %v3374 = vpop.xlane.xlu0 %3373
      %v3375 = vadd.f32 %v2885, %v2887
      %3376 = vadd.xlane.f32.xlu0 %v3375
      %v3377 = vpop.xlane.xlu0 %3376
      %v3378 = vadd.f32 %v2889, %v2891
      %3379 = vadd.xlane.f32.xlu0 %v3378
      %v3380 = vpop.xlane.xlu0 %3379
      %v3381 = vadd.f32 %v2893, %v2895
      %3382 = vadd.xlane.f32.xlu0 %v3381
      %v3383 = vpop.xlane.xlu0 %3382
      %v3384 = vadd.f32 %v2897, %v2899
      %3385 = vadd.xlane.f32.xlu0 %v3384
      %v3386 = vpop.xlane.xlu0 %3385
      %v3387 = vadd.f32 %v2901, %v2903
      %3388 = vadd.xlane.f32.xlu0 %v3387
      %v3389 = vpop.xlane.xlu0 %3388
      %v3390 = vadd.f32 %v2905, %v2907
      %3391 = vadd.xlane.f32.xlu0 %v3390
      %v3392 = vpop.xlane.xlu0 %3391
      %v3393 = vadd.f32 %v2909, %v2911
      %3394 = vadd.xlane.f32.xlu0 %v3393
      %v3395 = vpop.xlane.xlu0 %3394
      %v3396 = vadd.f32 %v2913, %v2915
      %3397 = vadd.xlane.f32.xlu0 %v3396
      %v3398 = vpop.xlane.xlu0 %3397
      %v3399 = vadd.f32 %v2917, %v2919
      %3400 = vadd.xlane.f32.xlu0 %v3399
      %v3401 = vpop.xlane.xlu0 %3400
      %v3402 = vadd.f32 %v2921, %v2923
      %3403 = vadd.xlane.f32.xlu0 %v3402
      %v3404 = vpop.xlane.xlu0 %3403
      %v3405 = vadd.f32 %v2925, %v2927
      %3406 = vadd.xlane.f32.xlu0 %v3405
      %v3407 = vpop.xlane.xlu0 %3406
      %v3408 = vadd.f32 %v2929, %v2931
      %3409 = vadd.xlane.f32.xlu0 %v3408
      %v3410 = vpop.xlane.xlu0 %3409
      %v3411 = vadd.f32 %v2933, %v2935
      %3412 = vadd.xlane.f32.xlu0 %v3411
      %v3413 = vpop.xlane.xlu0 %3412
      %v3414 = vadd.f32 %v2937, %v2939
      %3415 = vadd.xlane.f32.xlu0 %v3414
      %v3416 = vpop.xlane.xlu0 %3415
      %v3417 = vadd.f32 %v2941, %v2943
      %3418 = vadd.xlane.f32.xlu0 %v3417
      %v3419 = vpop.xlane.xlu0 %3418
      %v3420 = vadd.f32 %v2945, %v2947
      %3421 = vadd.xlane.f32.xlu0 %v3420
      %v3422 = vpop.xlane.xlu0 %3421
      %v3423 = vadd.f32 %v2949, %v2951
      %3424 = vadd.xlane.f32.xlu0 %v3423
      %v3425 = vpop.xlane.xlu0 %3424
      %v3426 = vadd.f32 %v2953, %v2955
      %3427 = vadd.xlane.f32.xlu0 %v3426
      %v3428 = vpop.xlane.xlu0 %3427
      %v3429 = vadd.f32 %v2957, %v2959
      %3430 = vadd.xlane.f32.xlu0 %v3429
      %v3431 = vpop.xlane.xlu0 %3430
      %v3432 = vadd.f32 %v2961, %v2963
      %3433 = vadd.xlane.f32.xlu0 %v3432
      %v3434 = vpop.xlane.xlu0 %3433
      %v3435 = vadd.f32 %v2965, %v2967
      %3436 = vadd.xlane.f32.xlu0 %v3435
      %v3437 = vpop.xlane.xlu0 %3436
      %v3438 = vadd.f32 %v2969, %v2971
      %3439 = vadd.xlane.f32.xlu0 %v3438
      %v3440 = vpop.xlane.xlu0 %3439
      %v3441 = vadd.f32 %v2973, %v2975
      %3442 = vadd.xlane.f32.xlu0 %v3441
      %v3443 = vpop.xlane.xlu0 %3442
      %v3444 = vadd.f32 %v2977, %v2979
      %3445 = vadd.xlane.f32.xlu0 %v3444
      %v3446 = vpop.xlane.xlu0 %3445
      %v3447 = vadd.f32 %v2981, %v2983
      %3448 = vadd.xlane.f32.xlu0 %v3447
      %v3449 = vpop.xlane.xlu0 %3448
      %v3450 = vadd.f32 %v2985, %v2987
      %3451 = vadd.xlane.f32.xlu0 %v3450
      %v3452 = vpop.xlane.xlu0 %3451
      %v3453 = vadd.f32 %v2989, %v2991
      %3454 = vadd.xlane.f32.xlu0 %v3453
      %v3455 = vpop.xlane.xlu0 %3454
      %v3456 = vadd.f32 %v2993, %v2995
      %3457 = vadd.xlane.f32.xlu0 %v3456
      %v3458 = vpop.xlane.xlu0 %3457
      %v3459 = vadd.f32 %v2997, %v2999
      %3460 = vadd.xlane.f32.xlu0 %v3459
      %v3461 = vpop.xlane.xlu0 %3460
      %v3462 = vadd.f32 %v3001, %v3003
      %3463 = vadd.xlane.f32.xlu0 %v3462
      %v3464 = vpop.xlane.xlu0 %3463
      %v3465 = vadd.f32 %v3005, %v3007
      %3466 = vadd.xlane.f32.xlu0 %v3465
      %v3467 = vpop.xlane.xlu0 %3466
      %v3468 = vadd.f32 %v3009, %v3011
      %3469 = vadd.xlane.f32.xlu0 %v3468
      %v3470 = vpop.xlane.xlu0 %3469
      %v3471 = vadd.f32 %v3013, %v3015
      %3472 = vadd.xlane.f32.xlu0 %v3471
      %v3473 = vpop.xlane.xlu0 %3472
      %v3474 = vadd.f32 %v3017, %v3019
      %3475 = vadd.xlane.f32.xlu0 %v3474
      %v3476 = vpop.xlane.xlu0 %3475
      %v3477 = vadd.f32 %v3021, %v3023
      %3478 = vadd.xlane.f32.xlu0 %v3477
      %v3479 = vpop.xlane.xlu0 %3478
      %v3480 = vadd.f32 %v3025, %v3027
      %3481 = vadd.xlane.f32.xlu0 %v3480
      %v3482 = vpop.xlane.xlu0 %3481
      %v3483 = vadd.f32 %v3029, %v3031
      %3484 = vadd.xlane.f32.xlu0 %v3483
      %v3485 = vpop.xlane.xlu0 %3484
      %v3486 = vadd.f32 %v3033, %v3035
      %3487 = vadd.xlane.f32.xlu0 %v3486
      %v3488 = vpop.xlane.xlu0 %3487
      %v3489 = vadd.f32 %v3037, %v3039
      %3490 = vadd.xlane.f32.xlu0 %v3489
      %v3491 = vpop.xlane.xlu0 %3490
      %v3492 = vadd.f32 %v3041, %v3043
      %3493 = vadd.xlane.f32.xlu0 %v3492
      %v3494 = vpop.xlane.xlu0 %3493
      %v3495 = vadd.f32 %v3045, %v3047
      %3496 = vadd.xlane.f32.xlu0 %v3495
      %v3497 = vpop.xlane.xlu0 %3496
      %v3498 = vadd.f32 %v3049, %v3051
      %3499 = vadd.xlane.f32.xlu0 %v3498
      %v3500 = vpop.xlane.xlu0 %3499
      %v3501 = vadd.f32 %v3053, %v3055
      %3502 = vadd.xlane.f32.xlu0 %v3501
      %v3503 = vpop.xlane.xlu0 %3502
      %v3504 = vadd.f32 %v3057, %v3059
      %3505 = vadd.xlane.f32.xlu0 %v3504
      %v3506 = vpop.xlane.xlu0 %3505
      %v3507 = vadd.f32 %v3061, %v3063
      %3508 = vadd.xlane.f32.xlu0 %v3507
      %v3509 = vpop.xlane.xlu0 %3508
      %v3510 = vadd.f32 %v3065, %v3067
      %3511 = vadd.xlane.f32.xlu0 %v3510
      %v3512 = vpop.xlane.xlu0 %3511
      %v3513 = vadd.f32 %v3069, %v3071
      %3514 = vadd.xlane.f32.xlu0 %v3513
      %v3515 = vpop.xlane.xlu0 %3514
      %v3516 = vadd.f32 %v3073, %v3075
      %3517 = vadd.xlane.f32.xlu0 %v3516
      %v3518 = vpop.xlane.xlu0 %3517
      %v3519 = vadd.f32 %v3077, %v3079
      %3520 = vadd.xlane.f32.xlu0 %v3519
      %v3521 = vpop.xlane.xlu0 %3520
      %v3522 = vadd.f32 %v3081, %v3083
      %3523 = vadd.xlane.f32.xlu0 %v3522
      %v3524 = vpop.xlane.xlu0 %3523
      %v3525 = vadd.f32 %v3085, %v3087
      %3526 = vadd.xlane.f32.xlu0 %v3525
      %v3527 = vpop.xlane.xlu0 %3526
      %v3528 = vadd.f32 %v3089, %v3091
      %3529 = vadd.xlane.f32.xlu0 %v3528
      %v3530 = vpop.xlane.xlu0 %3529
      %v3531 = vadd.f32 %v3093, %v3095
      %3532 = vadd.xlane.f32.xlu0 %v3531
      %v3533 = vpop.xlane.xlu0 %3532
      %v3534 = vadd.f32 %v3097, %v3099
      %3535 = vadd.xlane.f32.xlu0 %v3534
      %v3536 = vpop.xlane.xlu0 %3535
      %v3537 = vadd.f32 %v3101, %v3103
      %3538 = vadd.xlane.f32.xlu0 %v3537
      %v3539 = vpop.xlane.xlu0 %3538
      %v3540 = vadd.f32 %v3105, %v3107
      %3541 = vadd.xlane.f32.xlu0 %v3540
      %v3542 = vpop.xlane.xlu0 %3541
      %v3543 = vadd.f32 %v3109, %v3111
      %3544 = vadd.xlane.f32.xlu0 %v3543
      %v3545 = vpop.xlane.xlu0 %3544
      %v3546 = vadd.f32 %v3113, %v3115
      %3547 = vadd.xlane.f32.xlu0 %v3546
      %v3548 = vpop.xlane.xlu0 %3547
      %v3549 = vadd.f32 %v3117, %v3119
      %3550 = vadd.xlane.f32.xlu0 %v3549
      %v3551 = vpop.xlane.xlu0 %3550
      %v3552 = vadd.f32 %v3121, %v3123
      %3553 = vadd.xlane.f32.xlu0 %v3552
      %v3554 = vpop.xlane.xlu0 %3553
      %v3555 = vadd.f32 %v3125, %v3127
      %3556 = vadd.xlane.f32.xlu0 %v3555
      %v3557 = vpop.xlane.xlu0 %3556
      %v3558 = vadd.f32 %v3129, %v3131
      %3559 = vadd.xlane.f32.xlu0 %v3558
      %v3560 = vpop.xlane.xlu0 %3559
      %v3561 = vadd.f32 %v3133, %v3135
      %3562 = vadd.xlane.f32.xlu0 %v3561
      %v3563 = vpop.xlane.xlu0 %3562
      %v3564 = vadd.f32 %v3137, %v3139
      %3565 = vadd.xlane.f32.xlu0 %v3564
      %v3566 = vpop.xlane.xlu0 %3565
      %v3567 = vadd.f32 %v3141, %v3143
      %3568 = vadd.xlane.f32.xlu0 %v3567
      %v3569 = vpop.xlane.xlu0 %3568
      %v3570 = vadd.f32 %v3145, %v3147
      %3571 = vadd.xlane.f32.xlu0 %v3570
      %v3572 = vpop.xlane.xlu0 %3571
      %v3573 = vadd.f32 %v3149, %v3151
      %3574 = vadd.xlane.f32.xlu0 %v3573
      %v3575 = vpop.xlane.xlu0 %3574
      %v3576 = vadd.f32 %v3153, %v3155
      %3577 = vadd.xlane.f32.xlu0 %v3576
      %v3578 = vpop.xlane.xlu0 %3577
      %v3579 = vadd.f32 %v3157, %v3159
      %3580 = vadd.xlane.f32.xlu0 %v3579
      %v3581 = vpop.xlane.xlu0 %3580
      %v3582 = vadd.f32 %v3161, %v3163
      %3583 = vadd.xlane.f32.xlu0 %v3582
      %v3584 = vpop.xlane.xlu0 %3583
      %v3585 = vadd.f32 %v3165, %v3167
      %3586 = vadd.xlane.f32.xlu0 %v3585
      %v3587 = vpop.xlane.xlu0 %3586
      %v3588 = vadd.f32 %v3169, %v3171
      %3589 = vadd.xlane.f32.xlu0 %v3588
      %v3590 = vpop.xlane.xlu0 %3589
      %v3591 = vadd.f32 %v3173, %v3175
      %3592 = vadd.xlane.f32.xlu0 %v3591
      %v3593 = vpop.xlane.xlu0 %3592
      %v3594 = vadd.f32 %v3177, %v3179
      %3595 = vadd.xlane.f32.xlu0 %v3594
      %v3596 = vpop.xlane.xlu0 %3595
      %v3597 = vadd.f32 %v3181, %v3183
      %3598 = vadd.xlane.f32.xlu0 %v3597
      %v3599 = vpop.xlane.xlu0 %3598
      %v3600 = vadd.f32 %v3185, %v3187
      %3601 = vadd.xlane.f32.xlu0 %v3600
      %v3602 = vpop.xlane.xlu0 %3601
      %v3603 = vadd.f32 %v3189, %v3191
      %3604 = vadd.xlane.f32.xlu0 %v3603
      %v3605 = vpop.xlane.xlu0 %3604
      %v3606 = vadd.f32 %v3193, %v3195
      %3607 = vadd.xlane.f32.xlu0 %v3606
      %v3608 = vpop.xlane.xlu0 %3607
      %v3609 = vadd.f32 %v3197, %v3199
      %3610 = vadd.xlane.f32.xlu0 %v3609
      %v3611 = vpop.xlane.xlu0 %3610
      %v3612 = vadd.f32 %v3201, %v3203
      %3613 = vadd.xlane.f32.xlu0 %v3612
      %v3614 = vpop.xlane.xlu0 %3613
      %v3615 = vadd.f32 %v3205, %v3207
      %3616 = vadd.xlane.f32.xlu0 %v3615
      %v3617 = vpop.xlane.xlu0 %3616
      %v3618 = vadd.f32 %v3209, %v3211
      %3619 = vadd.xlane.f32.xlu0 %v3618
      %v3620 = vpop.xlane.xlu0 %3619
      %v3621 = vadd.f32 %v3213, %v3215
      %3622 = vadd.xlane.f32.xlu0 %v3621
      %v3623 = vpop.xlane.xlu0 %3622
      %v3624 = vadd.f32 %v3217, %v3219
      %3625 = vadd.xlane.f32.xlu0 %v3624
      %v3626 = vpop.xlane.xlu0 %3625
      %v3627 = vadd.f32 %v3221, %v3223
      %3628 = vadd.xlane.f32.xlu0 %v3627
      %v3629 = vpop.xlane.xlu0 %3628
      %v3630 = vadd.f32 %v3225, %v3227
      %3631 = vadd.xlane.f32.xlu0 %v3630
      %v3632 = vpop.xlane.xlu0 %3631
      %v3633 = vadd.f32 %v3229, %v3231
      %3634 = vadd.xlane.f32.xlu0 %v3633
      %v3635 = vpop.xlane.xlu0 %3634
      %v3636 = vadd.f32 %v3233, %v3235
      %3637 = vadd.xlane.f32.xlu0 %v3636
      %v3638 = vpop.xlane.xlu0 %3637
      %v3639 = vadd.f32 %v3237, %v3239
      %3640 = vadd.xlane.f32.xlu0 %v3639
      %v3641 = vpop.xlane.xlu0 %3640
      %v3642 = vadd.f32 %v3241, %v3243
      %3643 = vadd.xlane.f32.xlu0 %v3642
      %v3644 = vpop.xlane.xlu0 %3643
      %v3645 = vadd.f32 %v3245, %v3247
      %3646 = vadd.xlane.f32.xlu0 %v3645
      %v3647 = vpop.xlane.xlu0 %3646
      %v3648 = vadd.f32 %v3249, %v3251
      %3649 = vadd.xlane.f32.xlu0 %v3648
      %v3650 = vpop.xlane.xlu0 %3649
      %v3651 = vadd.f32 %v3253, %v3255
      %3652 = vadd.xlane.f32.xlu0 %v3651
      %v3653 = vpop.xlane.xlu0 %3652
      %v3654 = vadd.f32 %v3257, %v3259
      %3655 = vadd.xlane.f32.xlu0 %v3654
      %v3656 = vpop.xlane.xlu0 %3655
      %v3657 = vadd.f32 %v3261, %v3263
      %3658 = vadd.xlane.f32.xlu0 %v3657
      %v3659 = vpop.xlane.xlu0 %3658
      %v3660 = vadd.f32 %v3265, %v3267
      %3661 = vadd.xlane.f32.xlu0 %v3660
      %v3662 = vpop.xlane.xlu0 %3661
      %v3663 = vadd.f32 %v3269, %v3271
      %3664 = vadd.xlane.f32.xlu0 %v3663
      %v3665 = vpop.xlane.xlu0 %3664
      %v3666 = vadd.f32 %v3273, %v3275
      %3667 = vadd.xlane.f32.xlu0 %v3666
      %v3668 = vpop.xlane.xlu0 %3667
      %v3669 = vadd.f32 %v3277, %v3279
      %3670 = vadd.xlane.f32.xlu0 %v3669
      %v3671 = vpop.xlane.xlu0 %3670
      %v3672 = vadd.f32 %v3281, %v3283
      %3673 = vadd.xlane.f32.xlu0 %v3672
      %v3674 = vpop.xlane.xlu0 %3673
      %v3675 = vadd.f32 %v3285, %v3287
      %3676 = vadd.xlane.f32.xlu0 %v3675
      %v3677 = vpop.xlane.xlu0 %3676
      %v3678 = vadd.f32 %v3289, %v3291
      %3679 = vadd.xlane.f32.xlu0 %v3678
      %v3680 = vpop.xlane.xlu0 %3679
      %v3681 = vadd.f32 %v3293, %v3295
      %3682 = vadd.xlane.f32.xlu0 %v3681
      %v3683 = vpop.xlane.xlu0 %3682
      %v3684 = vadd.f32 %v3297, %v3299
      %3685 = vadd.xlane.f32.xlu0 %v3684
      %v3686 = vpop.xlane.xlu0 %3685
      %v3687 = vadd.f32 %v3301, %v3303
      %3688 = vadd.xlane.f32.xlu0 %v3687
      %v3689 = vpop.xlane.xlu0 %3688
      %v3690 = vadd.f32 %v3305, %v3307
      %3691 = vadd.xlane.f32.xlu0 %v3690
      %v3692 = vpop.xlane.xlu0 %3691
      %v3693 = vadd.f32 %v3309, %v3311
      %3694 = vadd.xlane.f32.xlu0 %v3693
      %v3695 = vpop.xlane.xlu0 %3694
      %v3696 = vpack.c.bf16 %v469, %v469
      %v3697 = vpack.c.bf16 %v471, %v471
      %v3698 = vpack.c.bf16 %v475, %v475
      %v3699 = vpack.c.bf16 %v477, %v477
      %v3700 = vpack.c.bf16 %v481, %v481
      %v3701 = vpack.c.bf16 %v483, %v483
      %v3702 = vpack.c.bf16 %v487, %v487
      %v3703 = vpack.c.bf16 %v489, %v489
      %v3704 = vpack.c.bf16 %v2805, %v2801
      %v3705 = vpack.c.bf16 %v2807, %v2803
      %v3706 = vpack.c.bf16 %v2813, %v2809
      %v3707 = vpack.c.bf16 %v2815, %v2811
      %v3708 = vpack.c.bf16 %v2821, %v2817
      %v3709 = vpack.c.bf16 %v2823, %v2819
      %v3710 = vpack.c.bf16 %v2829, %v2825
      %v3711 = vpack.c.bf16 %v2831, %v2827
      %v3712 = vpack.c.bf16 %v2837, %v2833
      %v3713 = vpack.c.bf16 %v2839, %v2835
      %v3714 = vpack.c.bf16 %v2845, %v2841
      %v3715 = vpack.c.bf16 %v2847, %v2843
      %v3716 = vpack.c.bf16 %v2853, %v2849
      %v3717 = vpack.c.bf16 %v2855, %v2851
      %v3718 = vpack.c.bf16 %v2861, %v2857
      %v3719 = vpack.c.bf16 %v2863, %v2859
      %v3720 = vpack.c.bf16 %v2869, %v2865
      %v3721 = vpack.c.bf16 %v2871, %v2867
      %v3722 = vpack.c.bf16 %v2877, %v2873
      %v3723 = vpack.c.bf16 %v2879, %v2875
      %v3724 = vpack.c.bf16 %v2885, %v2881
      %v3725 = vpack.c.bf16 %v2887, %v2883
      %v3726 = vpack.c.bf16 %v2893, %v2889
      %v3727 = vpack.c.bf16 %v2895, %v2891
      %v3728 = vpack.c.bf16 %v2901, %v2897
      %v3729 = vpack.c.bf16 %v2903, %v2899
      %v3730 = vpack.c.bf16 %v2909, %v2905
      %v3731 = vpack.c.bf16 %v2911, %v2907
      %v3732 = vpack.c.bf16 %v2917, %v2913
      %v3733 = vpack.c.bf16 %v2919, %v2915
      %v3734 = vpack.c.bf16 %v2925, %v2921
      %v3735 = vpack.c.bf16 %v2927, %v2923
      %v3736 = vpack.c.bf16 %v2933, %v2929
      %v3737 = vpack.c.bf16 %v2935, %v2931
      %v3738 = vpack.c.bf16 %v2941, %v2937
      %v3739 = vpack.c.bf16 %v2943, %v2939
      %v3740 = vpack.c.bf16 %v2949, %v2945
      %v3741 = vpack.c.bf16 %v2951, %v2947
      %v3742 = vpack.c.bf16 %v2957, %v2953
      %v3743 = vpack.c.bf16 %v2959, %v2955
      %v3744 = vpack.c.bf16 %v2965, %v2961
      %v3745 = vpack.c.bf16 %v2967, %v2963
      %v3746 = vpack.c.bf16 %v2973, %v2969
      %v3747 = vpack.c.bf16 %v2975, %v2971
      %v3748 = vpack.c.bf16 %v2981, %v2977
      %v3749 = vpack.c.bf16 %v2983, %v2979
      %v3750 = vpack.c.bf16 %v2989, %v2985
      %v3751 = vpack.c.bf16 %v2991, %v2987
      %v3752 = vpack.c.bf16 %v2997, %v2993
      %v3753 = vpack.c.bf16 %v2999, %v2995
      %v3754 = vpack.c.bf16 %v3005, %v3001
      %v3755 = vpack.c.bf16 %v3007, %v3003
      %v3756 = vpack.c.bf16 %v3013, %v3009
      %v3757 = vpack.c.bf16 %v3015, %v3011
      %v3758 = vpack.c.bf16 %v3021, %v3017
      %v3759 = vpack.c.bf16 %v3023, %v3019
      %v3760 = vpack.c.bf16 %v3029, %v3025
      %v3761 = vpack.c.bf16 %v3031, %v3027
      %v3762 = vpack.c.bf16 %v3037, %v3033
      %v3763 = vpack.c.bf16 %v3039, %v3035
      %v3764 = vpack.c.bf16 %v3045, %v3041
      %v3765 = vpack.c.bf16 %v3047, %v3043
      %v3766 = vpack.c.bf16 %v3053, %v3049
      %v3767 = vpack.c.bf16 %v3055, %v3051
      %v3768 = vpack.c.bf16 %v3061, %v3057
      %v3769 = vpack.c.bf16 %v3063, %v3059
      %v3770 = vpack.c.bf16 %v3069, %v3065
      %v3771 = vpack.c.bf16 %v3071, %v3067
      %v3772 = vpack.c.bf16 %v3077, %v3073
      %v3773 = vpack.c.bf16 %v3079, %v3075
      %v3774 = vpack.c.bf16 %v3085, %v3081
      %v3775 = vpack.c.bf16 %v3087, %v3083
      %v3776 = vpack.c.bf16 %v3093, %v3089
      %v3777 = vpack.c.bf16 %v3095, %v3091
      %v3778 = vpack.c.bf16 %v3101, %v3097
      %v3779 = vpack.c.bf16 %v3103, %v3099
      %v3780 = vpack.c.bf16 %v3109, %v3105
      %v3781 = vpack.c.bf16 %v3111, %v3107
      %v3782 = vpack.c.bf16 %v3117, %v3113
      %v3783 = vpack.c.bf16 %v3119, %v3115
      %v3784 = vpack.c.bf16 %v3125, %v3121
      %v3785 = vpack.c.bf16 %v3127, %v3123
      %v3786 = vpack.c.bf16 %v3133, %v3129
      %v3787 = vpack.c.bf16 %v3135, %v3131
      %v3788 = vpack.c.bf16 %v3141, %v3137
      %v3789 = vpack.c.bf16 %v3143, %v3139
      %v3790 = vpack.c.bf16 %v3149, %v3145
      %v3791 = vpack.c.bf16 %v3151, %v3147
      %v3792 = vpack.c.bf16 %v3157, %v3153
      %v3793 = vpack.c.bf16 %v3159, %v3155
      %v3794 = vpack.c.bf16 %v3165, %v3161
      %v3795 = vpack.c.bf16 %v3167, %v3163
      %v3796 = vpack.c.bf16 %v3173, %v3169
      %v3797 = vpack.c.bf16 %v3175, %v3171
      %v3798 = vpack.c.bf16 %v3181, %v3177
      %v3799 = vpack.c.bf16 %v3183, %v3179
      %v3800 = vpack.c.bf16 %v3189, %v3185
      %v3801 = vpack.c.bf16 %v3191, %v3187
      %v3802 = vpack.c.bf16 %v3197, %v3193
      %v3803 = vpack.c.bf16 %v3199, %v3195
      %v3804 = vpack.c.bf16 %v3205, %v3201
      %v3805 = vpack.c.bf16 %v3207, %v3203
      %v3806 = vpack.c.bf16 %v3213, %v3209
      %v3807 = vpack.c.bf16 %v3215, %v3211
      %v3808 = vpack.c.bf16 %v3221, %v3217
      %v3809 = vpack.c.bf16 %v3223, %v3219
      %v3810 = vpack.c.bf16 %v3229, %v3225
      %v3811 = vpack.c.bf16 %v3231, %v3227
      %v3812 = vpack.c.bf16 %v3237, %v3233
      %v3813 = vpack.c.bf16 %v3239, %v3235
      %v3814 = vpack.c.bf16 %v3245, %v3241
      %v3815 = vpack.c.bf16 %v3247, %v3243
      %v3816 = vpack.c.bf16 %v3253, %v3249
      %v3817 = vpack.c.bf16 %v3255, %v3251
      %v3818 = vpack.c.bf16 %v3261, %v3257
      %v3819 = vpack.c.bf16 %v3263, %v3259
      %v3820 = vpack.c.bf16 %v3269, %v3265
      %v3821 = vpack.c.bf16 %v3271, %v3267
      %v3822 = vpack.c.bf16 %v3277, %v3273
      %v3823 = vpack.c.bf16 %v3279, %v3275
      %v3824 = vpack.c.bf16 %v3285, %v3281
      %v3825 = vpack.c.bf16 %v3287, %v3283
      %v3826 = vpack.c.bf16 %v3293, %v3289
      %v3827 = vpack.c.bf16 %v3295, %v3291
      %v3828 = vpack.c.bf16 %v3301, %v3297
      %v3829 = vpack.c.bf16 %v3303, %v3299
      %v3830 = vpack.c.bf16 %v3309, %v3305
      %v3831 = vpack.c.bf16 %v3311, %v3307
      %3832 = vmatprep.subr.bf16.mxu0 %v3705
      %3833 = vmatpush1.bf16.xpose.msra.mxu0 %v3704
      %3834 = vmatprep.subr.bf16.mxu0 %v3707
      %3835 = vmatpush1.bf16.xpose.msra.mxu0 %v3706
      %3836 = vmatprep.subr.bf16.mxu0 %v3709
      %3837 = vmatpush1.bf16.xpose.msra.mxu0 %v3708
      %3838 = vmatprep.subr.bf16.mxu0 %v3711
      %3839 = vmatpush1.bf16.xpose.msra.mxu0 %v3710
      %3840 = vmatprep.subr.bf16.mxu0 %v3713
      %3841 = vmatpush1.bf16.xpose.msra.mxu0 %v3712
      %3842 = vmatprep.subr.bf16.mxu0 %v3715
      %3843 = vmatpush1.bf16.xpose.msra.mxu0 %v3714
      %3844 = vmatprep.subr.bf16.mxu0 %v3717
      %3845 = vmatpush1.bf16.xpose.msra.mxu0 %v3716
      %3846 = vmatprep.subr.bf16.mxu0 %v3719
      %3847 = vmatpush1.bf16.xpose.msra.mxu0 %v3718
      %3848 = vmatprep.subr.bf16.mxu0 %v3721
      %3849 = vmatpush1.bf16.xpose.msra.mxu0 %v3720
      %3850 = vmatprep.subr.bf16.mxu0 %v3723
      %3851 = vmatpush1.bf16.xpose.msra.mxu0 %v3722
      %3852 = vmatprep.subr.bf16.mxu0 %v3725
      %3853 = vmatpush1.bf16.xpose.msra.mxu0 %v3724
      %3854 = vmatprep.subr.bf16.mxu0 %v3727
      %3855 = vmatpush1.bf16.xpose.msra.mxu0 %v3726
      %3856 = vmatprep.subr.bf16.mxu0 %v3729
      %3857 = vmatpush1.bf16.xpose.msra.mxu0 %v3728
      %3858 = vmatprep.subr.bf16.mxu0 %v3731
      %3859 = vmatpush1.bf16.xpose.msra.mxu0 %v3730
      %3860 = vmatprep.subr.bf16.mxu0 %v3733
      %3861 = vmatpush1.bf16.xpose.msra.mxu0 %v3732
      %3862 = vmatprep.subr.bf16.mxu0 %v3735
      %3863 = vmatpush1.bf16.xpose.msra.mxu0 %v3734
      %3864 = vmatprep.mubr.bf16.mxu0 %v3697
      %3865 = vmatmul.mubr.bf16.gmra.mrb[0].mxu0 %v3696
      %v3866 = vpop.f32.mrb[0].mxu0
      %v3867 = vadd.f32 0.0, %v3866
      %v3868 = vpop.f32.mrb[0].mxu0
      %v3869 = vadd.f32 0.0, %v3868
      %v3870 = vpop.f32.mrb[0].mxu0
      %v3871 = vpop.f32.mrb[0].mxu0
      %3872 = vdwg.mxu0
      %3873 = vmatprep.subr.bf16.mxu0 %v3737
      %3874 = vmatpush1.bf16.xpose.msra.mxu0 %v3736
      %3875 = vmatprep.subr.bf16.mxu0 %v3739
      %3876 = vmatpush1.bf16.xpose.msra.mxu0 %v3738
      %3877 = vmatprep.subr.bf16.mxu0 %v3741
      %3878 = vmatpush1.bf16.xpose.msra.mxu0 %v3740
      %3879 = vmatprep.subr.bf16.mxu0 %v3743
      %3880 = vmatpush1.bf16.xpose.msra.mxu0 %v3742
      %3881 = vmatprep.subr.bf16.mxu0 %v3745
      %3882 = vmatpush1.bf16.xpose.msra.mxu0 %v3744
      %3883 = vmatprep.subr.bf16.mxu0 %v3747
      %3884 = vmatpush1.bf16.xpose.msra.mxu0 %v3746
      %3885 = vmatprep.subr.bf16.mxu0 %v3749
      %3886 = vmatpush1.bf16.xpose.msra.mxu0 %v3748
      %3887 = vmatprep.subr.bf16.mxu0 %v3751
      %3888 = vmatpush1.bf16.xpose.msra.mxu0 %v3750
      %3889 = vmatprep.subr.bf16.mxu0 %v3753
      %3890 = vmatpush1.bf16.xpose.msra.mxu0 %v3752
      %3891 = vmatprep.subr.bf16.mxu0 %v3755
      %3892 = vmatpush1.bf16.xpose.msra.mxu0 %v3754
      %3893 = vmatprep.subr.bf16.mxu0 %v3757
      %3894 = vmatpush1.bf16.xpose.msra.mxu0 %v3756
      %3895 = vmatprep.subr.bf16.mxu0 %v3759
      %3896 = vmatpush1.bf16.xpose.msra.mxu0 %v3758
      %3897 = vmatprep.subr.bf16.mxu0 %v3761
      %3898 = vmatpush1.bf16.xpose.msra.mxu0 %v3760
      %3899 = vmatprep.subr.bf16.mxu0 %v3763
      %3900 = vmatpush1.bf16.xpose.msra.mxu0 %v3762
      %3901 = vmatprep.subr.bf16.mxu0 %v3765
      %3902 = vmatpush1.bf16.xpose.msra.mxu0 %v3764
      %3903 = vmatprep.subr.bf16.mxu0 %v3767
      %3904 = vmatpush1.bf16.xpose.msra.mxu0 %v3766
      %3905 = vmatprep.mubr.bf16.mxu0 %v3699
      %3906 = vmatmul.mubr.bf16.gmra.mrb[0].mxu0 %v3698
      %v3907 = vpop.f32.mrb[0].mxu0
      %v3908 = vadd.f32 0.0, %v3907
      %v3909 = vpop.f32.mrb[0].mxu0
      %v3910 = vadd.f32 0.0, %v3909
      %v3911 = vpop.f32.mrb[0].mxu0
      %v3912 = vpop.f32.mrb[0].mxu0
      %3913 = vdwg.mxu0
      %3914 = vmatprep.subr.bf16.mxu0 %v3769
      %3915 = vmatpush1.bf16.xpose.msra.mxu0 %v3768
      %3916 = vmatprep.subr.bf16.mxu0 %v3771
      %3917 = vmatpush1.bf16.xpose.msra.mxu0 %v3770
      %3918 = vmatprep.subr.bf16.mxu0 %v3773
      %3919 = vmatpush1.bf16.xpose.msra.mxu0 %v3772
      %3920 = vmatprep.subr.bf16.mxu0 %v3775
      %3921 = vmatpush1.bf16.xpose.msra.mxu0 %v3774
      %3922 = vmatprep.subr.bf16.mxu0 %v3777
      %3923 = vmatpush1.bf16.xpose.msra.mxu0 %v3776
      %3924 = vmatprep.subr.bf16.mxu0 %v3779
      %3925 = vmatpush1.bf16.xpose.msra.mxu0 %v3778
      %3926 = vmatprep.subr.bf16.mxu0 %v3781
      %3927 = vmatpush1.bf16.xpose.msra.mxu0 %v3780
      %3928 = vmatprep.subr.bf16.mxu0 %v3783
      %3929 = vmatpush1.bf16.xpose.msra.mxu0 %v3782
      %3930 = vmatprep.subr.bf16.mxu0 %v3785
      %3931 = vmatpush1.bf16.xpose.msra.mxu0 %v3784
      %3932 = vmatprep.subr.bf16.mxu0 %v3787
      %3933 = vmatpush1.bf16.xpose.msra.mxu0 %v3786
      %3934 = vmatprep.subr.bf16.mxu0 %v3789
      %3935 = vmatpush1.bf16.xpose.msra.mxu0 %v3788
      %3936 = vmatprep.subr.bf16.mxu0 %v3791
      %3937 = vmatpush1.bf16.xpose.msra.mxu0 %v3790
      %3938 = vmatprep.subr.bf16.mxu0 %v3793
      %3939 = vmatpush1.bf16.xpose.msra.mxu0 %v3792
      %3940 = vmatprep.subr.bf16.mxu0 %v3795
      %3941 = vmatpush1.bf16.xpose.msra.mxu0 %v3794
      %3942 = vmatprep.subr.bf16.mxu0 %v3797
      %3943 = vmatpush1.bf16.xpose.msra.mxu0 %v3796
      %3944 = vmatprep.subr.bf16.mxu0 %v3799
      %3945 = vmatpush1.bf16.xpose.msra.mxu0 %v3798
      %3946 = vmatprep.mubr.bf16.mxu0 %v3701
      %3947 = vmatmul.mubr.bf16.gmra.mrb[0].mxu0 %v3700
      %v3948 = vpop.f32.mrb[0].mxu0
      %v3949 = vadd.f32 0.0, %v3948
      %v3950 = vpop.f32.mrb[0].mxu0
      %v3951 = vadd.f32 0.0, %v3950
      %v3952 = vpop.f32.mrb[0].mxu0
      %v3953 = vpop.f32.mrb[0].mxu0
      %3954 = vdwg.mxu0
      %3955 = vmatprep.subr.bf16.mxu0 %v3801
      %3956 = vmatpush1.bf16.xpose.msra.mxu0 %v3800
      %3957 = vmatprep.subr.bf16.mxu0 %v3803
      %3958 = vmatpush1.bf16.xpose.msra.mxu0 %v3802
      %3959 = vmatprep.subr.bf16.mxu0 %v3805
      %3960 = vmatpush1.bf16.xpose.msra.mxu0 %v3804
      %3961 = vmatprep.subr.bf16.mxu0 %v3807
      %3962 = vmatpush1.bf16.xpose.msra.mxu0 %v3806
      %3963 = vmatprep.subr.bf16.mxu0 %v3809
      %3964 = vmatpush1.bf16.xpose.msra.mxu0 %v3808
      %3965 = vmatprep.subr.bf16.mxu0 %v3811
      %3966 = vmatpush1.bf16.xpose.msra.mxu0 %v3810
      %3967 = vmatprep.subr.bf16.mxu0 %v3813
      %3968 = vmatpush1.bf16.xpose.msra.mxu0 %v3812
      %3969 = vmatprep.subr.bf16.mxu0 %v3815
      %3970 = vmatpush1.bf16.xpose.msra.mxu0 %v3814
      %3971 = vmatprep.subr.bf16.mxu0 %v3817
      %3972 = vmatpush1.bf16.xpose.msra.mxu0 %v3816
      %3973 = vmatprep.subr.bf16.mxu0 %v3819
      %3974 = vmatpush1.bf16.xpose.msra.mxu0 %v3818
      %3975 = vmatprep.subr.bf16.mxu0 %v3821
      %3976 = vmatpush1.bf16.xpose.msra.mxu0 %v3820
      %3977 = vmatprep.subr.bf16.mxu0 %v3823
      %3978 = vmatpush1.bf16.xpose.msra.mxu0 %v3822
      %3979 = vmatprep.subr.bf16.mxu0 %v3825
      %3980 = vmatpush1.bf16.xpose.msra.mxu0 %v3824
      %3981 = vmatprep.subr.bf16.mxu0 %v3827
      %3982 = vmatpush1.bf16.xpose.msra.mxu0 %v3826
      %3983 = vmatprep.subr.bf16.mxu0 %v3829
      %3984 = vmatpush1.bf16.xpose.msra.mxu0 %v3828
      %3985 = vmatprep.subr.bf16.mxu0 %v3831
      %3986 = vmatpush1.bf16.xpose.msra.mxu0 %v3830
      %3987 = vmatprep.mubr.bf16.mxu0 %v3703
      %3988 = vmatmul.mubr.bf16.gmra.mrb[0].mxu0 %v3702
      %v3989 = vpop.f32.mrb[0].mxu0
      %v3990 = vadd.f32 0.0, %v3989
      %v3991 = vpop.f32.mrb[0].mxu0
      %v3992 = vadd.f32 0.0, %v3991
      %v3993 = vpop.f32.mrb[0].mxu0
      %v3994 = vpop.f32.mrb[0].mxu0
      %3995 = vdwg.mxu0
      %v3996 = vrcp.pop %v3314
      %v3997 = vrcp.pop %v3317
      %v3998 = vrcp.pop %v3320
      %v3999 = vrcp.pop %v3323
      %v4000 = vrcp.pop %v3326
      %v4001 = vrcp.pop %v3329
      %v4002 = vrcp.pop %v3332
      %v4003 = vrcp.pop %v3335
      %v4004 = vrcp.pop %v3338
      %v4005 = vrcp.pop %v3341
      %v4006 = vrcp.pop %v3344
      %v4007 = vrcp.pop %v3347
      %v4008 = vrcp.pop %v3350
      %v4009 = vrcp.pop %v3353
      %v4010 = vrcp.pop %v3356
      %v4011 = vrcp.pop %v3359
      %v4012 = vrcp.pop %v3362
      %v4013 = vrcp.pop %v3365
      %v4014 = vrcp.pop %v3368
      %v4015 = vrcp.pop %v3371
      %v4016 = vrcp.pop %v3374
      %v4017 = vrcp.pop %v3377
      %v4018 = vrcp.pop %v3380
      %v4019 = vrcp.pop %v3383
      %v4020 = vrcp.pop %v3386
      %v4021 = vrcp.pop %v3389
      %v4022 = vrcp.pop %v3392
      %v4023 = vrcp.pop %v3395
      %v4024 = vrcp.pop %v3398
      %v4025 = vrcp.pop %v3401
      %v4026 = vrcp.pop %v3404
      %v4027 = vrcp.pop %v3407
      %v4028 = vrcp.pop %v3410
      %v4029 = vrcp.pop %v3413
      %v4030 = vrcp.pop %v3416
      %v4031 = vrcp.pop %v3419
      %v4032 = vrcp.pop %v3422
      %v4033 = vrcp.pop %v3425
      %v4034 = vrcp.pop %v3428
      %v4035 = vrcp.pop %v3431
      %v4036 = vrcp.pop %v3434
      %v4037 = vrcp.pop %v3437
      %v4038 = vrcp.pop %v3440
      %v4039 = vrcp.pop %v3443
      %v4040 = vrcp.pop %v3446
      %v4041 = vrcp.pop %v3449
      %v4042 = vrcp.pop %v3452
      %v4043 = vrcp.pop %v3455
      %v4044 = vrcp.pop %v3458
      %v4045 = vrcp.pop %v3461
      %v4046 = vrcp.pop %v3464
      %v4047 = vrcp.pop %v3467
      %v4048 = vrcp.pop %v3470
      %v4049 = vrcp.pop %v3473
      %v4050 = vrcp.pop %v3476
      %v4051 = vrcp.pop %v3479
      %v4052 = vrcp.pop %v3482
      %v4053 = vrcp.pop %v3485
      %v4054 = vrcp.pop %v3488
      %v4055 = vrcp.pop %v3491
      %v4056 = vrcp.pop %v3494
      %v4057 = vrcp.pop %v3497
      %v4058 = vrcp.pop %v3500
      %v4059 = vrcp.pop %v3503
      %v4060 = vrcp.pop %v3506
      %v4061 = vrcp.pop %v3509
      %v4062 = vrcp.pop %v3512
      %v4063 = vrcp.pop %v3515
      %v4064 = vrcp.pop %v3518
      %v4065 = vrcp.pop %v3521
      %v4066 = vrcp.pop %v3524
      %v4067 = vrcp.pop %v3527
      %v4068 = vrcp.pop %v3530
      %v4069 = vrcp.pop %v3533
      %v4070 = vrcp.pop %v3536
      %v4071 = vrcp.pop %v3539
      %v4072 = vrcp.pop %v3542
      %v4073 = vrcp.pop %v3545
      %v4074 = vrcp.pop %v3548
      %v4075 = vrcp.pop %v3551
      %v4076 = vrcp.pop %v3554
      %v4077 = vrcp.pop %v3557
      %v4078 = vrcp.pop %v3560
      %v4079 = vrcp.pop %v3563
      %v4080 = vrcp.pop %v3566
      %v4081 = vrcp.pop %v3569
      %v4082 = vrcp.pop %v3572
      %v4083 = vrcp.pop %v3575
      %v4084 = vrcp.pop %v3578
      %v4085 = vrcp.pop %v3581
      %v4086 = vrcp.pop %v3584
      %v4087 = vrcp.pop %v3587
      %v4088 = vrcp.pop %v3590
      %v4089 = vrcp.pop %v3593
      %v4090 = vrcp.pop %v3596
      %v4091 = vrcp.pop %v3599
      %v4092 = vrcp.pop %v3602
      %v4093 = vrcp.pop %v3605
      %v4094 = vrcp.pop %v3608
      %v4095 = vrcp.pop %v3611
      %v4096 = vrcp.pop %v3614
      %v4097 = vrcp.pop %v3617
      %v4098 = vrcp.pop %v3620
      %v4099 = vrcp.pop %v3623
      %v4100 = vrcp.pop %v3626
      %v4101 = vrcp.pop %v3629
      %v4102 = vrcp.pop %v3632
      %v4103 = vrcp.pop %v3635
      %v4104 = vrcp.pop %v3638
      %v4105 = vrcp.pop %v3641
      %v4106 = vrcp.pop %v3644
      %v4107 = vrcp.pop %v3647
      %v4108 = vrcp.pop %v3650
      %v4109 = vrcp.pop %v3653
      %v4110 = vrcp.pop %v3656
      %v4111 = vrcp.pop %v3659
      %v4112 = vrcp.pop %v3662
      %v4113 = vrcp.pop %v3665
      %v4114 = vrcp.pop %v3668
      %v4115 = vrcp.pop %v3671
      %v4116 = vrcp.pop %v3674
      %v4117 = vrcp.pop %v3677
      %v4118 = vrcp.pop %v3680
      %v4119 = vrcp.pop %v3683
      %v4120 = vrcp.pop %v3686
      %v4121 = vrcp.pop %v3689
      %v4122 = vrcp.pop %v3692
      %v4123 = vrcp.pop %v3695
      %v4252 = vlaneseq
      %v4253 = vand.u32 %v4252, 127
      %v4254 = vlaneseq
      %v4255 = vshrl.u32 %v4254, 7
      %v4256 = vsub.s32 %v4253, %v4255
      %v4257 = vrot.slane %v3996, %v4256
      %v4258 = vadd.s32 %v4253, 4294967288
      %v4259 = vlaneseq
      %v4260 = vshrl.u32 %v4259, 7
      %v4261 = vsub.s32 %v4258, %v4260
      %v4262 = vrot.slane %v3997, %v4261
      %vm4263 = vcmask 130112
      %v4264 = vsel %vm4263, %v4262, %v4257
      %v4265 = vadd.s32 %v4253, 4294967280
      %v4266 = vlaneseq
      %v4267 = vshrl.u32 %v4266, 7
      %v4268 = vsub.s32 %v4265, %v4267
      %v4269 = vrot.slane %v3998, %v4268
      %vm4270 = vcmask 195712
      %v4271 = vsel %vm4270, %v4269, %v4264
      %v4272 = vadd.s32 %v4253, 4294967272
      %v4273 = vlaneseq
      %v4274 = vshrl.u32 %v4273, 7
      %v4275 = vsub.s32 %v4272, %v4274
      %v4276 = vrot.slane %v3999, %v4275
      %vm4277 = vcmask 261312
      %v4278 = vsel %vm4277, %v4276, %v4271
      %v4279 = vadd.s32 %v4253, 4294967264
      %v4280 = vlaneseq
      %v4281 = vshrl.u32 %v4280, 7
      %v4282 = vsub.s32 %v4279, %v4281
      %v4283 = vrot.slane %v4000, %v4282
      %vm4284 = vcmask 326912
      %v4285 = vsel %vm4284, %v4283, %v4278
      %v4286 = vadd.s32 %v4253, 4294967256
      %v4287 = vlaneseq
      %v4288 = vshrl.u32 %v4287, 7
      %v4289 = vsub.s32 %v4286, %v4288
      %v4290 = vrot.slane %v4001, %v4289
      %vm4291 = vcmask 392512
      %v4292 = vsel %vm4291, %v4290, %v4285
      %v4293 = vadd.s32 %v4253, 4294967248
      %v4294 = vlaneseq
      %v4295 = vshrl.u32 %v4294, 7
      %v4296 = vsub.s32 %v4293, %v4295
      %v4297 = vrot.slane %v4002, %v4296
      %vm4298 = vcmask 458112
      %v4299 = vsel %vm4298, %v4297, %v4292
      %v4300 = vadd.s32 %v4253, 4294967240
      %v4301 = vlaneseq
      %v4302 = vshrl.u32 %v4301, 7
      %v4303 = vsub.s32 %v4300, %v4302
      %v4304 = vrot.slane %v4003, %v4303
      %vm4305 = vcmask 523712
      %v4306 = vsel %vm4305, %v4304, %v4299
      %v4307 = vadd.s32 %v4253, 4294967232
      %v4308 = vlaneseq
      %v4309 = vshrl.u32 %v4308, 7
      %v4310 = vsub.s32 %v4307, %v4309
      %v4311 = vrot.slane %v4004, %v4310
      %vm4312 = vcmask 589312
      %v4313 = vsel %vm4312, %v4311, %v4306
      %v4314 = vadd.s32 %v4253, 4294967224
      %v4315 = vlaneseq
      %v4316 = vshrl.u32 %v4315, 7
      %v4317 = vsub.s32 %v4314, %v4316
      %v4318 = vrot.slane %v4005, %v4317
      %vm4319 = vcmask 654912
      %v4320 = vsel %vm4319, %v4318, %v4313
      %v4321 = vadd.s32 %v4253, 4294967216
      %v4322 = vlaneseq
      %v4323 = vshrl.u32 %v4322, 7
      %v4324 = vsub.s32 %v4321, %v4323
      %v4325 = vrot.slane %v4006, %v4324
      %vm4326 = vcmask 720512
      %v4327 = vsel %vm4326, %v4325, %v4320
      %v4328 = vadd.s32 %v4253, 4294967208
      %v4329 = vlaneseq
      %v4330 = vshrl.u32 %v4329, 7
      %v4331 = vsub.s32 %v4328, %v4330
      %v4332 = vrot.slane %v4007, %v4331
      %vm4333 = vcmask 786112
      %v4334 = vsel %vm4333, %v4332, %v4327
      %v4335 = vadd.s32 %v4253, 4294967200
      %v4336 = vlaneseq
      %v4337 = vshrl.u32 %v4336, 7
      %v4338 = vsub.s32 %v4335, %v4337
      %v4339 = vrot.slane %v4008, %v4338
      %vm4340 = vcmask 851712
      %v4341 = vsel %vm4340, %v4339, %v4334
      %v4342 = vadd.s32 %v4253, 4294967192
      %v4343 = vlaneseq
      %v4344 = vshrl.u32 %v4343, 7
      %v4345 = vsub.s32 %v4342, %v4344
      %v4346 = vrot.slane %v4009, %v4345
      %vm4347 = vcmask 917312
      %v4348 = vsel %vm4347, %v4346, %v4341
      %v4349 = vadd.s32 %v4253, 4294967184
      %v4350 = vlaneseq
      %v4351 = vshrl.u32 %v4350, 7
      %v4352 = vsub.s32 %v4349, %v4351
      %v4353 = vrot.slane %v4010, %v4352
      %vm4354 = vcmask 982912
      %v4355 = vsel %vm4354, %v4353, %v4348
      %v4356 = vadd.s32 %v4253, 4294967176
      %v4357 = vlaneseq
      %v4358 = vshrl.u32 %v4357, 7
      %v4359 = vsub.s32 %v4356, %v4358
      %v4360 = vrot.slane %v4011, %v4359
      %vm4361 = vcmask 1048512
      %v4362 = vsel %vm4361, %v4360, %v4355
      %v4363 = vlaneseq
      %v4364 = vshrl.u32 %v4363, 7
      %v4365 = vsub.s32 %v4253, %v4364
      %v4366 = vrot.slane %v4012, %v4365
      %v4367 = vlaneseq
      %v4368 = vshrl.u32 %v4367, 7
      %v4369 = vsub.s32 %v4258, %v4368
      %v4370 = vrot.slane %v4013, %v4369
      %v4371 = vsel %vm4263, %v4370, %v4366
      %v4372 = vlaneseq
      %v4373 = vshrl.u32 %v4372, 7
      %v4374 = vsub.s32 %v4265, %v4373
      %v4375 = vrot.slane %v4014, %v4374
      %v4376 = vsel %vm4270, %v4375, %v4371
      %v4377 = vlaneseq
      %v4378 = vshrl.u32 %v4377, 7
      %v4379 = vsub.s32 %v4272, %v4378
      %v4380 = vrot.slane %v4015, %v4379
      %v4381 = vsel %vm4277, %v4380, %v4376
      %v4382 = vlaneseq
      %v4383 = vshrl.u32 %v4382, 7
      %v4384 = vsub.s32 %v4279, %v4383
      %v4385 = vrot.slane %v4016, %v4384
      %v4386 = vsel %vm4284, %v4385, %v4381
      %v4387 = vlaneseq
      %v4388 = vshrl.u32 %v4387, 7
      %v4389 = vsub.s32 %v4286, %v4388
      %v4390 = vrot.slane %v4017, %v4389
      %v4391 = vsel %vm4291, %v4390, %v4386
      %v4392 = vlaneseq
      %v4393 = vshrl.u32 %v4392, 7
      %v4394 = vsub.s32 %v4293, %v4393
      %v4395 = vrot.slane %v4018, %v4394
      %v4396 = vsel %vm4298, %v4395, %v4391
      %v4397 = vlaneseq
      %v4398 = vshrl.u32 %v4397, 7
      %v4399 = vsub.s32 %v4300, %v4398
      %v4400 = vrot.slane %v4019, %v4399
      %v4401 = vsel %vm4305, %v4400, %v4396
      %v4402 = vlaneseq
      %v4403 = vshrl.u32 %v4402, 7
      %v4404 = vsub.s32 %v4307, %v4403
      %v4405 = vrot.slane %v4020, %v4404
      %v4406 = vsel %vm4312, %v4405, %v4401
      %v4407 = vlaneseq
      %v4408 = vshrl.u32 %v4407, 7
      %v4409 = vsub.s32 %v4314, %v4408
      %v4410 = vrot.slane %v4021, %v4409
      %v4411 = vsel %vm4319, %v4410, %v4406
      %v4412 = vlaneseq
      %v4413 = vshrl.u32 %v4412, 7
      %v4414 = vsub.s32 %v4321, %v4413
      %v4415 = vrot.slane %v4022, %v4414
      %v4416 = vsel %vm4326, %v4415, %v4411
      %v4417 = vlaneseq
      %v4418 = vshrl.u32 %v4417, 7
      %v4419 = vsub.s32 %v4328, %v4418
      %v4420 = vrot.slane %v4023, %v4419
      %v4421 = vsel %vm4333, %v4420, %v4416
      %v4422 = vlaneseq
      %v4423 = vshrl.u32 %v4422, 7
      %v4424 = vsub.s32 %v4335, %v4423
      %v4425 = vrot.slane %v4024, %v4424
      %v4426 = vsel %vm4340, %v4425, %v4421
      %v4427 = vlaneseq
      %v4428 = vshrl.u32 %v4427, 7
      %v4429 = vsub.s32 %v4342, %v4428
      %v4430 = vrot.slane %v4025, %v4429
      %v4431 = vsel %vm4347, %v4430, %v4426
      %v4432 = vlaneseq
      %v4433 = vshrl.u32 %v4432, 7
      %v4434 = vsub.s32 %v4349, %v4433
      %v4435 = vrot.slane %v4026, %v4434
      %v4436 = vsel %vm4354, %v4435, %v4431
      %v4437 = vlaneseq
      %v4438 = vshrl.u32 %v4437, 7
      %v4439 = vsub.s32 %v4356, %v4438
      %v4440 = vrot.slane %v4027, %v4439
      %v4441 = vsel %vm4361, %v4440, %v4436
      %v4442 = vlaneseq
      %v4443 = vshrl.u32 %v4442, 7
      %v4444 = vsub.s32 %v4253, %v4443
      %v4445 = vrot.slane %v4028, %v4444
      %v4446 = vlaneseq
      %v4447 = vshrl.u32 %v4446, 7
      %v4448 = vsub.s32 %v4258, %v4447
      %v4449 = vrot.slane %v4029, %v4448
      %v4450 = vsel %vm4263, %v4449, %v4445
      %v4451 = vlaneseq
      %v4452 = vshrl.u32 %v4451, 7
      %v4453 = vsub.s32 %v4265, %v4452
      %v4454 = vrot.slane %v4030, %v4453
      %v4455 = vsel %vm4270, %v4454, %v4450
      %v4456 = vlaneseq
      %v4457 = vshrl.u32 %v4456, 7
      %v4458 = vsub.s32 %v4272, %v4457
      %v4459 = vrot.slane %v4031, %v4458
      %v4460 = vsel %vm4277, %v4459, %v4455
      %v4461 = vlaneseq
      %v4462 = vshrl.u32 %v4461, 7
      %v4463 = vsub.s32 %v4279, %v4462
      %v4464 = vrot.slane %v4032, %v4463
      %v4465 = vsel %vm4284, %v4464, %v4460
      %v4466 = vlaneseq
      %v4467 = vshrl.u32 %v4466, 7
      %v4468 = vsub.s32 %v4286, %v4467
      %v4469 = vrot.slane %v4033, %v4468
      %v4470 = vsel %vm4291, %v4469, %v4465
      %v4471 = vlaneseq
      %v4472 = vshrl.u32 %v4471, 7
      %v4473 = vsub.s32 %v4293, %v4472
      %v4474 = vrot.slane %v4034, %v4473
      %v4475 = vsel %vm4298, %v4474, %v4470
      %v4476 = vlaneseq
      %v4477 = vshrl.u32 %v4476, 7
      %v4478 = vsub.s32 %v4300, %v4477
      %v4479 = vrot.slane %v4035, %v4478
      %v4480 = vsel %vm4305, %v4479, %v4475
      %v4481 = vlaneseq
      %v4482 = vshrl.u32 %v4481, 7
      %v4483 = vsub.s32 %v4307, %v4482
      %v4484 = vrot.slane %v4036, %v4483
      %v4485 = vsel %vm4312, %v4484, %v4480
      %v4486 = vlaneseq
      %v4487 = vshrl.u32 %v4486, 7
      %v4488 = vsub.s32 %v4314, %v4487
      %v4489 = vrot.slane %v4037, %v4488
      %v4490 = vsel %vm4319, %v4489, %v4485
      %v4491 = vlaneseq
      %v4492 = vshrl.u32 %v4491, 7
      %v4493 = vsub.s32 %v4321, %v4492
      %v4494 = vrot.slane %v4038, %v4493
      %v4495 = vsel %vm4326, %v4494, %v4490
      %v4496 = vlaneseq
      %v4497 = vshrl.u32 %v4496, 7
      %v4498 = vsub.s32 %v4328, %v4497
      %v4499 = vrot.slane %v4039, %v4498
      %v4500 = vsel %vm4333, %v4499, %v4495
      %v4501 = vlaneseq
      %v4502 = vshrl.u32 %v4501, 7
      %v4503 = vsub.s32 %v4335, %v4502
      %v4504 = vrot.slane %v4040, %v4503
      %v4505 = vsel %vm4340, %v4504, %v4500
      %v4506 = vlaneseq
      %v4507 = vshrl.u32 %v4506, 7
      %v4508 = vsub.s32 %v4342, %v4507
      %v4509 = vrot.slane %v4041, %v4508
      %v4510 = vsel %vm4347, %v4509, %v4505
      %v4511 = vlaneseq
      %v4512 = vshrl.u32 %v4511, 7
      %v4513 = vsub.s32 %v4349, %v4512
      %v4514 = vrot.slane %v4042, %v4513
      %v4515 = vsel %vm4354, %v4514, %v4510
      %v4516 = vlaneseq
      %v4517 = vshrl.u32 %v4516, 7
      %v4518 = vsub.s32 %v4356, %v4517
      %v4519 = vrot.slane %v4043, %v4518
      %v4520 = vsel %vm4361, %v4519, %v4515
      %v4521 = vlaneseq
      %v4522 = vshrl.u32 %v4521, 7
      %v4523 = vsub.s32 %v4253, %v4522
      %v4524 = vrot.slane %v4044, %v4523
      %v4525 = vlaneseq
      %v4526 = vshrl.u32 %v4525, 7
      %v4527 = vsub.s32 %v4258, %v4526
      %v4528 = vrot.slane %v4045, %v4527
      %v4529 = vsel %vm4263, %v4528, %v4524
      %v4530 = vlaneseq
      %v4531 = vshrl.u32 %v4530, 7
      %v4532 = vsub.s32 %v4265, %v4531
      %v4533 = vrot.slane %v4046, %v4532
      %v4534 = vsel %vm4270, %v4533, %v4529
      %v4535 = vlaneseq
      %v4536 = vshrl.u32 %v4535, 7
      %v4537 = vsub.s32 %v4272, %v4536
      %v4538 = vrot.slane %v4047, %v4537
      %v4539 = vsel %vm4277, %v4538, %v4534
      %v4540 = vlaneseq
      %v4541 = vshrl.u32 %v4540, 7
      %v4542 = vsub.s32 %v4279, %v4541
      %v4543 = vrot.slane %v4048, %v4542
      %v4544 = vsel %vm4284, %v4543, %v4539
      %v4545 = vlaneseq
      %v4546 = vshrl.u32 %v4545, 7
      %v4547 = vsub.s32 %v4286, %v4546
      %v4548 = vrot.slane %v4049, %v4547
      %v4549 = vsel %vm4291, %v4548, %v4544
      %v4550 = vlaneseq
      %v4551 = vshrl.u32 %v4550, 7
      %v4552 = vsub.s32 %v4293, %v4551
      %v4553 = vrot.slane %v4050, %v4552
      %v4554 = vsel %vm4298, %v4553, %v4549
      %v4555 = vlaneseq
      %v4556 = vshrl.u32 %v4555, 7
      %v4557 = vsub.s32 %v4300, %v4556
      %v4558 = vrot.slane %v4051, %v4557
      %v4559 = vsel %vm4305, %v4558, %v4554
      %v4560 = vlaneseq
      %v4561 = vshrl.u32 %v4560, 7
      %v4562 = vsub.s32 %v4307, %v4561
      %v4563 = vrot.slane %v4052, %v4562
      %v4564 = vsel %vm4312, %v4563, %v4559
      %v4565 = vlaneseq
      %v4566 = vshrl.u32 %v4565, 7
      %v4567 = vsub.s32 %v4314, %v4566
      %v4568 = vrot.slane %v4053, %v4567
      %v4569 = vsel %vm4319, %v4568, %v4564
      %v4570 = vlaneseq
      %v4571 = vshrl.u32 %v4570, 7
      %v4572 = vsub.s32 %v4321, %v4571
      %v4573 = vrot.slane %v4054, %v4572
      %v4574 = vsel %vm4326, %v4573, %v4569
      %v4575 = vlaneseq
      %v4576 = vshrl.u32 %v4575, 7
      %v4577 = vsub.s32 %v4328, %v4576
      %v4578 = vrot.slane %v4055, %v4577
      %v4579 = vsel %vm4333, %v4578, %v4574
      %v4580 = vlaneseq
      %v4581 = vshrl.u32 %v4580, 7
      %v4582 = vsub.s32 %v4335, %v4581
      %v4583 = vrot.slane %v4056, %v4582
      %v4584 = vsel %vm4340, %v4583, %v4579
      %v4585 = vlaneseq
      %v4586 = vshrl.u32 %v4585, 7
      %v4587 = vsub.s32 %v4342, %v4586
      %v4588 = vrot.slane %v4057, %v4587
      %v4589 = vsel %vm4347, %v4588, %v4584
      %v4590 = vlaneseq
      %v4591 = vshrl.u32 %v4590, 7
      %v4592 = vsub.s32 %v4349, %v4591
      %v4593 = vrot.slane %v4058, %v4592
      %v4594 = vsel %vm4354, %v4593, %v4589
      %v4595 = vlaneseq
      %v4596 = vshrl.u32 %v4595, 7
      %v4597 = vsub.s32 %v4356, %v4596
      %v4598 = vrot.slane %v4059, %v4597
      %v4599 = vsel %vm4361, %v4598, %v4594
      %v4600 = vlaneseq
      %v4601 = vshrl.u32 %v4600, 7
      %v4602 = vsub.s32 %v4253, %v4601
      %v4603 = vrot.slane %v4060, %v4602
      %v4604 = vlaneseq
      %v4605 = vshrl.u32 %v4604, 7
      %v4606 = vsub.s32 %v4258, %v4605
      %v4607 = vrot.slane %v4061, %v4606
      %v4608 = vsel %vm4263, %v4607, %v4603
      %v4609 = vlaneseq
      %v4610 = vshrl.u32 %v4609, 7
      %v4611 = vsub.s32 %v4265, %v4610
      %v4612 = vrot.slane %v4062, %v4611
      %v4613 = vsel %vm4270, %v4612, %v4608
      %v4614 = vlaneseq
      %v4615 = vshrl.u32 %v4614, 7
      %v4616 = vsub.s32 %v4272, %v4615
      %v4617 = vrot.slane %v4063, %v4616
      %v4618 = vsel %vm4277, %v4617, %v4613
      %v4619 = vlaneseq
      %v4620 = vshrl.u32 %v4619, 7
      %v4621 = vsub.s32 %v4279, %v4620
      %v4622 = vrot.slane %v4064, %v4621
      %v4623 = vsel %vm4284, %v4622, %v4618
      %v4624 = vlaneseq
      %v4625 = vshrl.u32 %v4624, 7
      %v4626 = vsub.s32 %v4286, %v4625
      %v4627 = vrot.slane %v4065, %v4626
      %v4628 = vsel %vm4291, %v4627, %v4623
      %v4629 = vlaneseq
      %v4630 = vshrl.u32 %v4629, 7
      %v4631 = vsub.s32 %v4293, %v4630
      %v4632 = vrot.slane %v4066, %v4631
      %v4633 = vsel %vm4298, %v4632, %v4628
      %v4634 = vlaneseq
      %v4635 = vshrl.u32 %v4634, 7
      %v4636 = vsub.s32 %v4300, %v4635
      %v4637 = vrot.slane %v4067, %v4636
      %v4638 = vsel %vm4305, %v4637, %v4633
      %v4639 = vlaneseq
      %v4640 = vshrl.u32 %v4639, 7
      %v4641 = vsub.s32 %v4307, %v4640
      %v4642 = vrot.slane %v4068, %v4641
      %v4643 = vsel %vm4312, %v4642, %v4638
      %v4644 = vlaneseq
      %v4645 = vshrl.u32 %v4644, 7
      %v4646 = vsub.s32 %v4314, %v4645
      %v4647 = vrot.slane %v4069, %v4646
      %v4648 = vsel %vm4319, %v4647, %v4643
      %v4649 = vlaneseq
      %v4650 = vshrl.u32 %v4649, 7
      %v4651 = vsub.s32 %v4321, %v4650
      %v4652 = vrot.slane %v4070, %v4651
      %v4653 = vsel %vm4326, %v4652, %v4648
      %v4654 = vlaneseq
      %v4655 = vshrl.u32 %v4654, 7
      %v4656 = vsub.s32 %v4328, %v4655
      %v4657 = vrot.slane %v4071, %v4656
      %v4658 = vsel %vm4333, %v4657, %v4653
      %v4659 = vlaneseq
      %v4660 = vshrl.u32 %v4659, 7
      %v4661 = vsub.s32 %v4335, %v4660
      %v4662 = vrot.slane %v4072, %v4661
      %v4663 = vsel %vm4340, %v4662, %v4658
      %v4664 = vlaneseq
      %v4665 = vshrl.u32 %v4664, 7
      %v4666 = vsub.s32 %v4342, %v4665
      %v4667 = vrot.slane %v4073, %v4666
      %v4668 = vsel %vm4347, %v4667, %v4663
      %v4669 = vlaneseq
      %v4670 = vshrl.u32 %v4669, 7
      %v4671 = vsub.s32 %v4349, %v4670
      %v4672 = vrot.slane %v4074, %v4671
      %v4673 = vsel %vm4354, %v4672, %v4668
      %v4674 = vlaneseq
      %v4675 = vshrl.u32 %v4674, 7
      %v4676 = vsub.s32 %v4356, %v4675
      %v4677 = vrot.slane %v4075, %v4676
      %v4678 = vsel %vm4361, %v4677, %v4673
      %v4679 = vlaneseq
      %v4680 = vshrl.u32 %v4679, 7
      %v4681 = vsub.s32 %v4253, %v4680
      %v4682 = vrot.slane %v4076, %v4681
      %v4683 = vlaneseq
      %v4684 = vshrl.u32 %v4683, 7
      %v4685 = vsub.s32 %v4258, %v4684
      %v4686 = vrot.slane %v4077, %v4685
      %v4687 = vsel %vm4263, %v4686, %v4682
      %v4688 = vlaneseq
      %v4689 = vshrl.u32 %v4688, 7
      %v4690 = vsub.s32 %v4265, %v4689
      %v4691 = vrot.slane %v4078, %v4690
      %v4692 = vsel %vm4270, %v4691, %v4687
      %v4693 = vlaneseq
      %v4694 = vshrl.u32 %v4693, 7
      %v4695 = vsub.s32 %v4272, %v4694
      %v4696 = vrot.slane %v4079, %v4695
      %v4697 = vsel %vm4277, %v4696, %v4692
      %v4698 = vlaneseq
      %v4699 = vshrl.u32 %v4698, 7
      %v4700 = vsub.s32 %v4279, %v4699
      %v4701 = vrot.slane %v4080, %v4700
      %v4702 = vsel %vm4284, %v4701, %v4697
      %v4703 = vlaneseq
      %v4704 = vshrl.u32 %v4703, 7
      %v4705 = vsub.s32 %v4286, %v4704
      %v4706 = vrot.slane %v4081, %v4705
      %v4707 = vsel %vm4291, %v4706, %v4702
      %v4708 = vlaneseq
      %v4709 = vshrl.u32 %v4708, 7
      %v4710 = vsub.s32 %v4293, %v4709
      %v4711 = vrot.slane %v4082, %v4710
      %v4712 = vsel %vm4298, %v4711, %v4707
      %v4713 = vlaneseq
      %v4714 = vshrl.u32 %v4713, 7
      %v4715 = vsub.s32 %v4300, %v4714
      %v4716 = vrot.slane %v4083, %v4715
      %v4717 = vsel %vm4305, %v4716, %v4712
      %v4718 = vlaneseq
      %v4719 = vshrl.u32 %v4718, 7
      %v4720 = vsub.s32 %v4307, %v4719
      %v4721 = vrot.slane %v4084, %v4720
      %v4722 = vsel %vm4312, %v4721, %v4717
      %v4723 = vlaneseq
      %v4724 = vshrl.u32 %v4723, 7
      %v4725 = vsub.s32 %v4314, %v4724
      %v4726 = vrot.slane %v4085, %v4725
      %v4727 = vsel %vm4319, %v4726, %v4722
      %v4728 = vlaneseq
      %v4729 = vshrl.u32 %v4728, 7
      %v4730 = vsub.s32 %v4321, %v4729
      %v4731 = vrot.slane %v4086, %v4730
      %v4732 = vsel %vm4326, %v4731, %v4727
      %v4733 = vlaneseq
      %v4734 = vshrl.u32 %v4733, 7
      %v4735 = vsub.s32 %v4328, %v4734
      %v4736 = vrot.slane %v4087, %v4735
      %v4737 = vsel %vm4333, %v4736, %v4732
      %v4738 = vlaneseq
      %v4739 = vshrl.u32 %v4738, 7
      %v4740 = vsub.s32 %v4335, %v4739
      %v4741 = vrot.slane %v4088, %v4740
      %v4742 = vsel %vm4340, %v4741, %v4737
      %v4743 = vlaneseq
      %v4744 = vshrl.u32 %v4743, 7
      %v4745 = vsub.s32 %v4342, %v4744
      %v4746 = vrot.slane %v4089, %v4745
      %v4747 = vsel %vm4347, %v4746, %v4742
      %v4748 = vlaneseq
      %v4749 = vshrl.u32 %v4748, 7
      %v4750 = vsub.s32 %v4349, %v4749
      %v4751 = vrot.slane %v4090, %v4750
      %v4752 = vsel %vm4354, %v4751, %v4747
      %v4753 = vlaneseq
      %v4754 = vshrl.u32 %v4753, 7
      %v4755 = vsub.s32 %v4356, %v4754
      %v4756 = vrot.slane %v4091, %v4755
      %v4757 = vsel %vm4361, %v4756, %v4752
      %v4758 = vlaneseq
      %v4759 = vshrl.u32 %v4758, 7
      %v4760 = vsub.s32 %v4253, %v4759
      %v4761 = vrot.slane %v4092, %v4760
      %v4762 = vlaneseq
      %v4763 = vshrl.u32 %v4762, 7
      %v4764 = vsub.s32 %v4258, %v4763
      %v4765 = vrot.slane %v4093, %v4764
      %v4766 = vsel %vm4263, %v4765, %v4761
      %v4767 = vlaneseq
      %v4768 = vshrl.u32 %v4767, 7
      %v4769 = vsub.s32 %v4265, %v4768
      %v4770 = vrot.slane %v4094, %v4769
      %v4771 = vsel %vm4270, %v4770, %v4766
      %v4772 = vlaneseq
      %v4773 = vshrl.u32 %v4772, 7
      %v4774 = vsub.s32 %v4272, %v4773
      %v4775 = vrot.slane %v4095, %v4774
      %v4776 = vsel %vm4277, %v4775, %v4771
      %v4777 = vlaneseq
      %v4778 = vshrl.u32 %v4777, 7
      %v4779 = vsub.s32 %v4279, %v4778
      %v4780 = vrot.slane %v4096, %v4779
      %v4781 = vsel %vm4284, %v4780, %v4776
      %v4782 = vlaneseq
      %v4783 = vshrl.u32 %v4782, 7
      %v4784 = vsub.s32 %v4286, %v4783
      %v4785 = vrot.slane %v4097, %v4784
      %v4786 = vsel %vm4291, %v4785, %v4781
      %v4787 = vlaneseq
      %v4788 = vshrl.u32 %v4787, 7
      %v4789 = vsub.s32 %v4293, %v4788
      %v4790 = vrot.slane %v4098, %v4789
      %v4791 = vsel %vm4298, %v4790, %v4786
      %v4792 = vlaneseq
      %v4793 = vshrl.u32 %v4792, 7
      %v4794 = vsub.s32 %v4300, %v4793
      %v4795 = vrot.slane %v4099, %v4794
      %v4796 = vsel %vm4305, %v4795, %v4791
      %v4797 = vlaneseq
      %v4798 = vshrl.u32 %v4797, 7
      %v4799 = vsub.s32 %v4307, %v4798
      %v4800 = vrot.slane %v4100, %v4799
      %v4801 = vsel %vm4312, %v4800, %v4796
      %v4802 = vlaneseq
      %v4803 = vshrl.u32 %v4802, 7
      %v4804 = vsub.s32 %v4314, %v4803
      %v4805 = vrot.slane %v4101, %v4804
      %v4806 = vsel %vm4319, %v4805, %v4801
      %v4807 = vlaneseq
      %v4808 = vshrl.u32 %v4807, 7
      %v4809 = vsub.s32 %v4321, %v4808
      %v4810 = vrot.slane %v4102, %v4809
      %v4811 = vsel %vm4326, %v4810, %v4806
      %v4812 = vlaneseq
      %v4813 = vshrl.u32 %v4812, 7
      %v4814 = vsub.s32 %v4328, %v4813
      %v4815 = vrot.slane %v4103, %v4814
      %v4816 = vsel %vm4333, %v4815, %v4811
      %v4817 = vlaneseq
      %v4818 = vshrl.u32 %v4817, 7
      %v4819 = vsub.s32 %v4335, %v4818
      %v4820 = vrot.slane %v4104, %v4819
      %v4821 = vsel %vm4340, %v4820, %v4816
      %v4822 = vlaneseq
      %v4823 = vshrl.u32 %v4822, 7
      %v4824 = vsub.s32 %v4342, %v4823
      %v4825 = vrot.slane %v4105, %v4824
      %v4826 = vsel %vm4347, %v4825, %v4821
      %v4827 = vlaneseq
      %v4828 = vshrl.u32 %v4827, 7
      %v4829 = vsub.s32 %v4349, %v4828
      %v4830 = vrot.slane %v4106, %v4829
      %v4831 = vsel %vm4354, %v4830, %v4826
      %v4832 = vlaneseq
      %v4833 = vshrl.u32 %v4832, 7
      %v4834 = vsub.s32 %v4356, %v4833
      %v4835 = vrot.slane %v4107, %v4834
      %v4836 = vsel %vm4361, %v4835, %v4831
      %v4837 = vlaneseq
      %v4838 = vshrl.u32 %v4837, 7
      %v4839 = vsub.s32 %v4253, %v4838
      %v4840 = vrot.slane %v4108, %v4839
      %v4841 = vlaneseq
      %v4842 = vshrl.u32 %v4841, 7
      %v4843 = vsub.s32 %v4258, %v4842
      %v4844 = vrot.slane %v4109, %v4843
      %v4845 = vsel %vm4263, %v4844, %v4840
      %v4846 = vlaneseq
      %v4847 = vshrl.u32 %v4846, 7
      %v4848 = vsub.s32 %v4265, %v4847
      %v4849 = vrot.slane %v4110, %v4848
      %v4850 = vsel %vm4270, %v4849, %v4845
      %v4851 = vlaneseq
      %v4852 = vshrl.u32 %v4851, 7
      %v4853 = vsub.s32 %v4272, %v4852
      %v4854 = vrot.slane %v4111, %v4853
      %v4855 = vsel %vm4277, %v4854, %v4850
      %v4856 = vlaneseq
      %v4857 = vshrl.u32 %v4856, 7
      %v4858 = vsub.s32 %v4279, %v4857
      %v4859 = vrot.slane %v4112, %v4858
      %v4860 = vsel %vm4284, %v4859, %v4855
      %v4861 = vlaneseq
      %v4862 = vshrl.u32 %v4861, 7
      %v4863 = vsub.s32 %v4286, %v4862
      %v4864 = vrot.slane %v4113, %v4863
      %v4865 = vsel %vm4291, %v4864, %v4860
      %v4866 = vlaneseq
      %v4867 = vshrl.u32 %v4866, 7
      %v4868 = vsub.s32 %v4293, %v4867
      %v4869 = vrot.slane %v4114, %v4868
      %v4870 = vsel %vm4298, %v4869, %v4865
      %v4871 = vlaneseq
      %v4872 = vshrl.u32 %v4871, 7
      %v4873 = vsub.s32 %v4300, %v4872
      %v4874 = vrot.slane %v4115, %v4873
      %v4875 = vsel %vm4305, %v4874, %v4870
      %v4876 = vlaneseq
      %v4877 = vshrl.u32 %v4876, 7
      %v4878 = vsub.s32 %v4307, %v4877
      %v4879 = vrot.slane %v4116, %v4878
      %v4880 = vsel %vm4312, %v4879, %v4875
      %v4881 = vlaneseq
      %v4882 = vshrl.u32 %v4881, 7
      %v4883 = vsub.s32 %v4314, %v4882
      %v4884 = vrot.slane %v4117, %v4883
      %v4885 = vsel %vm4319, %v4884, %v4880
      %v4886 = vlaneseq
      %v4887 = vshrl.u32 %v4886, 7
      %v4888 = vsub.s32 %v4321, %v4887
      %v4889 = vrot.slane %v4118, %v4888
      %v4890 = vsel %vm4326, %v4889, %v4885
      %v4891 = vlaneseq
      %v4892 = vshrl.u32 %v4891, 7
      %v4893 = vsub.s32 %v4328, %v4892
      %v4894 = vrot.slane %v4119, %v4893
      %v4895 = vsel %vm4333, %v4894, %v4890
      %v4896 = vlaneseq
      %v4897 = vshrl.u32 %v4896, 7
      %v4898 = vsub.s32 %v4335, %v4897
      %v4899 = vrot.slane %v4120, %v4898
      %v4900 = vsel %vm4340, %v4899, %v4895
      %v4901 = vlaneseq
      %v4902 = vshrl.u32 %v4901, 7
      %v4903 = vsub.s32 %v4342, %v4902
      %v4904 = vrot.slane %v4121, %v4903
      %v4905 = vsel %vm4347, %v4904, %v4900
      %v4906 = vlaneseq
      %v4907 = vshrl.u32 %v4906, 7
      %v4908 = vsub.s32 %v4349, %v4907
      %v4909 = vrot.slane %v4122, %v4908
      %v4910 = vsel %vm4354, %v4909, %v4905
      %v4911 = vlaneseq
      %v4912 = vshrl.u32 %v4911, 7
      %v4913 = vsub.s32 %v4356, %v4912
      %v4914 = vrot.slane %v4123, %v4913
      %v4915 = vsel %vm4361, %v4914, %v4910
      %vm4916 = vcmask 1042434
      %v4917 = vsel %vm4916, %v4362, %v4362
      %vm4918 = vcmask 1043459
      %v4919 = vsel %vm4918, %v4362, %v4917
      %vm4920 = vcmask 1044484
      %v4921 = vsel %vm4920, %v4362, %v4919
      %vm4922 = vcmask 1045509
      %v4923 = vsel %vm4922, %v4362, %v4921
      %vm4924 = vcmask 1046534
      %v4925 = vsel %vm4924, %v4362, %v4923
      %vm4926 = vcmask 1047559
      %v4927 = vsel %vm4926, %v4362, %v4925
      %v4928 = vsel %vm4916, %v4441, %v4441
      %v4929 = vsel %vm4918, %v4441, %v4928
      %v4930 = vsel %vm4920, %v4441, %v4929
      %v4931 = vsel %vm4922, %v4441, %v4930
      %v4932 = vsel %vm4924, %v4441, %v4931
      %v4933 = vsel %vm4926, %v4441, %v4932
      %v4934 = vsel %vm4916, %v4520, %v4520
      %v4935 = vsel %vm4918, %v4520, %v4934
      %v4936 = vsel %vm4920, %v4520, %v4935
      %v4937 = vsel %vm4922, %v4520, %v4936
      %v4938 = vsel %vm4924, %v4520, %v4937
      %v4939 = vsel %vm4926, %v4520, %v4938
      %v4940 = vsel %vm4916, %v4599, %v4599
      %v4941 = vsel %vm4918, %v4599, %v4940
      %v4942 = vsel %vm4920, %v4599, %v4941
      %v4943 = vsel %vm4922, %v4599, %v4942
      %v4944 = vsel %vm4924, %v4599, %v4943
      %v4945 = vsel %vm4926, %v4599, %v4944
      %v4946 = vsel %vm4916, %v4678, %v4678
      %v4947 = vsel %vm4918, %v4678, %v4946
      %v4948 = vsel %vm4920, %v4678, %v4947
      %v4949 = vsel %vm4922, %v4678, %v4948
      %v4950 = vsel %vm4924, %v4678, %v4949
      %v4951 = vsel %vm4926, %v4678, %v4950
      %v4952 = vsel %vm4916, %v4757, %v4757
      %v4953 = vsel %vm4918, %v4757, %v4952
      %v4954 = vsel %vm4920, %v4757, %v4953
      %v4955 = vsel %vm4922, %v4757, %v4954
      %v4956 = vsel %vm4924, %v4757, %v4955
      %v4957 = vsel %vm4926, %v4757, %v4956
      %v4958 = vsel %vm4916, %v4836, %v4836
      %v4959 = vsel %vm4918, %v4836, %v4958
      %v4960 = vsel %vm4920, %v4836, %v4959
      %v4961 = vsel %vm4922, %v4836, %v4960
      %v4962 = vsel %vm4924, %v4836, %v4961
      %v4963 = vsel %vm4926, %v4836, %v4962
      %v4964 = vsel %vm4916, %v4915, %v4915
      %v4965 = vsel %vm4918, %v4915, %v4964
      %v4966 = vsel %vm4920, %v4915, %v4965
      %v4967 = vsel %vm4922, %v4915, %v4966
      %v4968 = vsel %vm4924, %v4915, %v4967
      %v4969 = vsel %vm4926, %v4915, %v4968
      %v4978 = vmul.f32 %v3867, %v4927
      %v4979 = vmul.f32 %v3869, %v4933
      %v4980 = vmul.f32 %v3908, %v4939
      %v4981 = vmul.f32 %v3910, %v4945
      %v4982 = vmul.f32 %v3949, %v4951
      %v4983 = vmul.f32 %v3951, %v4957
      %v4984 = vmul.f32 %v3990, %v4963
      %v4985 = vmul.f32 %v3992, %v4969
      %v4986 = vld [vmem:[%s3] sm:$0xff]
      %v4987 = vld [vmem:[%s3 + $0x8] sm:$0xff]
      %v4988 = vld [vmem:[%s3 + $0x10] sm:$0xff]
      %v4989 = vld [vmem:[%s3 + $0x18] sm:$0xff]
      %v4990 = vld [vmem:[%s4] sm:$0xff]
      %v4991 = vld [vmem:[%s4 + $0x8] sm:$0xff]
      %v4992 = vld [vmem:[%s4 + $0x10] sm:$0xff]
      %v4993 = vld [vmem:[%s4 + $0x18] sm:$0xff]
      %4995 = vset.pattern.permute.xlu0 0
      %4996 = vperm.xlu0 %4995, %v4990
      %v4997 = vpop.permute.xlu0 %4996
      %5000 = vset.pattern.permute.xlu0 0
      %5001 = vperm.xlu0 %5000, %v4991
      %v5002 = vpop.permute.xlu0 %5001
      %5005 = vset.pattern.permute.xlu0 0
      %5006 = vperm.xlu0 %5005, %v4992
      %v5007 = vpop.permute.xlu0 %5006
      %5010 = vset.pattern.permute.xlu0 0
      %5011 = vperm.xlu0 %5010, %v4993
      %v5012 = vpop.permute.xlu0 %5011
      %v5015 = vsel %vm317, %v4986, 0
      %v5018 = vsel %vm317, %v4987, 0
      %v5021 = vsel %vm317, %v4988, 0
      %v5024 = vsel %vm317, %v4989, 0
      %5026 = vmatprep.subr.mxu0 %v4979
      %5027 = vmatpush1.msra.mxu0 %v4978
      %5028 = vmatprep.subr.mxu0 %v4981
      %5029 = vmatpush1.msra.mxu0 %v4980
      %5030 = vmatprep.subr.mxu0 %v4983
      %5031 = vmatpush1.msra.mxu0 %v4982
      %5032 = vmatprep.subr.mxu0 %v4985
      %5033 = vmatpush1.msra.mxu0 %v4984
      %5034 = vmatprep.subr.mxu0 0.0
      %5035 = vmatpush1.msra.mxu0 0.0
      %5036 = vmatprep.subr.mxu0 0.0
      %5037 = vmatpush1.msra.mxu0 0.0
      %5038 = vmatprep.subr.mxu0 0.0
      %5039 = vmatpush1.msra.mxu0 0.0
      %5040 = vmatprep.subr.mxu0 0.0
      %5041 = vmatpush1.msra.mxu0 0.0
      %5042 = vmatprep.subr.mxu0 0.0
      %5043 = vmatpush1.msra.mxu0 0.0
      %5044 = vmatprep.subr.mxu0 0.0
      %5045 = vmatpush1.msra.mxu0 0.0
      %5046 = vmatprep.subr.mxu0 0.0
      %5047 = vmatpush1.msra.mxu0 0.0
      %5048 = vmatprep.subr.mxu0 0.0
      %5049 = vmatpush1.msra.mxu0 0.0
      %5050 = vmatprep.subr.mxu0 0.0
      %5051 = vmatpush1.msra.mxu0 0.0
      %5052 = vmatprep.subr.mxu0 0.0
      %5053 = vmatpush1.msra.mxu0 0.0
      %5054 = vmatprep.subr.mxu0 0.0
      %5055 = vmatpush1.msra.mxu0 0.0
      %5056 = vmatprep.subr.mxu0 0.0
      %5057 = vmatpush1.msra.mxu0 0.0
      %5058 = vmatprep.subr.mxu0 0.0
      %5059 = vmatpush1.msra.mxu0 0.0
      %5060 = vmatprep.subr.mxu0 0.0
      %5061 = vmatpush1.msra.mxu0 0.0
      %5062 = vmatprep.subr.mxu0 0.0
      %5063 = vmatpush1.msra.mxu0 0.0
      %5064 = vmatprep.subr.mxu0 0.0
      %5065 = vmatpush1.msra.mxu0 0.0
      %5066 = vmatprep.subr.mxu0 0.0
      %5067 = vmatpush1.msra.mxu0 0.0
      %5068 = vmatprep.subr.mxu0 0.0
      %5069 = vmatpush1.msra.mxu0 0.0
      %5070 = vmatprep.subr.mxu0 0.0
      %5071 = vmatpush1.msra.mxu0 0.0
      %5072 = vmatprep.subr.mxu0 0.0
      %5073 = vmatpush1.msra.mxu0 0.0
      %5074 = vmatprep.subr.mxu0 0.0
      %5075 = vmatpush1.msra.mxu0 0.0
      %5076 = vmatprep.subr.mxu0 0.0
      %5077 = vmatpush1.msra.mxu0 0.0
      %5078 = vmatprep.subr.mxu0 0.0
      %5079 = vmatpush1.msra.mxu0 0.0
      %5080 = vmatprep.subr.mxu0 0.0
      %5081 = vmatpush1.msra.mxu0 0.0
      %5082 = vmatprep.subr.mxu0 0.0
      %5083 = vmatpush1.msra.mxu0 0.0
      %5084 = vmatprep.subr.mxu0 0.0
      %5085 = vmatpush1.msra.mxu0 0.0
      %5086 = vmatprep.subr.mxu0 0.0
      %5087 = vmatpush1.msra.mxu0 0.0
      %5088 = vmatprep.subr.mxu0 0.0
      %5089 = vmatpush1.msra.mxu0 0.0
      %5090 = vmatprep.mubr.f32.mxu0 0.0
      %5091 = vmatmul.mubr.f32.gmra.mrb[0].mxu0 %v5015
      %v5092 = vpop.f32.mrb[0].mxu0
      %v5093 = vadd.f32 %v4997, %v5092
      %v5094 = vpop.f32.mrb[0].mxu0
      %v5095 = vadd.f32 %v4997, %v5094
      %5096 = vmatprep.mubr.f32.mxu0 0.0
      %5097 = vmatmul.mubr.f32.gmra.mrb[0].mxu0 %v5018
      %v5098 = vpop.f32.mrb[0].mxu0
      %v5099 = vadd.f32 %v5002, %v5098
      %v5100 = vpop.f32.mrb[0].mxu0
      %v5101 = vadd.f32 %v5002, %v5100
      %5102 = vmatprep.mubr.f32.mxu0 0.0
      %5103 = vmatmul.mubr.f32.gmra.mrb[0].mxu0 %v5021
      %v5104 = vpop.f32.mrb[0].mxu0
      %v5105 = vadd.f32 %v5007, %v5104
      %v5106 = vpop.f32.mrb[0].mxu0
      %v5107 = vadd.f32 %v5007, %v5106
      %5108 = vmatprep.mubr.f32.mxu0 0.0
      %5109 = vmatmul.mubr.f32.gmra.mrb[0].mxu0 %v5024
      %v5110 = vpop.f32.mrb[0].mxu0
      %v5111 = vadd.f32 %v5012, %v5110
      %v5112 = vpop.f32.mrb[0].mxu0
      %v5113 = vadd.f32 %v5012, %v5112
      %5114 = vdwg.mxu0
      %5115 = vst [vmem:[%s224] sm:$0xff] %v5093
      %5116 = vst [vmem:[%s224 + $0x8] sm:$0xff] %v5095
      %5117 = vst [vmem:[%s224 + $0x10] sm:$0xff] %v5099
      %5118 = vst [vmem:[%s224 + $0x18] sm:$0xff] %v5101
      %5119 = vst [vmem:[%s224 + $0x20] sm:$0xff] %v5105
      %5120 = vst [vmem:[%s224 + $0x28] sm:$0xff] %v5107
      %5121 = vst [vmem:[%s224 + $0x30] sm:$0xff] %v5111
      %5122 = vst [vmem:[%s224 + $0x38] sm:$0xff] %v5113
      %p5123 = scmp.lt.s32.totalorder %s16, 1
      %s5124 = scalar_select %p5123, %s16, 1
      %s5125 = smul.addr %s5124, 8
      %s5126 = smul.addr %s5125, 8
      %s5127 = scalar_lea.vmem %s5, %s5126
      // Predicated region
      $region41: #{self_attention.1} parent=39 // pred_check
        %p5128 = pneg %p144
      $region42: #{self_attention.1} parent=39 // pred_check_branch
        %5130 = sbr.rel (%p5128) target = $region44
      $region43: #{self_attention.1} parent=39 // pred_region
        _
      $region44: #{self_attention.1} parent=39 // pred_fallthru
        _
    $region40: #{self_attention.1} parent=5 // pred_fallthru
      _
    %p5131 = scmp.le.s32.totalorder 2, %s11
    // Predicated region
    $region45: #{self_attention.1} parent=5 // pred_check
      %p5132 = pneg %p5131
    $region46: #{self_attention.1} parent=5 // pred_check_branch
      %5134 = sbr.rel (%p5132) target = $region48
    $region47: #{self_attention.1} parent=5 // pred_region
      %s5135 = ssub.s32 %s11, 2
      // Predicated region
      $region49: #{self_attention.1} parent=47 // pred_check
        %p5136 = pneg %p150
      $region50: #{self_attention.1} parent=47 // pred_check_branch
        %5138 = sbr.rel (%p5136) target = $region52
      $region51: #{self_attention.1} parent=47 // pred_region
        %p5139 = scmp.lt.s32.totalorder %s17, 1
        %s5140 = scalar_select %p5139, %s17, 1
        %s5141 = smul.addr %s5140, 8
        %s5142 = smul.addr %s5141, 8
        %s5143 = scalar_lea.vmem %s5, %s5142
      $region52: #{self_attention.1} parent=47 // pred_fallthru
        _
    $region48: #{self_attention.1} parent=5 // pred_fallthru
      _
  $region6: #{self_attention.1} parent=0 // loop_footer
    %s15 = sadd.s32 1, %s11
  $region7: #{self_attention.1} parent=0 // loop_footer_branch
    %10 = sbr.rel target = $region3
  $region8: #{self_attention.1} parent=0 // loop_exit
    _

</llo_original>
